<compile_context>
chip_gen: v7x
topology: tpu7x:2x2x1
jax: 0.10.0
libtpu: 0.0.40
codegen_flags: <defaults>
</compile_context>

<pallas_src>
import functools
import math

import jax
import jax.numpy as jnp
from jax.experimental import pallas as pl
from jax.experimental.pallas import tpu as pltpu

_BN_EPS = 1e-5
_VMEM_LIMIT = 32 * 1024 * 1024  # safe on v7x (64 MiB physical) and v5e/v6e


def _round_up(x, m):
    return ((x + m - 1) // m) * m


def _pick_tile(rows):
    # >=256 rows keeps the 2x256 MXU on v6e/v7x fed; 512 is a good default.
    return 512 if rows >= 512 else _round_up(rows, 8)


# ----------------------------- Pallas kernels ------------------------------ #

def _matmul_stats_kernel(p_ref, w_ref, y_ref, sum_ref, ssq_ref):
    """y = patches @ w (bf16 in, f32 accumulate); accumulate per-channel
    sum and sum-of-squares across the whole (G, n_tiles) grid."""
    @pl.when((pl.program_id(0) == 0) & (pl.program_id(1) == 0))
    def _():
        sum_ref[...] = jnp.zeros_like(sum_ref)
        ssq_ref[...] = jnp.zeros_like(ssq_ref)

    y = jnp.dot(p_ref[...], w_ref[...], preferred_element_type=jnp.float32)
    y_ref[...] = y
    sum_ref[...] += jnp.sum(y, axis=0, keepdims=True)
    ssq_ref[...] += jnp.sum(y * y, axis=0, keepdims=True)


def _bn_relu_kernel(y_ref, sum_ref, ssq_ref, gamma_ref, beta_ref, o_ref, *, inv_n):
    """(y - mean) * rsqrt(var + eps) * gamma + beta, then ReLU — all in f32."""
    mean = sum_ref[...] * inv_n
    var = jnp.maximum(ssq_ref[...] * inv_n - mean * mean, 0.0)
    scale = gamma_ref[...] * jax.lax.rsqrt(var + _BN_EPS)
    shift = beta_ref[...] - mean * scale
    o_ref[...] = jnp.maximum(y_ref[...] * scale + shift, 0.0)


def _matmul_tanh_kernel(p_ref, w_ref, o_ref):
    y = jnp.dot(p_ref[...], w_ref[...], preferred_element_type=jnp.float32)
    o_ref[...] = jnp.tanh(y)


# --------------------------- pallas_call wrappers --------------------------- #

def _pad_operands(patches, wsub):
    """Cast to bf16, zero-pad rows to a tile multiple and CO to 128 lanes."""
    G, R, K = patches.shape
    CO = wsub.shape[-1]
    COp = _round_up(CO, 128)
    tile_m = _pick_tile(R)
    Rp = _round_up(R, tile_m)
    p = jnp.zeros((G, Rp, K), jnp.bfloat16).at[:, :R, :].set(
        patches.astype(jnp.bfloat16))
    w = jnp.zeros((G, K, COp), jnp.bfloat16).at[:, :, :CO].set(
        wsub.astype(jnp.bfloat16))
    return p, w, tile_m, Rp, COp


def _conv_bn_relu(patches, wsub, gamma, beta, n_valid):
    """patches: (G, R, K) f32, wsub: (G, K, CO) f32, gamma/beta: (CO,).
    Returns ReLU(BatchNorm(patches @ wsub)) with batch-global train-mode stats,
    shape (G, R, CO) f32."""
    G, R, K = patches.shape
    CO = wsub.shape[-1]
    p, w, tile_m, Rp, COp = _pad_operands(patches, wsub)
    gam = jnp.ones((1, COp), jnp.float32).at[:, :CO].set(gamma.reshape(1, CO))
    bet = jnp.zeros((1, COp), jnp.float32).at[:, :CO].set(beta.reshape(1, CO))
    n_tiles = Rp // tile_m

    # Pass 1: row-tiled matmul + global per-channel sum / sum-of-squares.
    y, s, ss = pl.pallas_call(
        _matmul_stats_kernel,
        out_shape=(jax.ShapeDtypeStruct((G, Rp, COp), jnp.float32),
                   jax.ShapeDtypeStruct((1, COp), jnp.float32),
                   jax.ShapeDtypeStruct((1, COp), jnp.float32)),
        grid=(G, n_tiles),
        in_specs=[pl.BlockSpec((None, tile_m, K), lambda g, i: (g, i, 0)),
                  pl.BlockSpec((None, K, COp), lambda g, i: (g, 0, 0))],
        out_specs=(pl.BlockSpec((None, tile_m, COp), lambda g, i: (g, i, 0)),
                   pl.BlockSpec((1, COp), lambda g, i: (0, 0)),
                   pl.BlockSpec((1, COp), lambda g, i: (0, 0))),
        compiler_params=pltpu.CompilerParams(
            dimension_semantics=("arbitrary", "arbitrary"),
            vmem_limit_bytes=_VMEM_LIMIT),
        cost_estimate=pl.CostEstimate(
            flops=2 * G * Rp * K * COp,
            transcendentals=0,
            bytes_accessed=p.size * 2 + w.size * 2 + G * Rp * COp * 4),
    )(p, w)

    # Pass 2: normalize + ReLU (elementwise, row-parallel -> megacore on v7x).
    rows = G * Rp
    out = pl.pallas_call(
        functools.partial(_bn_relu_kernel, inv_n=1.0 / float(n_valid)),
        out_shape=jax.ShapeDtypeStruct((rows, COp), jnp.float32),
        grid=(rows // tile_m,),
        in_specs=[pl.BlockSpec((tile_m, COp), lambda i: (i, 0)),
                  pl.BlockSpec((1, COp), lambda i: (0, 0)),
                  pl.BlockSpec((1, COp), lambda i: (0, 0)),
                  pl.BlockSpec((1, COp), lambda i: (0, 0)),
                  pl.BlockSpec((1, COp), lambda i: (0, 0))],
        out_specs=pl.BlockSpec((tile_m, COp), lambda i: (i, 0)),
        compiler_params=pltpu.CompilerParams(
            dimension_semantics=("parallel",),
            vmem_limit_bytes=_VMEM_LIMIT),
        cost_estimate=pl.CostEstimate(
            flops=4 * rows * COp,
            transcendentals=rows,
            bytes_accessed=2 * rows * COp * 4),
    )(y.reshape(rows, COp), s, ss, gam, bet)

    return out.reshape(G, Rp, COp)[:, :R, :CO]


def _conv_tanh(patches, wsub):
    G, R, K = patches.shape
    CO = wsub.shape[-1]
    p, w, tile_m, Rp, COp = _pad_operands(patches, wsub)
    n_tiles = Rp // tile_m
    out = pl.pallas_call(
        _matmul_tanh_kernel,
        out_shape=jax.ShapeDtypeStruct((G, Rp, COp), jnp.float32),
        grid=(G, n_tiles),
        in_specs=[pl.BlockSpec((None, tile_m, K), lambda g, i: (g, i, 0)),
                  pl.BlockSpec((None, K, COp), lambda g, i: (g, 0, 0))],
        out_specs=pl.BlockSpec((None, tile_m, COp), lambda g, i: (g, i, 0)),
        compiler_params=pltpu.CompilerParams(
            dimension_semantics=("parallel", "parallel"),
            vmem_limit_bytes=_VMEM_LIMIT),
        cost_estimate=pl.CostEstimate(
            flops=2 * G * Rp * K * COp,
            transcendentals=G * Rp * COp,
            bytes_accessed=p.size * 2 + w.size * 2 + G * Rp * COp * 4),
    )(p, w)
    return out[:, :R, :CO]


# --------------------------- plain-JAX glue -------------------------------- #

def _layer1_operands(noise, w):
    """ConvTranspose2d(k=4, s=1, p=0) on a 1x1 input: each of the 16 output
    pixels is an independent (B, CI) @ (CI, CO) matmul -> G = 16 groups."""
    B, CI = noise.shape[0], noise.shape[1]
    CO = w.shape[1]
    x2d = noise.reshape(B, CI)
    patches = jnp.broadcast_to(x2d[None], (16, B, CI))
    wg = jnp.transpose(w, (2, 3, 0, 1)).reshape(16, CI, CO)   # group s = ky*4+kx
    return patches, wg


def _subpixel_operands(act, w):
    """Sub-pixel decomposition of ConvTranspose2d(k=4, s=2, p=1):
      out[2m+dy, 2n+dx] = sum_{a,b} act[m-1+dy+a, n-1+dx+b] . w[:,:,3-2a-dy,3-2b-dx]
    -> 4 parity groups, each a (B*H*W, 4*CI) @ (4*CI, CO) matmul (no zeros)."""
    B, H, W, CI = act.shape
    ap = jnp.pad(act, ((0, 0), (1, 1), (1, 1), (0, 0)))
    wflip = w[:, :, ::-1, ::-1]                               # (CI, CO, 4, 4)
    pats, wsubs = [], []
    for dy in (0, 1):
        for dx in (0, 1):
            taps = [ap[:, dy + a:dy + a + H, dx + b:dx + b + W, :]
                    for a in (0, 1) for b in (0, 1)]
            pats.append(jnp.concatenate(taps, axis=-1).reshape(B * H * W, 4 * CI))
            wtaps = [wflip[:, :, 2 * a + dy, 2 * b + dx]
                     for a in (0, 1) for b in (0, 1)]
            wsubs.append(jnp.concatenate(wtaps, axis=0))      # (4*CI, CO)
    return jnp.stack(pats, axis=0), jnp.stack(wsubs, axis=0)


def _interleave_parities(rows, B, H, W, CO):
    """(4, B*H*W, CO) parity-major rows -> (B, 2H, 2W, CO) channels-last."""
    return (rows.reshape(2, 2, B, H, W, CO)
                .transpose(2, 3, 0, 4, 1, 5)
                .reshape(B, 2 * H, 2 * W, CO))


def generator_forward(noise, params):
    """noise: (B, noise_size, 1, 1) NCHW -> (B, 3, 64, 64) NCHW."""
    B = noise.shape[0]

    # layer 1: ConvT(s=1, p=0) + BN + ReLU -> (B, 4, 4, nc*8) channels-last.
    co = params["w1"].shape[1]
    patches, wg = _layer1_operands(noise, params["w1"])
    rows = _conv_bn_relu(patches, wg, params["g1"], params["b1"], n_valid=16 * B)
    act = rows.reshape(4, 4, B, co).transpose(2, 0, 1, 3)

    # layers 2-4: ConvT(s=2, p=1) + BN + ReLU, channels-last throughout.
    for i in (2, 3, 4):
        w = params[f"w{i}"]
        co = w.shape[1]
        b, h, wd, _ = act.shape
        patches, wsub = _subpixel_operands(act, w)
        rows = _conv_bn_relu(patches, wsub, params[f"g{i}"], params[f"b{i}"],
                             n_valid=4 * b * h * wd)
        act = _interleave_parities(rows, b, h, wd, co)

    # layer 5: ConvT(s=2, p=1) + tanh.
    w = params["w5"]
    co = w.shape[1]
    b, h, wd, _ = act.shape
    patches, wsub = _subpixel_operands(act, w)
    rows = _conv_tanh(patches, wsub)
    act = _interleave_parities(rows, b, h, wd, co)             # (B, 64, 64, 3)

    return act.transpose(0, 3, 1, 2)                           # single NCHW transpose


# ------------------------ pure-JAX reference model -------------------------- #

def _ref_conv_transpose(x, w, stride, pad):
    # ConvTranspose2d == dilated regular conv with the swapped + flipped kernel
    # (same bf16-input / f32-accumulate precision as the Pallas kernels).
    wc = jnp.flip(jnp.transpose(w, (1, 0, 2, 3)), axis=(2, 3))  # (CO, CI, 4, 4)
    return jax.lax.conv_general_dilated(
        x.astype(jnp.bfloat16), wc.astype(jnp.bfloat16),
        window_strides=(1, 1),
        padding=[(3 - pad, 3 - pad), (3 - pad, 3 - pad)],
        lhs_dilation=(stride, stride),
        dimension_numbers=("NCHW", "OIHW", "NCHW"),
        preferred_element_type=jnp.float32)


def generator_reference(noise, params):
    x = noise
    cfg = [(1, 0, True), (2, 1, True), (2, 1, True), (2, 1, True), (2, 1, False)]
    for i, (stride, pad, has_bn) in enumerate(cfg, start=1):
        x = _ref_conv_transpose(x, params[f"w{i}"], stride, pad)
        if has_bn:
            mean = jnp.mean(x, axis=(0, 2, 3), keepdims=True)
            var = jnp.mean((x - mean) ** 2, axis=(0, 2, 3), keepdims=True)
            g = params[f"g{i}"].reshape(1, -1, 1, 1)
            b = params[f"b{i}"].reshape(1, -1, 1, 1)
            x = jnp.maximum((x - mean) * jax.lax.rsqrt(var + _BN_EPS) * g + b, 0.0)
        else:
            x = jnp.tanh(x)
    return x


def init_params(key, noise_size, num_channels):
    assert int(math.sqrt(noise_size)) == math.sqrt(noise_size)
    nc = num_channels
    chans = [(noise_size, nc * 8), (nc * 8, nc * 4), (nc * 4, nc * 2),
             (nc * 2, nc), (nc, 3)]
    params = {}
    for i, ((ci, co), k) in enumerate(zip(chans, jax.random.split(key, 5)), 1):
        # ConvTranspose2d weight shape: (in_channels, out_channels, KH, KW)
        params[f"w{i}"] = 0.02 * jax.random.normal(k, (ci, co, 4, 4), jnp.float32)
        if i < 5:  # BatchNorm2d default init
            params[f"g{i}"] = jnp.ones((co,), jnp.float32)
            params[f"b{i}"] = jnp.zeros((co,), jnp.float32)
    return params


if __name__ == "__main__":
    noise_size = 16    # must be a perfect square (module assert)
    num_channels = 4
    batch = 2

    key = jax.random.PRNGKey(0)
    k_params, k_noise = jax.random.split(key)
    params = init_params(k_params, noise_size, num_channels)
    noise = jax.random.normal(k_noise, (batch, noise_size, 1, 1), jnp.float32)

    out = jax.block_until_ready(jax.jit(generator_forward)(noise, params))
    assert out.shape == (batch, 3, 64, 64), out.shape

    ref = jax.block_until_ready(jax.jit(generator_reference)(noise, params))
    assert jnp.allclose(out, ref, atol=5e-3, rtol=5e-3), \
        float(jnp.max(jnp.abs(out - ref)))

    print("KERNEL_OK")
</pallas_src>

<mosaic_0001>
module attributes {stable_mosaic.version = 11 : i64} {
  func.func @_matmul_stats_kernel(%arg0: i32, %arg1: i32, %arg2: memref<1x8x16xbf16, #tpu.memory_space<vmem>>, %arg3: memref<1x16x128xbf16, #tpu.memory_space<vmem>>, %arg4: memref<1x8x128xf32, #tpu.memory_space<vmem>>, %arg5: memref<1x128xf32, #tpu.memory_space<vmem>>, %arg6: memref<1x128xf32, #tpu.memory_space<vmem>>) attributes {dimension_semantics = [#tpu.dimension_semantics<arbitrary>, #tpu.dimension_semantics<arbitrary>], iteration_bounds = array<i64: 16, 1>, scalar_prefetch = 0 : i64, scratch_operands = 0 : i64, tpu.core_type = #tpu.core_type<tc>, window_params = [{transform_indices = @transform_0, window_bounds = array<i64: 1, 8, 16>}, {transform_indices = @transform_1, window_bounds = array<i64: 1, 16, 128>}, {transform_indices = @transform_2, window_bounds = array<i64: 1, 8, 128>}, {pipeline_mode = #tpu.pipeline_mode<synchronous>, transform_indices = @transform_3, window_bounds = array<i64: 1, 128>}, {pipeline_mode = #tpu.pipeline_mode<synchronous>, transform_indices = @transform_4, window_bounds = array<i64: 1, 128>}]} {
    %c0_i32 = arith.constant 0 : i32
    %0 = arith.cmpi eq, %arg0, %c0_i32 : i32
    %c0_i32_0 = arith.constant 0 : i32
    %1 = arith.cmpi eq, %arg1, %c0_i32_0 : i32
    %2 = arith.andi %0, %1 : i1
    %3 = arith.extui %2 : i1 to i32
    %c0_i32_1 = arith.constant 0 : i32
    %4 = arith.cmpi ne, %3, %c0_i32_1 : i32
    scf.if %4 {
      %cst_20 = arith.constant 0.000000e+00 : f32
      %24 = vector.broadcast %cst_20 : f32 to vector<1x128xf32>
      %c0_21 = arith.constant 0 : index
      %c0_22 = arith.constant 0 : index
      %25 = vector.load %arg5[%c0_21, %c0_22] : memref<1x128xf32, #tpu.memory_space<vmem>>, vector<1x128xf32>
      tpu.vector_store %arg5[%c0_21, %c0_22], %24 {strides = array<i32>} : memref<1x128xf32, #tpu.memory_space<vmem>>, vector<1x128xf32>,
      %cst_23 = arith.constant 0.000000e+00 : f32
      %26 = vector.broadcast %cst_23 : f32 to vector<1x128xf32>
      %c0_24 = arith.constant 0 : index
      %c0_25 = arith.constant 0 : index
      %27 = vector.load %arg6[%c0_24, %c0_25] : memref<1x128xf32, #tpu.memory_space<vmem>>, vector<1x128xf32>
      tpu.vector_store %arg6[%c0_24, %c0_25], %26 {strides = array<i32>} : memref<1x128xf32, #tpu.memory_space<vmem>>, vector<1x128xf32>,
    } else {
    }
    %c0 = arith.constant 0 : index
    %c0_2 = arith.constant 0 : index
    %c0_3 = arith.constant 0 : index
    %5 = vector.load %arg2[%c0, %c0_2, %c0_3] : memref<1x8x16xbf16, #tpu.memory_space<vmem>>, vector<1x8x16xbf16>
    %6 = vector.shape_cast %5 : vector<1x8x16xbf16> to vector<8x16xbf16>
    %c0_4 = arith.constant 0 : index
    %c0_5 = arith.constant 0 : index
    %c0_6 = arith.constant 0 : index
    %7 = vector.load %arg3[%c0_4, %c0_5, %c0_6] : memref<1x16x128xbf16, #tpu.memory_space<vmem>>, vector<1x16x128xbf16>
    %8 = vector.shape_cast %7 : vector<1x16x128xbf16> to vector<16x128xbf16>
    %cst = arith.constant dense<0.000000e+00> : vector<8x128xf32>
    %9 = tpu.matmul %6, %8, %cst {dimension_numbers = #tpu.dot_dimension_numbers<[1], [0], [0], [1], [0, 0, 1, 1], [], []>} : vector<8x16xbf16>, vector<16x128xbf16>, vector<8x128xf32> -> vector<8x128xf32>
    %c0_7 = arith.constant 0 : index
    %c0_8 = arith.constant 0 : index
    %c0_9 = arith.constant 0 : index
    %10 = vector.load %arg4[%c0_7, %c0_8, %c0_9] : memref<1x8x128xf32, #tpu.memory_space<vmem>>, vector<1x8x128xf32>
    %11 = vector.shape_cast %10 : vector<1x8x128xf32> to vector<8x128xf32>
    %12 = vector.shape_cast %9 : vector<8x128xf32> to vector<1x8x128xf32>
    tpu.vector_store %arg4[%c0_7, %c0_8, %c0_9], %12 {strides = array<i32>} : memref<1x8x128xf32, #tpu.memory_space<vmem>>, vector<1x8x128xf32>,
    %c0_10 = arith.constant 0 : index
    %c0_11 = arith.constant 0 : index
    %13 = vector.load %arg5[%c0_10, %c0_11] : memref<1x128xf32, #tpu.memory_space<vmem>>, vector<1x128xf32>
    %cst_12 = arith.constant dense<0.000000e+00> : vector<128xf32>
    %14 = vector.multi_reduction <add>, %9, %cst_12 [0] : vector<8x128xf32> to vector<128xf32>
    %15 = vector.shape_cast %14 : vector<128xf32> to vector<1x128xf32>
    %16 = arith.addf %13, %15 : vector<1x128xf32>
    %c0_13 = arith.constant 0 : index
    %c0_14 = arith.constant 0 : index
    %17 = vector.load %arg5[%c0_13, %c0_14] : memref<1x128xf32, #tpu.memory_space<vmem>>, vector<1x128xf32>
    tpu.vector_store %arg5[%c0_13, %c0_14], %16 {strides = array<i32>} : memref<1x128xf32, #tpu.memory_space<vmem>>, vector<1x128xf32>,
    %c0_15 = arith.constant 0 : index
    %c0_16 = arith.constant 0 : index
    %18 = vector.load %arg6[%c0_15, %c0_16] : memref<1x128xf32, #tpu.memory_space<vmem>>, vector<1x128xf32>
    %19 = arith.mulf %9, %9 : vector<8x128xf32>
    %cst_17 = arith.constant dense<0.000000e+00> : vector<128xf32>
    %20 = vector.multi_reduction <add>, %19, %cst_17 [0] : vector<8x128xf32> to vector<128xf32>
    %21 = vector.shape_cast %20 : vector<128xf32> to vector<1x128xf32>
    %22 = arith.addf %18, %21 : vector<1x128xf32>
    %c0_18 = arith.constant 0 : index
    %c0_19 = arith.constant 0 : index
    %23 = vector.load %arg6[%c0_18, %c0_19] : memref<1x128xf32, #tpu.memory_space<vmem>>, vector<1x128xf32>
    tpu.vector_store %arg6[%c0_18, %c0_19], %22 {strides = array<i32>} : memref<1x128xf32, #tpu.memory_space<vmem>>, vector<1x128xf32>,
    return
  }
  func.func @transform_0(%arg0: i32, %arg1: i32) -> (i32, i32, i32) {
    %c0_i32 = arith.constant 0 : i32
    %c0_i32_0 = arith.constant 0 : i32
    return %arg0, %arg1, %c0_i32 : i32, i32, i32
  }
  func.func @transform_1(%arg0: i32, %arg1: i32) -> (i32, i32, i32) {
    %c0_i32 = arith.constant 0 : i32
    %c0_i32_0 = arith.constant 0 : i32
    %c0_i32_1 = arith.constant 0 : i32
    return %arg0, %c0_i32, %c0_i32_0 : i32, i32, i32
  }
  func.func @transform_2(%arg0: i32, %arg1: i32) -> (i32, i32, i32) {
    %c0_i32 = arith.constant 0 : i32
    %c0_i32_0 = arith.constant 0 : i32
    return %arg0, %arg1, %c0_i32 : i32, i32, i32
  }
  func.func @transform_3(%arg0: i32, %arg1: i32) -> (i32, i32) {
    %c0_i32 = arith.constant 0 : i32
    %c0_i32_0 = arith.constant 0 : i32
    %c0_i32_1 = arith.constant 0 : i32
    return %c0_i32, %c0_i32_0 : i32, i32
  }
  func.func @transform_4(%arg0: i32, %arg1: i32) -> (i32, i32) {
    %c0_i32 = arith.constant 0 : i32
    %c0_i32_0 = arith.constant 0 : i32
    %c0_i32_1 = arith.constant 0 : i32
    return %c0_i32, %c0_i32_0 : i32, i32
  }
}

module attributes {stable_mosaic.version = 11 : i64} {
  func.func @_bn_relu_kernel(%arg0: i32, %arg1: memref<8x128xf32, #tpu.memory_space<vmem>>, %arg2: memref<1x128xf32, #tpu.memory_space<vmem>>, %arg3: memref<1x128xf32, #tpu.memory_space<vmem>>, %arg4: memref<1x128xf32, #tpu.memory_space<vmem>>, %arg5: memref<1x128xf32, #tpu.memory_space<vmem>>, %arg6: memref<8x128xf32, #tpu.memory_space<vmem>>) attributes {dimension_semantics = [#tpu.dimension_semantics<parallel>], iteration_bounds = array<i64: 16>, scalar_prefetch = 0 : i64, scratch_operands = 0 : i64, tpu.core_type = #tpu.core_type<tc>, window_params = [{transform_indices = @transform_0, window_bounds = array<i64: 8, 128>}, {pipeline_mode = #tpu.pipeline_mode<synchronous>, transform_indices = @transform_1, window_bounds = array<i64: 1, 128>}, {pipeline_mode = #tpu.pipeline_mode<synchronous>, transform_indices = @transform_2, window_bounds = array<i64: 1, 128>}, {pipeline_mode = #tpu.pipeline_mode<synchronous>, transform_indices = @transform_3, window_bounds = array<i64: 1, 128>}, {pipeline_mode = #tpu.pipeline_mode<synchronous>, transform_indices = @transform_4, window_bounds = array<i64: 1, 128>}, {transform_indices = @transform_5, window_bounds = array<i64: 8, 128>}]} {
    %c0 = arith.constant 0 : index
    %c0_0 = arith.constant 0 : index
    %0 = vector.load %arg2[%c0, %c0_0] : memref<1x128xf32, #tpu.memory_space<vmem>>, vector<1x128xf32>
    %cst = arith.constant 3.125000e-02 : f32
    %1 = vector.broadcast %cst : f32 to vector<1x128xf32>
    %2 = arith.mulf %0, %1 : vector<1x128xf32>
    %c0_1 = arith.constant 0 : index
    %c0_2 = arith.constant 0 : index
    %3 = vector.load %arg3[%c0_1, %c0_2] : memref<1x128xf32, #tpu.memory_space<vmem>>, vector<1x128xf32>
    %cst_3 = arith.constant 3.125000e-02 : f32
    %4 = vector.broadcast %cst_3 : f32 to vector<1x128xf32>
    %5 = arith.mulf %3, %4 : vector<1x128xf32>
    %6 = arith.mulf %2, %2 : vector<1x128xf32>
    %7 = arith.subf %5, %6 : vector<1x128xf32>
    %cst_4 = arith.constant 0.000000e+00 : f32
    %8 = vector.broadcast %cst_4 : f32 to vector<1x128xf32>
    %9 = arith.maximumf %7, %8 : vector<1x128xf32>
    %c0_5 = arith.constant 0 : index
    %c0_6 = arith.constant 0 : index
    %10 = vector.load %arg4[%c0_5, %c0_6] : memref<1x128xf32, #tpu.memory_space<vmem>>, vector<1x128xf32>
    %cst_7 = arith.constant 9.99999974E-6 : f32
    %11 = vector.broadcast %cst_7 : f32 to vector<1x128xf32>
    %12 = arith.addf %9, %11 : vector<1x128xf32>
    %13 = math.rsqrt %12 : vector<1x128xf32>
    %14 = arith.mulf %10, %13 : vector<1x128xf32>
    %c0_8 = arith.constant 0 : index
    %c0_9 = arith.constant 0 : index
    %15 = vector.load %arg5[%c0_8, %c0_9] : memref<1x128xf32, #tpu.memory_space<vmem>>, vector<1x128xf32>
    %16 = arith.mulf %2, %14 : vector<1x128xf32>
    %17 = arith.subf %15, %16 : vector<1x128xf32>
    %c0_10 = arith.constant 0 : index
    %c0_11 = arith.constant 0 : index
    %18 = vector.load %arg1[%c0_10, %c0_11] : memref<8x128xf32, #tpu.memory_space<vmem>>, vector<8x128xf32>
    %19 = vector.broadcast %14 : vector<1x128xf32> to vector<8x128xf32>
    %20 = arith.mulf %18, %19 : vector<8x128xf32>
    %21 = vector.broadcast %17 : vector<1x128xf32> to vector<8x128xf32>
    %22 = arith.addf %20, %21 : vector<8x128xf32>
    %cst_12 = arith.constant 0.000000e+00 : f32
    %23 = vector.broadcast %cst_12 : f32 to vector<8x128xf32>
    %24 = arith.maximumf %22, %23 : vector<8x128xf32>
    %c0_13 = arith.constant 0 : index
    %c0_14 = arith.constant 0 : index
    %25 = vector.load %arg6[%c0_13, %c0_14] : memref<8x128xf32, #tpu.memory_space<vmem>>, vector<8x128xf32>
    tpu.vector_store %arg6[%c0_13, %c0_14], %24 {strides = array<i32>} : memref<8x128xf32, #tpu.memory_space<vmem>>, vector<8x128xf32>,
    return
  }
  func.func @transform_0(%arg0: i32) -> (i32, i32) {
    %c0_i32 = arith.constant 0 : i32
    %c0_i32_0 = arith.constant 0 : i32
    return %arg0, %c0_i32 : i32, i32
  }
  func.func @transform_1(%arg0: i32) -> (i32, i32) {
    %c0_i32 = arith.constant 0 : i32
    %c0_i32_0 = arith.constant 0 : i32
    %c0_i32_1 = arith.constant 0 : i32
    return %c0_i32, %c0_i32_0 : i32, i32
  }
  func.func @transform_2(%arg0: i32) -> (i32, i32) {
    %c0_i32 = arith.constant 0 : i32
    %c0_i32_0 = arith.constant 0 : i32
    %c0_i32_1 = arith.constant 0 : i32
    return %c0_i32, %c0_i32_0 : i32, i32
  }
  func.func @transform_3(%arg0: i32) -> (i32, i32) {
    %c0_i32 = arith.constant 0 : i32
    %c0_i32_0 = arith.constant 0 : i32
    %c0_i32_1 = arith.constant 0 : i32
    return %c0_i32, %c0_i32_0 : i32, i32
  }
  func.func @transform_4(%arg0: i32) -> (i32, i32) {
    %c0_i32 = arith.constant 0 : i32
    %c0_i32_0 = arith.constant 0 : i32
    %c0_i32_1 = arith.constant 0 : i32
    return %c0_i32, %c0_i32_0 : i32, i32
  }
  func.func @transform_5(%arg0: i32) -> (i32, i32) {
    %c0_i32 = arith.constant 0 : i32
    %c0_i32_0 = arith.constant 0 : i32
    return %arg0, %c0_i32 : i32, i32
  }
}

module attributes {stable_mosaic.version = 11 : i64} {
  func.func @_bn_relu_kernel(%arg0: i32, %arg1: memref<32x128xf32, #tpu.memory_space<vmem>>, %arg2: memref<1x128xf32, #tpu.memory_space<vmem>>, %arg3: memref<1x128xf32, #tpu.memory_space<vmem>>, %arg4: memref<1x128xf32, #tpu.memory_space<vmem>>, %arg5: memref<1x128xf32, #tpu.memory_space<vmem>>, %arg6: memref<32x128xf32, #tpu.memory_space<vmem>>) attributes {dimension_semantics = [#tpu.dimension_semantics<parallel>], iteration_bounds = array<i64: 4>, scalar_prefetch = 0 : i64, scratch_operands = 0 : i64, tpu.core_type = #tpu.core_type<tc>, window_params = [{transform_indices = @transform_0, window_bounds = array<i64: 32, 128>}, {pipeline_mode = #tpu.pipeline_mode<synchronous>, transform_indices = @transform_1, window_bounds = array<i64: 1, 128>}, {pipeline_mode = #tpu.pipeline_mode<synchronous>, transform_indices = @transform_2, window_bounds = array<i64: 1, 128>}, {pipeline_mode = #tpu.pipeline_mode<synchronous>, transform_indices = @transform_3, window_bounds = array<i64: 1, 128>}, {pipeline_mode = #tpu.pipeline_mode<synchronous>, transform_indices = @transform_4, window_bounds = array<i64: 1, 128>}, {transform_indices = @transform_5, window_bounds = array<i64: 32, 128>}]} {
    %c0 = arith.constant 0 : index
    %c0_0 = arith.constant 0 : index
    %0 = vector.load %arg2[%c0, %c0_0] : memref<1x128xf32, #tpu.memory_space<vmem>>, vector<1x128xf32>
    %cst = arith.constant 7.812500e-03 : f32
    %1 = vector.broadcast %cst : f32 to vector<1x128xf32>
    %2 = arith.mulf %0, %1 : vector<1x128xf32>
    %c0_1 = arith.constant 0 : index
    %c0_2 = arith.constant 0 : index
    %3 = vector.load %arg3[%c0_1, %c0_2] : memref<1x128xf32, #tpu.memory_space<vmem>>, vector<1x128xf32>
    %cst_3 = arith.constant 7.812500e-03 : f32
    %4 = vector.broadcast %cst_3 : f32 to vector<1x128xf32>
    %5 = arith.mulf %3, %4 : vector<1x128xf32>
    %6 = arith.mulf %2, %2 : vector<1x128xf32>
    %7 = arith.subf %5, %6 : vector<1x128xf32>
    %cst_4 = arith.constant 0.000000e+00 : f32
    %8 = vector.broadcast %cst_4 : f32 to vector<1x128xf32>
    %9 = arith.maximumf %7, %8 : vector<1x128xf32>
    %c0_5 = arith.constant 0 : index
    %c0_6 = arith.constant 0 : index
    %10 = vector.load %arg4[%c0_5, %c0_6] : memref<1x128xf32, #tpu.memory_space<vmem>>, vector<1x128xf32>
    %cst_7 = arith.constant 9.99999974E-6 : f32
    %11 = vector.broadcast %cst_7 : f32 to vector<1x128xf32>
    %12 = arith.addf %9, %11 : vector<1x128xf32>
    %13 = math.rsqrt %12 : vector<1x128xf32>
    %14 = arith.mulf %10, %13 : vector<1x128xf32>
    %c0_8 = arith.constant 0 : index
    %c0_9 = arith.constant 0 : index
    %15 = vector.load %arg5[%c0_8, %c0_9] : memref<1x128xf32, #tpu.memory_space<vmem>>, vector<1x128xf32>
    %16 = arith.mulf %2, %14 : vector<1x128xf32>
    %17 = arith.subf %15, %16 : vector<1x128xf32>
    %c0_10 = arith.constant 0 : index
    %c0_11 = arith.constant 0 : index
    %18 = vector.load %arg1[%c0_10, %c0_11] : memref<32x128xf32, #tpu.memory_space<vmem>>, vector<32x128xf32>
    %19 = vector.broadcast %14 : vector<1x128xf32> to vector<32x128xf32>
    %20 = arith.mulf %18, %19 : vector<32x128xf32>
    %21 = vector.broadcast %17 : vector<1x128xf32> to vector<32x128xf32>
    %22 = arith.addf %20, %21 : vector<32x128xf32>
    %cst_12 = arith.constant 0.000000e+00 : f32
    %23 = vector.broadcast %cst_12 : f32 to vector<32x128xf32>
    %24 = arith.maximumf %22, %23 : vector<32x128xf32>
    %c0_13 = arith.constant 0 : index
    %c0_14 = arith.constant 0 : index
    %25 = vector.load %arg6[%c0_13, %c0_14] : memref<32x128xf32, #tpu.memory_space<vmem>>, vector<32x128xf32>
    tpu.vector_store %arg6[%c0_13, %c0_14], %24 {strides = array<i32>} : memref<32x128xf32, #tpu.memory_space<vmem>>, vector<32x128xf32>,
    return
  }
  func.func @transform_0(%arg0: i32) -> (i32, i32) {
    %c0_i32 = arith.constant 0 : i32
    %c0_i32_0 = arith.constant 0 : i32
    return %arg0, %c0_i32 : i32, i32
  }
  func.func @transform_1(%arg0: i32) -> (i32, i32) {
    %c0_i32 = arith.constant 0 : i32
    %c0_i32_0 = arith.constant 0 : i32
    %c0_i32_1 = arith.constant 0 : i32
    return %c0_i32, %c0_i32_0 : i32, i32
  }
  func.func @transform_2(%arg0: i32) -> (i32, i32) {
    %c0_i32 = arith.constant 0 : i32
    %c0_i32_0 = arith.constant 0 : i32
    %c0_i32_1 = arith.constant 0 : i32
    return %c0_i32, %c0_i32_0 : i32, i32
  }
  func.func @transform_3(%arg0: i32) -> (i32, i32) {
    %c0_i32 = arith.constant 0 : i32
    %c0_i32_0 = arith.constant 0 : i32
    %c0_i32_1 = arith.constant 0 : i32
    return %c0_i32, %c0_i32_0 : i32, i32
  }
  func.func @transform_4(%arg0: i32) -> (i32, i32) {
    %c0_i32 = arith.constant 0 : i32
    %c0_i32_0 = arith.constant 0 : i32
    %c0_i32_1 = arith.constant 0 : i32
    return %c0_i32, %c0_i32_0 : i32, i32
  }
  func.func @transform_5(%arg0: i32) -> (i32, i32) {
    %c0_i32 = arith.constant 0 : i32
    %c0_i32_0 = arith.constant 0 : i32
    return %arg0, %c0_i32 : i32, i32
  }
}

module attributes {stable_mosaic.version = 11 : i64} {
  func.func @_matmul_stats_kernel(%arg0: i32, %arg1: i32, %arg2: memref<1x32x128xbf16, #tpu.memory_space<vmem>>, %arg3: memref<1x128x128xbf16, #tpu.memory_space<vmem>>, %arg4: memref<1x32x128xf32, #tpu.memory_space<vmem>>, %arg5: memref<1x128xf32, #tpu.memory_space<vmem>>, %arg6: memref<1x128xf32, #tpu.memory_space<vmem>>) attributes {dimension_semantics = [#tpu.dimension_semantics<arbitrary>, #tpu.dimension_semantics<arbitrary>], iteration_bounds = array<i64: 4, 1>, scalar_prefetch = 0 : i64, scratch_operands = 0 : i64, tpu.core_type = #tpu.core_type<tc>, window_params = [{transform_indices = @transform_0, window_bounds = array<i64: 1, 32, 128>}, {transform_indices = @transform_1, window_bounds = array<i64: 1, 128, 128>}, {transform_indices = @transform_2, window_bounds = array<i64: 1, 32, 128>}, {pipeline_mode = #tpu.pipeline_mode<synchronous>, transform_indices = @transform_3, window_bounds = array<i64: 1, 128>}, {pipeline_mode = #tpu.pipeline_mode<synchronous>, transform_indices = @transform_4, window_bounds = array<i64: 1, 128>}]} {
    %c0_i32 = arith.constant 0 : i32
    %0 = arith.cmpi eq, %arg0, %c0_i32 : i32
    %c0_i32_0 = arith.constant 0 : i32
    %1 = arith.cmpi eq, %arg1, %c0_i32_0 : i32
    %2 = arith.andi %0, %1 : i1
    %3 = arith.extui %2 : i1 to i32
    %c0_i32_1 = arith.constant 0 : i32
    %4 = arith.cmpi ne, %3, %c0_i32_1 : i32
    scf.if %4 {
      %cst_20 = arith.constant 0.000000e+00 : f32
      %24 = vector.broadcast %cst_20 : f32 to vector<1x128xf32>
      %c0_21 = arith.constant 0 : index
      %c0_22 = arith.constant 0 : index
      %25 = vector.load %arg5[%c0_21, %c0_22] : memref<1x128xf32, #tpu.memory_space<vmem>>, vector<1x128xf32>
      tpu.vector_store %arg5[%c0_21, %c0_22], %24 {strides = array<i32>} : memref<1x128xf32, #tpu.memory_space<vmem>>, vector<1x128xf32>,
      %cst_23 = arith.constant 0.000000e+00 : f32
      %26 = vector.broadcast %cst_23 : f32 to vector<1x128xf32>
      %c0_24 = arith.constant 0 : index
      %c0_25 = arith.constant 0 : index
      %27 = vector.load %arg6[%c0_24, %c0_25] : memref<1x128xf32, #tpu.memory_space<vmem>>, vector<1x128xf32>
      tpu.vector_store %arg6[%c0_24, %c0_25], %26 {strides = array<i32>} : memref<1x128xf32, #tpu.memory_space<vmem>>, vector<1x128xf32>,
    } else {
    }
    %c0 = arith.constant 0 : index
    %c0_2 = arith.constant 0 : index
    %c0_3 = arith.constant 0 : index
    %5 = vector.load %arg2[%c0, %c0_2, %c0_3] : memref<1x32x128xbf16, #tpu.memory_space<vmem>>, vector<1x32x128xbf16>
    %6 = vector.shape_cast %5 : vector<1x32x128xbf16> to vector<32x128xbf16>
    %c0_4 = arith.constant 0 : index
    %c0_5 = arith.constant 0 : index
    %c0_6 = arith.constant 0 : index
    %7 = vector.load %arg3[%c0_4, %c0_5, %c0_6] : memref<1x128x128xbf16, #tpu.memory_space<vmem>>, vector<1x128x128xbf16>
    %8 = vector.shape_cast %7 : vector<1x128x128xbf16> to vector<128x128xbf16>
    %cst = arith.constant dense<0.000000e+00> : vector<32x128xf32>
    %9 = tpu.matmul %6, %8, %cst {dimension_numbers = #tpu.dot_dimension_numbers<[1], [0], [0], [1], [0, 0, 1, 1], [], []>} : vector<32x128xbf16>, vector<128x128xbf16>, vector<32x128xf32> -> vector<32x128xf32>
    %c0_7 = arith.constant 0 : index
    %c0_8 = arith.constant 0 : index
    %c0_9 = arith.constant 0 : index
    %10 = vector.load %arg4[%c0_7, %c0_8, %c0_9] : memref<1x32x128xf32, #tpu.memory_space<vmem>>, vector<1x32x128xf32>
    %11 = vector.shape_cast %10 : vector<1x32x128xf32> to vector<32x128xf32>
    %12 = vector.shape_cast %9 : vector<32x128xf32> to vector<1x32x128xf32>
    tpu.vector_store %arg4[%c0_7, %c0_8, %c0_9], %12 {strides = array<i32>} : memref<1x32x128xf32, #tpu.memory_space<vmem>>, vector<1x32x128xf32>,
    %c0_10 = arith.constant 0 : index
    %c0_11 = arith.constant 0 : index
    %13 = vector.load %arg5[%c0_10, %c0_11] : memref<1x128xf32, #tpu.memory_space<vmem>>, vector<1x128xf32>
    %cst_12 = arith.constant dense<0.000000e+00> : vector<128xf32>
    %14 = vector.multi_reduction <add>, %9, %cst_12 [0] : vector<32x128xf32> to vector<128xf32>
    %15 = vector.shape_cast %14 : vector<128xf32> to vector<1x128xf32>
    %16 = arith.addf %13, %15 : vector<1x128xf32>
    %c0_13 = arith.constant 0 : index
    %c0_14 = arith.constant 0 : index
    %17 = vector.load %arg5[%c0_13, %c0_14] : memref<1x128xf32, #tpu.memory_space<vmem>>, vector<1x128xf32>
    tpu.vector_store %arg5[%c0_13, %c0_14], %16 {strides = array<i32>} : memref<1x128xf32, #tpu.memory_space<vmem>>, vector<1x128xf32>,
    %c0_15 = arith.constant 0 : index
    %c0_16 = arith.constant 0 : index
    %18 = vector.load %arg6[%c0_15, %c0_16] : memref<1x128xf32, #tpu.memory_space<vmem>>, vector<1x128xf32>
    %19 = arith.mulf %9, %9 : vector<32x128xf32>
    %cst_17 = arith.constant dense<0.000000e+00> : vector<128xf32>
    %20 = vector.multi_reduction <add>, %19, %cst_17 [0] : vector<32x128xf32> to vector<128xf32>
    %21 = vector.shape_cast %20 : vector<128xf32> to vector<1x128xf32>
    %22 = arith.addf %18, %21 : vector<1x128xf32>
    %c0_18 = arith.constant 0 : index
    %c0_19 = arith.constant 0 : index
    %23 = vector.load %arg6[%c0_18, %c0_19] : memref<1x128xf32, #tpu.memory_space<vmem>>, vector<1x128xf32>
    tpu.vector_store %arg6[%c0_18, %c0_19], %22 {strides = array<i32>} : memref<1x128xf32, #tpu.memory_space<vmem>>, vector<1x128xf32>,
    return
  }
  func.func @transform_0(%arg0: i32, %arg1: i32) -> (i32, i32, i32) {
    %c0_i32 = arith.constant 0 : i32
    %c0_i32_0 = arith.constant 0 : i32
    return %arg0, %arg1, %c0_i32 : i32, i32, i32
  }
  func.func @transform_1(%arg0: i32, %arg1: i32) -> (i32, i32, i32) {
    %c0_i32 = arith.constant 0 : i32
    %c0_i32_0 = arith.constant 0 : i32
    %c0_i32_1 = arith.constant 0 : i32
    return %arg0, %c0_i32, %c0_i32_0 : i32, i32, i32
  }
  func.func @transform_2(%arg0: i32, %arg1: i32) -> (i32, i32, i32) {
    %c0_i32 = arith.constant 0 : i32
    %c0_i32_0 = arith.constant 0 : i32
    return %arg0, %arg1, %c0_i32 : i32, i32, i32
  }
  func.func @transform_3(%arg0: i32, %arg1: i32) -> (i32, i32) {
    %c0_i32 = arith.constant 0 : i32
    %c0_i32_0 = arith.constant 0 : i32
    %c0_i32_1 = arith.constant 0 : i32
    return %c0_i32, %c0_i32_0 : i32, i32
  }
  func.func @transform_4(%arg0: i32, %arg1: i32) -> (i32, i32) {
    %c0_i32 = arith.constant 0 : i32
    %c0_i32_0 = arith.constant 0 : i32
    %c0_i32_1 = arith.constant 0 : i32
    return %c0_i32, %c0_i32_0 : i32, i32
  }
}

module attributes {stable_mosaic.version = 11 : i64} {
  func.func @_bn_relu_kernel(%arg0: i32, %arg1: memref<128x128xf32, #tpu.memory_space<vmem>>, %arg2: memref<1x128xf32, #tpu.memory_space<vmem>>, %arg3: memref<1x128xf32, #tpu.memory_space<vmem>>, %arg4: memref<1x128xf32, #tpu.memory_space<vmem>>, %arg5: memref<1x128xf32, #tpu.memory_space<vmem>>, %arg6: memref<128x128xf32, #tpu.memory_space<vmem>>) attributes {dimension_semantics = [#tpu.dimension_semantics<parallel>], iteration_bounds = array<i64: 4>, scalar_prefetch = 0 : i64, scratch_operands = 0 : i64, tpu.core_type = #tpu.core_type<tc>, window_params = [{transform_indices = @transform_0, window_bounds = array<i64: 128, 128>}, {pipeline_mode = #tpu.pipeline_mode<synchronous>, transform_indices = @transform_1, window_bounds = array<i64: 1, 128>}, {pipeline_mode = #tpu.pipeline_mode<synchronous>, transform_indices = @transform_2, window_bounds = array<i64: 1, 128>}, {pipeline_mode = #tpu.pipeline_mode<synchronous>, transform_indices = @transform_3, window_bounds = array<i64: 1, 128>}, {pipeline_mode = #tpu.pipeline_mode<synchronous>, transform_indices = @transform_4, window_bounds = array<i64: 1, 128>}, {transform_indices = @transform_5, window_bounds = array<i64: 128, 128>}]} {
    %c0 = arith.constant 0 : index
    %c0_0 = arith.constant 0 : index
    %0 = vector.load %arg2[%c0, %c0_0] : memref<1x128xf32, #tpu.memory_space<vmem>>, vector<1x128xf32>
    %cst = arith.constant 0.001953125 : f32
    %1 = vector.broadcast %cst : f32 to vector<1x128xf32>
    %2 = arith.mulf %0, %1 : vector<1x128xf32>
    %c0_1 = arith.constant 0 : index
    %c0_2 = arith.constant 0 : index
    %3 = vector.load %arg3[%c0_1, %c0_2] : memref<1x128xf32, #tpu.memory_space<vmem>>, vector<1x128xf32>
    %cst_3 = arith.constant 0.001953125 : f32
    %4 = vector.broadcast %cst_3 : f32 to vector<1x128xf32>
    %5 = arith.mulf %3, %4 : vector<1x128xf32>
    %6 = arith.mulf %2, %2 : vector<1x128xf32>
    %7 = arith.subf %5, %6 : vector<1x128xf32>
    %cst_4 = arith.constant 0.000000e+00 : f32
    %8 = vector.broadcast %cst_4 : f32 to vector<1x128xf32>
    %9 = arith.maximumf %7, %8 : vector<1x128xf32>
    %c0_5 = arith.constant 0 : index
    %c0_6 = arith.constant 0 : index
    %10 = vector.load %arg4[%c0_5, %c0_6] : memref<1x128xf32, #tpu.memory_space<vmem>>, vector<1x128xf32>
    %cst_7 = arith.constant 9.99999974E-6 : f32
    %11 = vector.broadcast %cst_7 : f32 to vector<1x128xf32>
    %12 = arith.addf %9, %11 : vector<1x128xf32>
    %13 = math.rsqrt %12 : vector<1x128xf32>
    %14 = arith.mulf %10, %13 : vector<1x128xf32>
    %c0_8 = arith.constant 0 : index
    %c0_9 = arith.constant 0 : index
    %15 = vector.load %arg5[%c0_8, %c0_9] : memref<1x128xf32, #tpu.memory_space<vmem>>, vector<1x128xf32>
    %16 = arith.mulf %2, %14 : vector<1x128xf32>
    %17 = arith.subf %15, %16 : vector<1x128xf32>
    %c0_10 = arith.constant 0 : index
    %c0_11 = arith.constant 0 : index
    %18 = vector.load %arg1[%c0_10, %c0_11] : memref<128x128xf32, #tpu.memory_space<vmem>>, vector<128x128xf32>
    %19 = vector.broadcast %14 : vector<1x128xf32> to vector<128x128xf32>
    %20 = arith.mulf %18, %19 : vector<128x128xf32>
    %21 = vector.broadcast %17 : vector<1x128xf32> to vector<128x128xf32>
    %22 = arith.addf %20, %21 : vector<128x128xf32>
    %cst_12 = arith.constant 0.000000e+00 : f32
    %23 = vector.broadcast %cst_12 : f32 to vector<128x128xf32>
    %24 = arith.maximumf %22, %23 : vector<128x128xf32>
    %c0_13 = arith.constant 0 : index
    %c0_14 = arith.constant 0 : index
    %25 = vector.load %arg6[%c0_13, %c0_14] : memref<128x128xf32, #tpu.memory_space<vmem>>, vector<128x128xf32>
    tpu.vector_store %arg6[%c0_13, %c0_14], %24 {strides = array<i32>} : memref<128x128xf32, #tpu.memory_space<vmem>>, vector<128x128xf32>,
    return
  }
  func.func @transform_0(%arg0: i32) -> (i32, i32) {
    %c0_i32 = arith.constant 0 : i32
    %c0_i32_0 = arith.constant 0 : i32
    return %arg0, %c0_i32 : i32, i32
  }
  func.func @transform_1(%arg0: i32) -> (i32, i32) {
    %c0_i32 = arith.constant 0 : i32
    %c0_i32_0 = arith.constant 0 : i32
    %c0_i32_1 = arith.constant 0 : i32
    return %c0_i32, %c0_i32_0 : i32, i32
  }
  func.func @transform_2(%arg0: i32) -> (i32, i32) {
    %c0_i32 = arith.constant 0 : i32
    %c0_i32_0 = arith.constant 0 : i32
    %c0_i32_1 = arith.constant 0 : i32
    return %c0_i32, %c0_i32_0 : i32, i32
  }
  func.func @transform_3(%arg0: i32) -> (i32, i32) {
    %c0_i32 = arith.constant 0 : i32
    %c0_i32_0 = arith.constant 0 : i32
    %c0_i32_1 = arith.constant 0 : i32
    return %c0_i32, %c0_i32_0 : i32, i32
  }
  func.func @transform_4(%arg0: i32) -> (i32, i32) {
    %c0_i32 = arith.constant 0 : i32
    %c0_i32_0 = arith.constant 0 : i32
    %c0_i32_1 = arith.constant 0 : i32
    return %c0_i32, %c0_i32_0 : i32, i32
  }
  func.func @transform_5(%arg0: i32) -> (i32, i32) {
    %c0_i32 = arith.constant 0 : i32
    %c0_i32_0 = arith.constant 0 : i32
    return %arg0, %c0_i32 : i32, i32
  }
}

module attributes {stable_mosaic.version = 11 : i64} {
  func.func @_matmul_stats_kernel(%arg0: i32, %arg1: i32, %arg2: memref<1x128x64xbf16, #tpu.memory_space<vmem>>, %arg3: memref<1x64x128xbf16, #tpu.memory_space<vmem>>, %arg4: memref<1x128x128xf32, #tpu.memory_space<vmem>>, %arg5: memref<1x128xf32, #tpu.memory_space<vmem>>, %arg6: memref<1x128xf32, #tpu.memory_space<vmem>>) attributes {dimension_semantics = [#tpu.dimension_semantics<arbitrary>, #tpu.dimension_semantics<arbitrary>], iteration_bounds = array<i64: 4, 1>, scalar_prefetch = 0 : i64, scratch_operands = 0 : i64, tpu.core_type = #tpu.core_type<tc>, window_params = [{transform_indices = @transform_0, window_bounds = array<i64: 1, 128, 64>}, {transform_indices = @transform_1, window_bounds = array<i64: 1, 64, 128>}, {transform_indices = @transform_2, window_bounds = array<i64: 1, 128, 128>}, {pipeline_mode = #tpu.pipeline_mode<synchronous>, transform_indices = @transform_3, window_bounds = array<i64: 1, 128>}, {pipeline_mode = #tpu.pipeline_mode<synchronous>, transform_indices = @transform_4, window_bounds = array<i64: 1, 128>}]} {
    %c0_i32 = arith.constant 0 : i32
    %0 = arith.cmpi eq, %arg0, %c0_i32 : i32
    %c0_i32_0 = arith.constant 0 : i32
    %1 = arith.cmpi eq, %arg1, %c0_i32_0 : i32
    %2 = arith.andi %0, %1 : i1
    %3 = arith.extui %2 : i1 to i32
    %c0_i32_1 = arith.constant 0 : i32
    %4 = arith.cmpi ne, %3, %c0_i32_1 : i32
    scf.if %4 {
      %cst_20 = arith.constant 0.000000e+00 : f32
      %24 = vector.broadcast %cst_20 : f32 to vector<1x128xf32>
      %c0_21 = arith.constant 0 : index
      %c0_22 = arith.constant 0 : index
      %25 = vector.load %arg5[%c0_21, %c0_22] : memref<1x128xf32, #tpu.memory_space<vmem>>, vector<1x128xf32>
      tpu.vector_store %arg5[%c0_21, %c0_22], %24 {strides = array<i32>} : memref<1x128xf32, #tpu.memory_space<vmem>>, vector<1x128xf32>,
      %cst_23 = arith.constant 0.000000e+00 : f32
      %26 = vector.broadcast %cst_23 : f32 to vector<1x128xf32>
      %c0_24 = arith.constant 0 : index
      %c0_25 = arith.constant 0 : index
      %27 = vector.load %arg6[%c0_24, %c0_25] : memref<1x128xf32, #tpu.memory_space<vmem>>, vector<1x128xf32>
      tpu.vector_store %arg6[%c0_24, %c0_25], %26 {strides = array<i32>} : memref<1x128xf32, #tpu.memory_space<vmem>>, vector<1x128xf32>,
    } else {
    }
    %c0 = arith.constant 0 : index
    %c0_2 = arith.constant 0 : index
    %c0_3 = arith.constant 0 : index
    %5 = vector.load %arg2[%c0, %c0_2, %c0_3] : memref<1x128x64xbf16, #tpu.memory_space<vmem>>, vector<1x128x64xbf16>
    %6 = vector.shape_cast %5 : vector<1x128x64xbf16> to vector<128x64xbf16>
    %c0_4 = arith.constant 0 : index
    %c0_5 = arith.constant 0 : index
    %c0_6 = arith.constant 0 : index
    %7 = vector.load %arg3[%c0_4, %c0_5, %c0_6] : memref<1x64x128xbf16, #tpu.memory_space<vmem>>, vector<1x64x128xbf16>
    %8 = vector.shape_cast %7 : vector<1x64x128xbf16> to vector<64x128xbf16>
    %cst = arith.constant dense<0.000000e+00> : vector<128x128xf32>
    %9 = tpu.matmul %6, %8, %cst {dimension_numbers = #tpu.dot_dimension_numbers<[1], [0], [0], [1], [0, 0, 1, 1], [], []>} : vector<128x64xbf16>, vector<64x128xbf16>, vector<128x128xf32> -> vector<128x128xf32>
    %c0_7 = arith.constant 0 : index
    %c0_8 = arith.constant 0 : index
    %c0_9 = arith.constant 0 : index
    %10 = vector.load %arg4[%c0_7, %c0_8, %c0_9] : memref<1x128x128xf32, #tpu.memory_space<vmem>>, vector<1x128x128xf32>
    %11 = vector.shape_cast %10 : vector<1x128x128xf32> to vector<128x128xf32>
    %12 = vector.shape_cast %9 : vector<128x128xf32> to vector<1x128x128xf32>
    tpu.vector_store %arg4[%c0_7, %c0_8, %c0_9], %12 {strides = array<i32>} : memref<1x128x128xf32, #tpu.memory_space<vmem>>, vector<1x128x128xf32>,
    %c0_10 = arith.constant 0 : index
    %c0_11 = arith.constant 0 : index
    %13 = vector.load %arg5[%c0_10, %c0_11] : memref<1x128xf32, #tpu.memory_space<vmem>>, vector<1x128xf32>
    %cst_12 = arith.constant dense<0.000000e+00> : vector<128xf32>
    %14 = vector.multi_reduction <add>, %9, %cst_12 [0] : vector<128x128xf32> to vector<128xf32>
    %15 = vector.shape_cast %14 : vector<128xf32> to vector<1x128xf32>
    %16 = arith.addf %13, %15 : vector<1x128xf32>
    %c0_13 = arith.constant 0 : index
    %c0_14 = arith.constant 0 : index
    %17 = vector.load %arg5[%c0_13, %c0_14] : memref<1x128xf32, #tpu.memory_space<vmem>>, vector<1x128xf32>
    tpu.vector_store %arg5[%c0_13, %c0_14], %16 {strides = array<i32>} : memref<1x128xf32, #tpu.memory_space<vmem>>, vector<1x128xf32>,
    %c0_15 = arith.constant 0 : index
    %c0_16 = arith.constant 0 : index
    %18 = vector.load %arg6[%c0_15, %c0_16] : memref<1x128xf32, #tpu.memory_space<vmem>>, vector<1x128xf32>
    %19 = arith.mulf %9, %9 : vector<128x128xf32>
    %cst_17 = arith.constant dense<0.000000e+00> : vector<128xf32>
    %20 = vector.multi_reduction <add>, %19, %cst_17 [0] : vector<128x128xf32> to vector<128xf32>
    %21 = vector.shape_cast %20 : vector<128xf32> to vector<1x128xf32>
    %22 = arith.addf %18, %21 : vector<1x128xf32>
    %c0_18 = arith.constant 0 : index
    %c0_19 = arith.constant 0 : index
    %23 = vector.load %arg6[%c0_18, %c0_19] : memref<1x128xf32, #tpu.memory_space<vmem>>, vector<1x128xf32>
    tpu.vector_store %arg6[%c0_18, %c0_19], %22 {strides = array<i32>} : memref<1x128xf32, #tpu.memory_space<vmem>>, vector<1x128xf32>,
    return
  }
  func.func @transform_0(%arg0: i32, %arg1: i32) -> (i32, i32, i32) {
    %c0_i32 = arith.constant 0 : i32
    %c0_i32_0 = arith.constant 0 : i32
    return %arg0, %arg1, %c0_i32 : i32, i32, i32
  }
  func.func @transform_1(%arg0: i32, %arg1: i32) -> (i32, i32, i32) {
    %c0_i32 = arith.constant 0 : i32
    %c0_i32_0 = arith.constant 0 : i32
    %c0_i32_1 = arith.constant 0 : i32
    return %arg0, %c0_i32, %c0_i32_0 : i32, i32, i32
  }
  func.func @transform_2(%arg0: i32, %arg1: i32) -> (i32, i32, i32) {
    %c0_i32 = arith.constant 0 : i32
    %c0_i32_0 = arith.constant 0 : i32
    return %arg0, %arg1, %c0_i32 : i32, i32, i32
  }
  func.func @transform_3(%arg0: i32, %arg1: i32) -> (i32, i32) {
    %c0_i32 = arith.constant 0 : i32
    %c0_i32_0 = arith.constant 0 : i32
    %c0_i32_1 = arith.constant 0 : i32
    return %c0_i32, %c0_i32_0 : i32, i32
  }
  func.func @transform_4(%arg0: i32, %arg1: i32) -> (i32, i32) {
    %c0_i32 = arith.constant 0 : i32
    %c0_i32_0 = arith.constant 0 : i32
    %c0_i32_1 = arith.constant 0 : i32
    return %c0_i32, %c0_i32_0 : i32, i32
  }
}

module attributes {stable_mosaic.version = 11 : i64} {
  func.func @_matmul_stats_kernel(%arg0: i32, %arg1: i32, %arg2: memref<1x512x32xbf16, #tpu.memory_space<vmem>>, %arg3: memref<1x32x128xbf16, #tpu.memory_space<vmem>>, %arg4: memref<1x512x128xf32, #tpu.memory_space<vmem>>, %arg5: memref<1x128xf32, #tpu.memory_space<vmem>>, %arg6: memref<1x128xf32, #tpu.memory_space<vmem>>) attributes {dimension_semantics = [#tpu.dimension_semantics<arbitrary>, #tpu.dimension_semantics<arbitrary>], iteration_bounds = array<i64: 4, 1>, scalar_prefetch = 0 : i64, scratch_operands = 0 : i64, tpu.core_type = #tpu.core_type<tc>, window_params = [{transform_indices = @transform_0, window_bounds = array<i64: 1, 512, 32>}, {transform_indices = @transform_1, window_bounds = array<i64: 1, 32, 128>}, {transform_indices = @transform_2, window_bounds = array<i64: 1, 512, 128>}, {pipeline_mode = #tpu.pipeline_mode<synchronous>, transform_indices = @transform_3, window_bounds = array<i64: 1, 128>}, {pipeline_mode = #tpu.pipeline_mode<synchronous>, transform_indices = @transform_4, window_bounds = array<i64: 1, 128>}]} {
    %c0_i32 = arith.constant 0 : i32
    %0 = arith.cmpi eq, %arg0, %c0_i32 : i32
    %c0_i32_0 = arith.constant 0 : i32
    %1 = arith.cmpi eq, %arg1, %c0_i32_0 : i32
    %2 = arith.andi %0, %1 : i1
    %3 = arith.extui %2 : i1 to i32
    %c0_i32_1 = arith.constant 0 : i32
    %4 = arith.cmpi ne, %3, %c0_i32_1 : i32
    scf.if %4 {
      %cst_20 = arith.constant 0.000000e+00 : f32
      %24 = vector.broadcast %cst_20 : f32 to vector<1x128xf32>
      %c0_21 = arith.constant 0 : index
      %c0_22 = arith.constant 0 : index
      %25 = vector.load %arg5[%c0_21, %c0_22] : memref<1x128xf32, #tpu.memory_space<vmem>>, vector<1x128xf32>
      tpu.vector_store %arg5[%c0_21, %c0_22], %24 {strides = array<i32>} : memref<1x128xf32, #tpu.memory_space<vmem>>, vector<1x128xf32>,
      %cst_23 = arith.constant 0.000000e+00 : f32
      %26 = vector.broadcast %cst_23 : f32 to vector<1x128xf32>
      %c0_24 = arith.constant 0 : index
      %c0_25 = arith.constant 0 : index
      %27 = vector.load %arg6[%c0_24, %c0_25] : memref<1x128xf32, #tpu.memory_space<vmem>>, vector<1x128xf32>
      tpu.vector_store %arg6[%c0_24, %c0_25], %26 {strides = array<i32>} : memref<1x128xf32, #tpu.memory_space<vmem>>, vector<1x128xf32>,
    } else {
    }
    %c0 = arith.constant 0 : index
    %c0_2 = arith.constant 0 : index
    %c0_3 = arith.constant 0 : index
    %5 = vector.load %arg2[%c0, %c0_2, %c0_3] : memref<1x512x32xbf16, #tpu.memory_space<vmem>>, vector<1x512x32xbf16>
    %6 = vector.shape_cast %5 : vector<1x512x32xbf16> to vector<512x32xbf16>
    %c0_4 = arith.constant 0 : index
    %c0_5 = arith.constant 0 : index
    %c0_6 = arith.constant 0 : index
    %7 = vector.load %arg3[%c0_4, %c0_5, %c0_6] : memref<1x32x128xbf16, #tpu.memory_space<vmem>>, vector<1x32x128xbf16>
    %8 = vector.shape_cast %7 : vector<1x32x128xbf16> to vector<32x128xbf16>
    %cst = arith.constant dense<0.000000e+00> : vector<512x128xf32>
    %9 = tpu.matmul %6, %8, %cst {dimension_numbers = #tpu.dot_dimension_numbers<[1], [0], [0], [1], [0, 0, 1, 1], [], []>} : vector<512x32xbf16>, vector<32x128xbf16>, vector<512x128xf32> -> vector<512x128xf32>
    %c0_7 = arith.constant 0 : index
    %c0_8 = arith.constant 0 : index
    %c0_9 = arith.constant 0 : index
    %10 = vector.load %arg4[%c0_7, %c0_8, %c0_9] : memref<1x512x128xf32, #tpu.memory_space<vmem>>, vector<1x512x128xf32>
    %11 = vector.shape_cast %10 : vector<1x512x128xf32> to vector<512x128xf32>
    %12 = vector.shape_cast %9 : vector<512x128xf32> to vector<1x512x128xf32>
    tpu.vector_store %arg4[%c0_7, %c0_8, %c0_9], %12 {strides = array<i32>} : memref<1x512x128xf32, #tpu.memory_space<vmem>>, vector<1x512x128xf32>,
    %c0_10 = arith.constant 0 : index
    %c0_11 = arith.constant 0 : index
    %13 = vector.load %arg5[%c0_10, %c0_11] : memref<1x128xf32, #tpu.memory_space<vmem>>, vector<1x128xf32>
    %cst_12 = arith.constant dense<0.000000e+00> : vector<128xf32>
    %14 = vector.multi_reduction <add>, %9, %cst_12 [0] : vector<512x128xf32> to vector<128xf32>
    %15 = vector.shape_cast %14 : vector<128xf32> to vector<1x128xf32>
    %16 = arith.addf %13, %15 : vector<1x128xf32>
    %c0_13 = arith.constant 0 : index
    %c0_14 = arith.constant 0 : index
    %17 = vector.load %arg5[%c0_13, %c0_14] : memref<1x128xf32, #tpu.memory_space<vmem>>, vector<1x128xf32>
    tpu.vector_store %arg5[%c0_13, %c0_14], %16 {strides = array<i32>} : memref<1x128xf32, #tpu.memory_space<vmem>>, vector<1x128xf32>,
    %c0_15 = arith.constant 0 : index
    %c0_16 = arith.constant 0 : index
    %18 = vector.load %arg6[%c0_15, %c0_16] : memref<1x128xf32, #tpu.memory_space<vmem>>, vector<1x128xf32>
    %19 = arith.mulf %9, %9 : vector<512x128xf32>
    %cst_17 = arith.constant dense<0.000000e+00> : vector<128xf32>
    %20 = vector.multi_reduction <add>, %19, %cst_17 [0] : vector<512x128xf32> to vector<128xf32>
    %21 = vector.shape_cast %20 : vector<128xf32> to vector<1x128xf32>
    %22 = arith.addf %18, %21 : vector<1x128xf32>
    %c0_18 = arith.constant 0 : index
    %c0_19 = arith.constant 0 : index
    %23 = vector.load %arg6[%c0_18, %c0_19] : memref<1x128xf32, #tpu.memory_space<vmem>>, vector<1x128xf32>
    tpu.vector_store %arg6[%c0_18, %c0_19], %22 {strides = array<i32>} : memref<1x128xf32, #tpu.memory_space<vmem>>, vector<1x128xf32>,
    return
  }
  func.func @transform_0(%arg0: i32, %arg1: i32) -> (i32, i32, i32) {
    %c0_i32 = arith.constant 0 : i32
    %c0_i32_0 = arith.constant 0 : i32
    return %arg0, %arg1, %c0_i32 : i32, i32, i32
  }
  func.func @transform_1(%arg0: i32, %arg1: i32) -> (i32, i32, i32) {
    %c0_i32 = arith.constant 0 : i32
    %c0_i32_0 = arith.constant 0 : i32
    %c0_i32_1 = arith.constant 0 : i32
    return %arg0, %c0_i32, %c0_i32_0 : i32, i32, i32
  }
  func.func @transform_2(%arg0: i32, %arg1: i32) -> (i32, i32, i32) {
    %c0_i32 = arith.constant 0 : i32
    %c0_i32_0 = arith.constant 0 : i32
    return %arg0, %arg1, %c0_i32 : i32, i32, i32
  }
  func.func @transform_3(%arg0: i32, %arg1: i32) -> (i32, i32) {
    %c0_i32 = arith.constant 0 : i32
    %c0_i32_0 = arith.constant 0 : i32
    %c0_i32_1 = arith.constant 0 : i32
    return %c0_i32, %c0_i32_0 : i32, i32
  }
  func.func @transform_4(%arg0: i32, %arg1: i32) -> (i32, i32) {
    %c0_i32 = arith.constant 0 : i32
    %c0_i32_0 = arith.constant 0 : i32
    %c0_i32_1 = arith.constant 0 : i32
    return %c0_i32, %c0_i32_0 : i32, i32
  }
}

module attributes {stable_mosaic.version = 11 : i64} {
  func.func @_bn_relu_kernel(%arg0: i32, %arg1: memref<512x128xf32, #tpu.memory_space<vmem>>, %arg2: memref<1x128xf32, #tpu.memory_space<vmem>>, %arg3: memref<1x128xf32, #tpu.memory_space<vmem>>, %arg4: memref<1x128xf32, #tpu.memory_space<vmem>>, %arg5: memref<1x128xf32, #tpu.memory_space<vmem>>, %arg6: memref<512x128xf32, #tpu.memory_space<vmem>>) attributes {dimension_semantics = [#tpu.dimension_semantics<parallel>], iteration_bounds = array<i64: 4>, scalar_prefetch = 0 : i64, scratch_operands = 0 : i64, tpu.core_type = #tpu.core_type<tc>, window_params = [{transform_indices = @transform_0, window_bounds = array<i64: 512, 128>}, {pipeline_mode = #tpu.pipeline_mode<synchronous>, transform_indices = @transform_1, window_bounds = array<i64: 1, 128>}, {pipeline_mode = #tpu.pipeline_mode<synchronous>, transform_indices = @transform_2, window_bounds = array<i64: 1, 128>}, {pipeline_mode = #tpu.pipeline_mode<synchronous>, transform_indices = @transform_3, window_bounds = array<i64: 1, 128>}, {pipeline_mode = #tpu.pipeline_mode<synchronous>, transform_indices = @transform_4, window_bounds = array<i64: 1, 128>}, {transform_indices = @transform_5, window_bounds = array<i64: 512, 128>}]} {
    %c0 = arith.constant 0 : index
    %c0_0 = arith.constant 0 : index
    %0 = vector.load %arg2[%c0, %c0_0] : memref<1x128xf32, #tpu.memory_space<vmem>>, vector<1x128xf32>
    %cst = arith.constant 4.8828125E-4 : f32
    %1 = vector.broadcast %cst : f32 to vector<1x128xf32>
    %2 = arith.mulf %0, %1 : vector<1x128xf32>
    %c0_1 = arith.constant 0 : index
    %c0_2 = arith.constant 0 : index
    %3 = vector.load %arg3[%c0_1, %c0_2] : memref<1x128xf32, #tpu.memory_space<vmem>>, vector<1x128xf32>
    %cst_3 = arith.constant 4.8828125E-4 : f32
    %4 = vector.broadcast %cst_3 : f32 to vector<1x128xf32>
    %5 = arith.mulf %3, %4 : vector<1x128xf32>
    %6 = arith.mulf %2, %2 : vector<1x128xf32>
    %7 = arith.subf %5, %6 : vector<1x128xf32>
    %cst_4 = arith.constant 0.000000e+00 : f32
    %8 = vector.broadcast %cst_4 : f32 to vector<1x128xf32>
    %9 = arith.maximumf %7, %8 : vector<1x128xf32>
    %c0_5 = arith.constant 0 : index
    %c0_6 = arith.constant 0 : index
    %10 = vector.load %arg4[%c0_5, %c0_6] : memref<1x128xf32, #tpu.memory_space<vmem>>, vector<1x128xf32>
    %cst_7 = arith.constant 9.99999974E-6 : f32
    %11 = vector.broadcast %cst_7 : f32 to vector<1x128xf32>
    %12 = arith.addf %9, %11 : vector<1x128xf32>
    %13 = math.rsqrt %12 : vector<1x128xf32>
    %14 = arith.mulf %10, %13 : vector<1x128xf32>
    %c0_8 = arith.constant 0 : index
    %c0_9 = arith.constant 0 : index
    %15 = vector.load %arg5[%c0_8, %c0_9] : memref<1x128xf32, #tpu.memory_space<vmem>>, vector<1x128xf32>
    %16 = arith.mulf %2, %14 : vector<1x128xf32>
    %17 = arith.subf %15, %16 : vector<1x128xf32>
    %c0_10 = arith.constant 0 : index
    %c0_11 = arith.constant 0 : index
    %18 = vector.load %arg1[%c0_10, %c0_11] : memref<512x128xf32, #tpu.memory_space<vmem>>, vector<512x128xf32>
    %19 = vector.broadcast %14 : vector<1x128xf32> to vector<512x128xf32>
    %20 = arith.mulf %18, %19 : vector<512x128xf32>
    %21 = vector.broadcast %17 : vector<1x128xf32> to vector<512x128xf32>
    %22 = arith.addf %20, %21 : vector<512x128xf32>
    %cst_12 = arith.constant 0.000000e+00 : f32
    %23 = vector.broadcast %cst_12 : f32 to vector<512x128xf32>
    %24 = arith.maximumf %22, %23 : vector<512x128xf32>
    %c0_13 = arith.constant 0 : index
    %c0_14 = arith.constant 0 : index
    %25 = vector.load %arg6[%c0_13, %c0_14] : memref<512x128xf32, #tpu.memory_space<vmem>>, vector<512x128xf32>
    tpu.vector_store %arg6[%c0_13, %c0_14], %24 {strides = array<i32>} : memref<512x128xf32, #tpu.memory_space<vmem>>, vector<512x128xf32>,
    return
  }
  func.func @transform_0(%arg0: i32) -> (i32, i32) {
    %c0_i32 = arith.constant 0 : i32
    %c0_i32_0 = arith.constant 0 : i32
    return %arg0, %c0_i32 : i32, i32
  }
  func.func @transform_1(%arg0: i32) -> (i32, i32) {
    %c0_i32 = arith.constant 0 : i32
    %c0_i32_0 = arith.constant 0 : i32
    %c0_i32_1 = arith.constant 0 : i32
    return %c0_i32, %c0_i32_0 : i32, i32
  }
  func.func @transform_2(%arg0: i32) -> (i32, i32) {
    %c0_i32 = arith.constant 0 : i32
    %c0_i32_0 = arith.constant 0 : i32
    %c0_i32_1 = arith.constant 0 : i32
    return %c0_i32, %c0_i32_0 : i32, i32
  }
  func.func @transform_3(%arg0: i32) -> (i32, i32) {
    %c0_i32 = arith.constant 0 : i32
    %c0_i32_0 = arith.constant 0 : i32
    %c0_i32_1 = arith.constant 0 : i32
    return %c0_i32, %c0_i32_0 : i32, i32
  }
  func.func @transform_4(%arg0: i32) -> (i32, i32) {
    %c0_i32 = arith.constant 0 : i32
    %c0_i32_0 = arith.constant 0 : i32
    %c0_i32_1 = arith.constant 0 : i32
    return %c0_i32, %c0_i32_0 : i32, i32
  }
  func.func @transform_5(%arg0: i32) -> (i32, i32) {
    %c0_i32 = arith.constant 0 : i32
    %c0_i32_0 = arith.constant 0 : i32
    return %arg0, %c0_i32 : i32, i32
  }
}

module attributes {stable_mosaic.version = 11 : i64} {
  func.func @_matmul_tanh_kernel(%arg0: i32, %arg1: i32, %arg2: memref<1x512x16xbf16, #tpu.memory_space<vmem>>, %arg3: memref<1x16x128xbf16, #tpu.memory_space<vmem>>, %arg4: memref<1x512x128xf32, #tpu.memory_space<vmem>>) attributes {dimension_semantics = [#tpu.dimension_semantics<parallel>, #tpu.dimension_semantics<parallel>], iteration_bounds = array<i64: 4, 4>, scalar_prefetch = 0 : i64, scratch_operands = 0 : i64, tpu.core_type = #tpu.core_type<tc>, window_params = [{transform_indices = @transform_0, window_bounds = array<i64: 1, 512, 16>}, {transform_indices = @transform_1, window_bounds = array<i64: 1, 16, 128>}, {transform_indices = @transform_2, window_bounds = array<i64: 1, 512, 128>}]} {
    %c0 = arith.constant 0 : index
    %c0_0 = arith.constant 0 : index
    %c0_1 = arith.constant 0 : index
    %0 = vector.load %arg2[%c0, %c0_0, %c0_1] : memref<1x512x16xbf16, #tpu.memory_space<vmem>>, vector<1x512x16xbf16>
    %1 = vector.shape_cast %0 : vector<1x512x16xbf16> to vector<512x16xbf16>
    %c0_2 = arith.constant 0 : index
    %c0_3 = arith.constant 0 : index
    %c0_4 = arith.constant 0 : index
    %2 = vector.load %arg3[%c0_2, %c0_3, %c0_4] : memref<1x16x128xbf16, #tpu.memory_space<vmem>>, vector<1x16x128xbf16>
    %3 = vector.shape_cast %2 : vector<1x16x128xbf16> to vector<16x128xbf16>
    %cst = arith.constant dense<0.000000e+00> : vector<512x128xf32>
    %4 = tpu.matmul %1, %3, %cst {dimension_numbers = #tpu.dot_dimension_numbers<[1], [0], [0], [1], [0, 0, 1, 1], [], []>} : vector<512x16xbf16>, vector<16x128xbf16>, vector<512x128xf32> -> vector<512x128xf32>
    %5 = math.tanh %4 : vector<512x128xf32>
    %c0_5 = arith.constant 0 : index
    %c0_6 = arith.constant 0 : index
    %c0_7 = arith.constant 0 : index
    %6 = vector.load %arg4[%c0_5, %c0_6, %c0_7] : memref<1x512x128xf32, #tpu.memory_space<vmem>>, vector<1x512x128xf32>
    %7 = vector.shape_cast %6 : vector<1x512x128xf32> to vector<512x128xf32>
    %8 = vector.shape_cast %5 : vector<512x128xf32> to vector<1x512x128xf32>
    tpu.vector_store %arg4[%c0_5, %c0_6, %c0_7], %8 {strides = array<i32>} : memref<1x512x128xf32, #tpu.memory_space<vmem>>, vector<1x512x128xf32>,
    return
  }
  func.func @transform_0(%arg0: i32, %arg1: i32) -> (i32, i32, i32) {
    %c0_i32 = arith.constant 0 : i32
    %c0_i32_0 = arith.constant 0 : i32
    return %arg0, %arg1, %c0_i32 : i32, i32, i32
  }
  func.func @transform_1(%arg0: i32, %arg1: i32) -> (i32, i32, i32) {
    %c0_i32 = arith.constant 0 : i32
    %c0_i32_0 = arith.constant 0 : i32
    %c0_i32_1 = arith.constant 0 : i32
    return %arg0, %c0_i32, %c0_i32_0 : i32, i32, i32
  }
  func.func @transform_2(%arg0: i32, %arg1: i32) -> (i32, i32, i32) {
    %c0_i32 = arith.constant 0 : i32
    %c0_i32_0 = arith.constant 0 : i32
    return %arg0, %arg1, %c0_i32 : i32, i32, i32
  }
}

</mosaic_0001>

<llo_original>
// kernel: generator_forward.10
$region0: #{generator_forward.10}
  #allocation0 [shape = 'u32[]', space=smem, size = 0x4, offset = 0x4, fixed_abs, tag = 'smem constant byte address 0x4 - core index']
  #allocation1 [shape = 'u32[144,128]{1,0:T(1,128)}', space=vmem, size = 0x12000, scoped, tag = 'internal scratch']
  %s0 = inlined_call_operand.vmem [shape: f32[128,128], index: 0, kind: input, shape index: {}]
  %s1 = inlined_call_operand.vmem [shape: f32[1,128], index: 1, kind: input, shape index: {}]
  %s2 = inlined_call_operand.vmem [shape: f32[1,128], index: 2, kind: input, shape index: {}]
  %s3 = inlined_call_operand.vmem [shape: f32[1,128], index: 3, kind: input, shape index: {}]
  %s4 = inlined_call_operand.vmem [shape: f32[1,128], index: 4, kind: input, shape index: {}]
  %s5 = inlined_call_operand.vmem [shape: f32[128,128], index: 5, kind: output, shape index: {}]
  %s6 = sld [smem:[#allocation0]]
  $region53: #{generator_forward.10} parent=0
    _
  %s8 = ssub.s32 1, %s6
  %s9 = scalar_select 0, %s8, %s6
  loop: start=0, step=1, limit=18
  $region2: #{generator_forward.10} parent=0 // loop_pre_header
    _
  $region3: #{generator_forward.10} parent=0 // loop_header
    %s11 = sphi 0, %s15
    %p12 = scmp.ge.s32.totalorder %s11, 18
    %s21 = sphi 0, %s23
    %s24 = sphi 0, %s21
    %s25 = sphi 0, %s24
    %s41 = sphi 0, %s25
    %s45 = sphi 0, %s45
    %s47 = sphi 0, %s45
    %s48 = sphi 0, %s47
    %s62 = sphi 0, %s48
    %s66 = sphi 0, %s66
    %s68 = sphi 0, %s66
    %s69 = sphi 0, %s68
    %s83 = sphi 0, %s69
    %s87 = sphi 0, %s87
    %s89 = sphi 0, %s87
    %s90 = sphi 0, %s89
    %s104 = sphi 0, %s90
    %s108 = sphi 0, %s108
    %s110 = sphi 0, %s108
    %s111 = sphi 0, %s110
    %s125 = sphi 0, %s111
    %s131 = sphi 0, %s133
    %s134 = sphi 0, %s131
    %s135 = sphi 0, %s134
    %s151 = sphi 0, %s135
  $region4: #{generator_forward.10} parent=0 // loop_header_branch
    %14 = sbr.rel (%p12) target = $region8
  $region5: #{generator_forward.10} parent=0 // loop_body
    %s16 = ssub.s32 %s11, 1
    %s17 = ssub.s32 %s11, 2
    %s18 = sadd.s32 %s11, 1
    %s19 = ssub.s32 %s11, %s18
    %p20 = scmp.eq.s32.totalorder %s19, 0
    %s22 = sadd.s32 %s21, 1
    %s23 = scalar_select %p20, %s21, %s22
    %p26 = pneg %p20
    %p27 = scmp.eq.s32.totalorder %s11, 15
    %p28 = por %p26, %p27
    %p29 = scmp.ne.s32.totalorder %s21, %s24
    %p30 = scmp.eq.s32.totalorder %s11, 0
    %p31 = por %p29, %p30
    %p32 = scmp.ne.s32.totalorder %s21, %s24
    %p33 = scmp.eq.s32.totalorder %s16, 15
    %p34 = por %p32, %p33
    %p35 = scmp.ne.s32.totalorder %s24, %s25
    %p36 = scmp.eq.s32.totalorder %s16, 0
    %p37 = por %p35, %p36
    %p38 = scmp.ne.s32.totalorder %s24, %s25
    %p39 = scmp.eq.s32.totalorder %s17, 15
    %p40 = por %p38, %p39
    %p42 = scmp.ne.s32.totalorder %s25, %s41
    %p43 = scmp.eq.s32.totalorder %s17, 0
    %p44 = por %p42, %p43
    %s46 = sadd.s32 %s45, 1
    %p49 = scmp.eq.s32.totalorder %s11, 15
    %p50 = scmp.ne.s32.totalorder %s45, %s47
    %p51 = scmp.eq.s32.totalorder %s11, 0
    %p52 = por %p50, %p51
    %p53 = scmp.ne.s32.totalorder %s45, %s47
    %p54 = scmp.eq.s32.totalorder %s16, 15
    %p55 = por %p53, %p54
    %p56 = scmp.ne.s32.totalorder %s47, %s48
    %p57 = scmp.eq.s32.totalorder %s16, 0
    %p58 = por %p56, %p57
    %p59 = scmp.ne.s32.totalorder %s47, %s48
    %p60 = scmp.eq.s32.totalorder %s17, 15
    %p61 = por %p59, %p60
    %p63 = scmp.ne.s32.totalorder %s48, %s62
    %p64 = scmp.eq.s32.totalorder %s17, 0
    %p65 = por %p63, %p64
    %s67 = sadd.s32 %s66, 1
    %p70 = scmp.eq.s32.totalorder %s11, 15
    %p71 = scmp.ne.s32.totalorder %s66, %s68
    %p72 = scmp.eq.s32.totalorder %s11, 0
    %p73 = por %p71, %p72
    %p74 = scmp.ne.s32.totalorder %s66, %s68
    %p75 = scmp.eq.s32.totalorder %s16, 15
    %p76 = por %p74, %p75
    %p77 = scmp.ne.s32.totalorder %s68, %s69
    %p78 = scmp.eq.s32.totalorder %s16, 0
    %p79 = por %p77, %p78
    %p80 = scmp.ne.s32.totalorder %s68, %s69
    %p81 = scmp.eq.s32.totalorder %s17, 15
    %p82 = por %p80, %p81
    %p84 = scmp.ne.s32.totalorder %s69, %s83
    %p85 = scmp.eq.s32.totalorder %s17, 0
    %p86 = por %p84, %p85
    %s88 = sadd.s32 %s87, 1
    %p91 = scmp.eq.s32.totalorder %s11, 15
    %p92 = scmp.ne.s32.totalorder %s87, %s89
    %p93 = scmp.eq.s32.totalorder %s11, 0
    %p94 = por %p92, %p93
    %p95 = scmp.ne.s32.totalorder %s87, %s89
    %p96 = scmp.eq.s32.totalorder %s16, 15
    %p97 = por %p95, %p96
    %p98 = scmp.ne.s32.totalorder %s89, %s90
    %p99 = scmp.eq.s32.totalorder %s16, 0
    %p100 = por %p98, %p99
    %p101 = scmp.ne.s32.totalorder %s89, %s90
    %p102 = scmp.eq.s32.totalorder %s17, 15
    %p103 = por %p101, %p102
    %p105 = scmp.ne.s32.totalorder %s90, %s104
    %p106 = scmp.eq.s32.totalorder %s17, 0
    %p107 = por %p105, %p106
    %s109 = sadd.s32 %s108, 1
    %p112 = scmp.eq.s32.totalorder %s11, 15
    %p113 = scmp.ne.s32.totalorder %s108, %s110
    %p114 = scmp.eq.s32.totalorder %s11, 0
    %p115 = por %p113, %p114
    %p116 = scmp.ne.s32.totalorder %s108, %s110
    %p117 = scmp.eq.s32.totalorder %s16, 15
    %p118 = por %p116, %p117
    %p119 = scmp.ne.s32.totalorder %s110, %s111
    %p120 = scmp.eq.s32.totalorder %s16, 0
    %p121 = por %p119, %p120
    %p122 = scmp.ne.s32.totalorder %s110, %s111
    %p123 = scmp.eq.s32.totalorder %s17, 15
    %p124 = por %p122, %p123
    %p126 = scmp.ne.s32.totalorder %s111, %s125
    %p127 = scmp.eq.s32.totalorder %s17, 0
    %p128 = por %p126, %p127
    %s129 = ssub.s32 %s11, %s18
    %p130 = scmp.eq.s32.totalorder %s129, 0
    %s132 = sadd.s32 %s131, 1
    %s133 = scalar_select %p130, %s131, %s132
    %p136 = pneg %p130
    %p137 = scmp.eq.s32.totalorder %s11, 15
    %p138 = por %p136, %p137
    %p139 = scmp.ne.s32.totalorder %s131, %s134
    %p140 = scmp.eq.s32.totalorder %s11, 0
    %p141 = por %p139, %p140
    %p142 = scmp.ne.s32.totalorder %s131, %s134
    %p143 = scmp.eq.s32.totalorder %s16, 15
    %p144 = por %p142, %p143
    %p145 = scmp.ne.s32.totalorder %s134, %s135
    %p146 = scmp.eq.s32.totalorder %s16, 0
    %p147 = por %p145, %p146
    %p148 = scmp.ne.s32.totalorder %s134, %s135
    %p149 = scmp.eq.s32.totalorder %s17, 15
    %p150 = por %p148, %p149
    %p152 = scmp.ne.s32.totalorder %s135, %s151
    %p153 = scmp.eq.s32.totalorder %s17, 0
    %p154 = por %p152, %p153
    %p155 = scmp.le.s32.totalorder 1, %s11
    %p156 = scmp.lt.s32.totalorder %s11, 17
    %p157 = pnand %p155, %p156
    %p158 = pneg %p157
    // Predicated region
    $region9: #{generator_forward.10} parent=5 // pred_check
      _
    $region10: #{generator_forward.10} parent=5 // pred_check_branch
      %160 = sbr.rel (%p157) target = $region12
    $region11: #{generator_forward.10} parent=5 // pred_region
      %s161 = ssub.s32 %s11, 1
      // Predicated region
      $region13: #{generator_forward.10} parent=11 // pred_check
        %p162 = pneg %p58
      $region14: #{generator_forward.10} parent=11 // pred_check_branch
        %164 = sbr.rel (%p162) target = $region16
      $region15: #{generator_forward.10} parent=11 // pred_region
        _
      $region16: #{generator_forward.10} parent=11 // pred_fallthru
        _
      // Predicated region
      $region17: #{generator_forward.10} parent=11 // pred_check
        %p165 = pneg %p79
      $region18: #{generator_forward.10} parent=11 // pred_check_branch
        %167 = sbr.rel (%p165) target = $region20
      $region19: #{generator_forward.10} parent=11 // pred_region
        _
      $region20: #{generator_forward.10} parent=11 // pred_fallthru
        _
      // Predicated region
      $region21: #{generator_forward.10} parent=11 // pred_check
        %p168 = pneg %p100
      $region22: #{generator_forward.10} parent=11 // pred_check_branch
        %170 = sbr.rel (%p168) target = $region24
      $region23: #{generator_forward.10} parent=11 // pred_region
        _
      $region24: #{generator_forward.10} parent=11 // pred_fallthru
        _
      // Predicated region
      $region25: #{generator_forward.10} parent=11 // pred_check
        %p171 = pneg %p121
      $region26: #{generator_forward.10} parent=11 // pred_check_branch
        %173 = sbr.rel (%p171) target = $region28
      $region27: #{generator_forward.10} parent=11 // pred_region
        _
      $region28: #{generator_forward.10} parent=11 // pred_fallthru
        _
    $region12: #{generator_forward.10} parent=5 // pred_fallthru
      _
    %p174 = scmp.lt.s32.totalorder %s11, 16
    // Predicated region
    $region29: #{generator_forward.10} parent=5 // pred_check
      %p175 = pneg %p174
    $region30: #{generator_forward.10} parent=5 // pred_check_branch
      %177 = sbr.rel (%p175) target = $region32
    $region31: #{generator_forward.10} parent=5 // pred_region
      // Predicated region
      $region33: #{generator_forward.10} parent=31 // pred_check
        %p178 = pneg %p31
      $region34: #{generator_forward.10} parent=31 // pred_check_branch
        %180 = sbr.rel (%p178) target = $region36
      $region35: #{generator_forward.10} parent=31 // pred_region
        %p181 = scmp.lt.s32.totalorder %s11, 15
        %s182 = scalar_select %p181, %s11, 15
        %s183 = smul.addr %s182, 8
        %s184 = scalar_lea.vmem %s0, %s183
      $region36: #{generator_forward.10} parent=31 // pred_fallthru
        _
    $region32: #{generator_forward.10} parent=5 // pred_fallthru
      _
    %p185 = scmp.le.s32.totalorder 1, %s11
    %p186 = scmp.lt.s32.totalorder %s11, 17
    %p187 = pnand %p185, %p186
    %p188 = pneg %p187
    // Predicated region
    $region37: #{generator_forward.10} parent=5 // pred_check
      _
    $region38: #{generator_forward.10} parent=5 // pred_check_branch
      %190 = sbr.rel (%p187) target = $region40
    $region39: #{generator_forward.10} parent=5 // pred_region
      %s191 = ssub.s32 %s11, 1
      %p192 = scmp.lt.s32.totalorder %s16, 15
      %s193 = scalar_select %p192, %s16, 15
      %s194 = smul.addr %s193, 8
      %s195 = scalar_lea.vmem %s0, %s194
      %p196 = pneg %p37
      %p197 = pneg %p34
      %p198 = pneg %p58
      %p199 = pneg %p55
      %p200 = pneg %p79
      %p201 = pneg %p76
      %p202 = pneg %p100
      %p203 = pneg %p97
      %p204 = pneg %p121
      %p205 = pneg %p118
      %p206 = pneg %p147
      %p207 = pneg %p144
      %p208 = scmp.lt.s32.totalorder %s16, 15
      %s209 = scalar_select %p208, %s16, 15
      %s210 = smul.addr %s209, 8
      %s211 = scalar_lea.vmem %s5, %s210
      %p212 = scmp.lt.s32.totalorder %s16, 15
      %s213 = scalar_select %p212, %s16, 15
      %s214 = smul.addr %s213, 8
      %s215 = scalar_lea.vmem %s0, %s214
      %p216 = scmp.lt.s32.totalorder %s16, 15
      %s217 = scalar_select %p216, %s16, 15
      %s218 = smul.addr %s217, 8
      %s219 = scalar_lea.vmem %s5, %s218
      %v220 = vld [vmem:[%s1] sm:$0x1]
      %v221 = vmul.f32 %v220, 0.03125
      %v222 = vld [vmem:[%s2] sm:$0x1]
      %v223 = vmul.f32 %v222, 0.03125
      %v224 = vmul.f32 %v221, %v221
      %v225 = vsub.f32 %v223, %v224
      %v226 = vmax.f32 %v225, 0.0
      %v227 = vld [vmem:[%s3] sm:$0x1]
      %v228 = vadd.f32 %v226, 1e-05
      %v229 = vrsqrt.pop %v228
      %v230 = vmul.f32 %v227, %v229
      %v231 = vld [vmem:[%s4] sm:$0x1]
      %v232 = vmul.f32 %v221, %v230
      %v233 = vsub.f32 %v231, %v232
      %v234 = vld [vmem:[%s215] sm:$0xff]
      %v236 = vlaneseq
      %v237 = vshrl.u32 %v236, 7
      %v238 = vsub.s32 0, %v237
      %v239 = vrot.slane %v230, %v238
      %v241 = vmul.f32 %v234, %v239
      %v243 = vlaneseq
      %v244 = vshrl.u32 %v243, 7
      %v245 = vsub.s32 0, %v244
      %v246 = vrot.slane %v233, %v245
      %v248 = vadd.f32 %v241, %v246
      %v249 = vmax.f32 %v248, 0.0
      %250 = vst [vmem:[%s219] sm:$0xff] %v249
      %p251 = scmp.lt.s32.totalorder %s16, 15
      %s252 = scalar_select %p251, %s16, 15
      %s253 = smul.addr %s252, 8
      %s254 = scalar_lea.vmem %s5, %s253
      // Predicated region
      $region41: #{generator_forward.10} parent=39 // pred_check
        %p255 = pneg %p144
      $region42: #{generator_forward.10} parent=39 // pred_check_branch
        %257 = sbr.rel (%p255) target = $region44
      $region43: #{generator_forward.10} parent=39 // pred_region
        _
      $region44: #{generator_forward.10} parent=39 // pred_fallthru
        _
    $region40: #{generator_forward.10} parent=5 // pred_fallthru
      _
    %p258 = scmp.le.s32.totalorder 2, %s11
    // Predicated region
    $region45: #{generator_forward.10} parent=5 // pred_check
      %p259 = pneg %p258
    $region46: #{generator_forward.10} parent=5 // pred_check_branch
      %261 = sbr.rel (%p259) target = $region48
    $region47: #{generator_forward.10} parent=5 // pred_region
      %s262 = ssub.s32 %s11, 2
      // Predicated region
      $region49: #{generator_forward.10} parent=47 // pred_check
        %p263 = pneg %p150
      $region50: #{generator_forward.10} parent=47 // pred_check_branch
        %265 = sbr.rel (%p263) target = $region52
      $region51: #{generator_forward.10} parent=47 // pred_region
        %p266 = scmp.lt.s32.totalorder %s17, 15
        %s267 = scalar_select %p266, %s17, 15
        %s268 = smul.addr %s267, 8
        %s269 = scalar_lea.vmem %s5, %s268
      $region52: #{generator_forward.10} parent=47 // pred_fallthru
        _
    $region48: #{generator_forward.10} parent=5 // pred_fallthru
      _
  $region6: #{generator_forward.10} parent=0 // loop_footer
    %s15 = sadd.s32 1, %s11
  $region7: #{generator_forward.10} parent=0 // loop_footer_branch
    %10 = sbr.rel target = $region3
  $region8: #{generator_forward.10} parent=0 // loop_exit
    _

// kernel: generator_forward.9
$region0: #{generator_forward.9}
  #allocation0 [shape = 'u32[]', space=smem, size = 0x4, offset = 0x4, fixed_abs, tag = 'smem constant byte address 0x4 - core index']
  #allocation1 [shape = 'u32[144,128]{1,0:T(1,128)}', space=vmem, size = 0x12000, scoped, tag = 'internal scratch']
  %s0 = inlined_call_operand.vmem [shape: bf16[16,8,16], index: 0, kind: input, shape index: {}]
  %s1 = inlined_call_operand.vmem [shape: bf16[16,16,128], index: 1, kind: input, shape index: {}]
  %s2 = inlined_call_operand.vmem [shape: f32[16,8,128], index: 2, kind: output, shape index: {0}]
  %s3 = inlined_call_operand.vmem [shape: f32[1,128], index: 3, kind: output, shape index: {1}]
  %s4 = inlined_call_operand.vmem [shape: f32[1,128], index: 4, kind: output, shape index: {2}]
  %5 = xla_tuple %s2, %s3, %s4
  %s6 = sld [smem:[#allocation0]]
  $region61: #{generator_forward.9} parent=0
    _
  %s8 = ssub.s32 1, %s6
  %s9 = scalar_select 0, %s8, %s6
  loop: start=0, step=1, limit=18
  $region2: #{generator_forward.9} parent=0 // loop_pre_header
    _
  $region3: #{generator_forward.9} parent=0 // loop_header
    %s11 = sphi 0, %s15
    %p12 = scmp.ge.s32.totalorder %s11, 18
    %s18 = sphi 0, %s30
    %s19 = sphi 0, %s26
    %s20 = sphi 0, %s18
    %s21 = sphi 0, %s19
    %s22 = sphi 0, %s20
    %s23 = sphi 0, %s21
    %s35 = sphi 0, %s37
    %s38 = sphi 0, %s35
    %s39 = sphi 0, %s38
    %s55 = sphi 0, %s39
    %s61 = sphi 0, %s63
    %s64 = sphi 0, %s61
    %s65 = sphi 0, %s64
    %s81 = sphi 0, %s65
    %s89 = sphi 0, %s91
    %s92 = sphi 0, %s89
    %s93 = sphi 0, %s92
    %s109 = sphi 0, %s93
    %s113 = sphi 0, %s113
    %s115 = sphi 0, %s113
    %s116 = sphi 0, %s115
    %s130 = sphi 0, %s116
    %s134 = sphi 0, %s134
    %s136 = sphi 0, %s134
    %s137 = sphi 0, %s136
    %s151 = sphi 0, %s137
  $region4: #{generator_forward.9} parent=0 // loop_header_branch
    %14 = sbr.rel (%p12) target = $region8
  $region5: #{generator_forward.9} parent=0 // loop_body
    %s16 = ssub.s32 %s11, 1
    %s17 = ssub.s32 %s11, 2
    %s24 = sadd.s32 1, %s19
    %p25 = scmp.ge.s32.totalorder %s24, 1
    %s26 = scalar_select %p25, 0, %s24
    %s27 = sadd.s32 1, %s18
    %s28 = scalar_select %p25, %s27, %s18
    %p29 = scmp.ge.s32.totalorder %s28, 16
    %s30 = scalar_select %p29, 0, %s28
    %s31 = ssub.s32 %s18, %s30
    %s32 = ssub.s32 %s19, %s26
    %s33 = sor.u32 %s31, %s32
    %p34 = scmp.eq.s32.totalorder %s33, 0
    %s36 = sadd.s32 %s35, 1
    %s37 = scalar_select %p34, %s35, %s36
    %p40 = pneg %p34
    %p41 = scmp.eq.s32.totalorder %s11, 15
    %p42 = por %p40, %p41
    %p43 = scmp.ne.s32.totalorder %s35, %s38
    %p44 = scmp.eq.s32.totalorder %s11, 0
    %p45 = por %p43, %p44
    %p46 = scmp.ne.s32.totalorder %s35, %s38
    %p47 = scmp.eq.s32.totalorder %s16, 15
    %p48 = por %p46, %p47
    %p49 = scmp.ne.s32.totalorder %s38, %s39
    %p50 = scmp.eq.s32.totalorder %s16, 0
    %p51 = por %p49, %p50
    %p52 = scmp.ne.s32.totalorder %s38, %s39
    %p53 = scmp.eq.s32.totalorder %s17, 15
    %p54 = por %p52, %p53
    %p56 = scmp.ne.s32.totalorder %s39, %s55
    %p57 = scmp.eq.s32.totalorder %s17, 0
    %p58 = por %p56, %p57
    %s59 = ssub.s32 %s18, %s30
    %p60 = scmp.eq.s32.totalorder %s59, 0
    %s62 = sadd.s32 %s61, 1
    %s63 = scalar_select %p60, %s61, %s62
    %p66 = pneg %p60
    %p67 = scmp.eq.s32.totalorder %s11, 15
    %p68 = por %p66, %p67
    %p69 = scmp.ne.s32.totalorder %s61, %s64
    %p70 = scmp.eq.s32.totalorder %s11, 0
    %p71 = por %p69, %p70
    %p72 = scmp.ne.s32.totalorder %s61, %s64
    %p73 = scmp.eq.s32.totalorder %s16, 15
    %p74 = por %p72, %p73
    %p75 = scmp.ne.s32.totalorder %s64, %s65
    %p76 = scmp.eq.s32.totalorder %s16, 0
    %p77 = por %p75, %p76
    %p78 = scmp.ne.s32.totalorder %s64, %s65
    %p79 = scmp.eq.s32.totalorder %s17, 15
    %p80 = por %p78, %p79
    %p82 = scmp.ne.s32.totalorder %s65, %s81
    %p83 = scmp.eq.s32.totalorder %s17, 0
    %p84 = por %p82, %p83
    %s85 = ssub.s32 %s18, %s30
    %s86 = ssub.s32 %s19, %s26
    %s87 = sor.u32 %s85, %s86
    %p88 = scmp.eq.s32.totalorder %s87, 0
    %s90 = sadd.s32 %s89, 1
    %s91 = scalar_select %p88, %s89, %s90
    %p94 = pneg %p88
    %p95 = scmp.eq.s32.totalorder %s11, 15
    %p96 = por %p94, %p95
    %p97 = scmp.ne.s32.totalorder %s89, %s92
    %p98 = scmp.eq.s32.totalorder %s11, 0
    %p99 = por %p97, %p98
    %p100 = scmp.ne.s32.totalorder %s89, %s92
    %p101 = scmp.eq.s32.totalorder %s16, 15
    %p102 = por %p100, %p101
    %p103 = scmp.ne.s32.totalorder %s92, %s93
    %p104 = scmp.eq.s32.totalorder %s16, 0
    %p105 = por %p103, %p104
    %p106 = scmp.ne.s32.totalorder %s92, %s93
    %p107 = scmp.eq.s32.totalorder %s17, 15
    %p108 = por %p106, %p107
    %p110 = scmp.ne.s32.totalorder %s93, %s109
    %p111 = scmp.eq.s32.totalorder %s17, 0
    %p112 = por %p110, %p111
    %s114 = sadd.s32 %s113, 1
    %p117 = scmp.eq.s32.totalorder %s11, 15
    %p118 = scmp.ne.s32.totalorder %s113, %s115
    %p119 = scmp.eq.s32.totalorder %s11, 0
    %p120 = por %p118, %p119
    %p121 = scmp.ne.s32.totalorder %s113, %s115
    %p122 = scmp.eq.s32.totalorder %s16, 15
    %p123 = por %p121, %p122
    %p124 = scmp.ne.s32.totalorder %s115, %s116
    %p125 = scmp.eq.s32.totalorder %s16, 0
    %p126 = por %p124, %p125
    %p127 = scmp.ne.s32.totalorder %s115, %s116
    %p128 = scmp.eq.s32.totalorder %s17, 15
    %p129 = por %p127, %p128
    %p131 = scmp.ne.s32.totalorder %s116, %s130
    %p132 = scmp.eq.s32.totalorder %s17, 0
    %p133 = por %p131, %p132
    %s135 = sadd.s32 %s134, 1
    %p138 = scmp.eq.s32.totalorder %s11, 15
    %p139 = scmp.ne.s32.totalorder %s134, %s136
    %p140 = scmp.eq.s32.totalorder %s11, 0
    %p141 = por %p139, %p140
    %p142 = scmp.ne.s32.totalorder %s134, %s136
    %p143 = scmp.eq.s32.totalorder %s16, 15
    %p144 = por %p142, %p143
    %p145 = scmp.ne.s32.totalorder %s136, %s137
    %p146 = scmp.eq.s32.totalorder %s16, 0
    %p147 = por %p145, %p146
    %p148 = scmp.ne.s32.totalorder %s136, %s137
    %p149 = scmp.eq.s32.totalorder %s17, 15
    %p150 = por %p148, %p149
    %p152 = scmp.ne.s32.totalorder %s137, %s151
    %p153 = scmp.eq.s32.totalorder %s17, 0
    %p154 = por %p152, %p153
    %p155 = scmp.le.s32.totalorder 1, %s11
    %p156 = scmp.lt.s32.totalorder %s11, 17
    %p157 = pnand %p155, %p156
    %p158 = pneg %p157
    // Predicated region
    $region9: #{generator_forward.9} parent=5 // pred_check
      _
    $region10: #{generator_forward.9} parent=5 // pred_check_branch
      %160 = sbr.rel (%p157) target = $region12
    $region11: #{generator_forward.9} parent=5 // pred_region
      %s161 = ssub.s32 %s11, 1
    $region12: #{generator_forward.9} parent=5 // pred_fallthru
      _
    %p162 = scmp.lt.s32.totalorder %s11, 16
    // Predicated region
    $region13: #{generator_forward.9} parent=5 // pred_check
      %p163 = pneg %p162
    $region14: #{generator_forward.9} parent=5 // pred_check_branch
      %165 = sbr.rel (%p163) target = $region16
    $region15: #{generator_forward.9} parent=5 // pred_region
      // Predicated region
      $region17: #{generator_forward.9} parent=15 // pred_check
        %p166 = pneg %p45
      $region18: #{generator_forward.9} parent=15 // pred_check_branch
        %168 = sbr.rel (%p166) target = $region20
      $region19: #{generator_forward.9} parent=15 // pred_region
        %p169 = scmp.lt.s32.totalorder %s18, 15
        %s170 = scalar_select %p169, %s18, 15
        %p171 = scmp.lt.s32.totalorder %s19, 0
        %s172 = scalar_select %p171, %s19, 0
        %s173 = sadd.s32 %s172, %s170
        %s174 = smul.addr %s173, 4
        %s175 = scalar_lea.vmem %s0, %s174
      $region20: #{generator_forward.9} parent=15 // pred_fallthru
        _
      // Predicated region
      $region21: #{generator_forward.9} parent=15 // pred_check
        %p176 = pneg %p71
      $region22: #{generator_forward.9} parent=15 // pred_check_branch
        %178 = sbr.rel (%p176) target = $region24
      $region23: #{generator_forward.9} parent=15 // pred_region
        %p179 = scmp.lt.s32.totalorder %s18, 15
        %s180 = scalar_select %p179, %s18, 15
        %s181 = smul.addr %s180, 2
        %s182 = smul.addr %s181, 4
        %s183 = scalar_lea.vmem %s1, %s182
      $region24: #{generator_forward.9} parent=15 // pred_fallthru
        _
    $region16: #{generator_forward.9} parent=5 // pred_fallthru
      _
    %p184 = scmp.le.s32.totalorder 1, %s11
    %p185 = scmp.lt.s32.totalorder %s11, 17
    %p186 = pnand %p184, %p185
    %p187 = pneg %p186
    // Predicated region
    $region25: #{generator_forward.9} parent=5 // pred_check
      _
    $region26: #{generator_forward.9} parent=5 // pred_check_branch
      %189 = sbr.rel (%p186) target = $region28
    $region27: #{generator_forward.9} parent=5 // pred_region
      %s190 = ssub.s32 %s11, 1
      %p191 = scmp.lt.s32.totalorder %s20, 15
      %s192 = scalar_select %p191, %s20, 15
      %p193 = scmp.lt.s32.totalorder %s21, 0
      %s194 = scalar_select %p193, %s21, 0
      %s195 = sadd.s32 %s194, %s192
      %s196 = smul.addr %s195, 4
      %s197 = scalar_lea.vmem %s0, %s196
      %p198 = pneg %p51
      %p199 = pneg %p48
      %p200 = scmp.lt.s32.totalorder %s20, 15
      %s201 = scalar_select %p200, %s20, 15
      %s202 = smul.addr %s201, 2
      %s203 = smul.addr %s202, 4
      %s204 = scalar_lea.vmem %s1, %s203
      %p205 = pneg %p77
      %p206 = pneg %p74
      %p207 = pneg %p105
      %p208 = pneg %p102
      %p209 = scmp.lt.s32.totalorder %s20, 15
      %s210 = scalar_select %p209, %s20, 15
      %p211 = scmp.lt.s32.totalorder %s21, 0
      %s212 = scalar_select %p211, %s21, 0
      %s213 = sadd.s32 %s212, %s210
      %s214 = smul.addr %s213, 8
      %s215 = scalar_lea.vmem %s2, %s214
      %p216 = pneg %p126
      %p217 = pneg %p123
      %p218 = pneg %p147
      %p219 = pneg %p144
      %p220 = scmp.lt.s32.totalorder %s20, 15
      %s221 = scalar_select %p220, %s20, 15
      %p222 = scmp.lt.s32.totalorder %s21, 0
      %s223 = scalar_select %p222, %s21, 0
      %s224 = sadd.s32 %s223, %s221
      %s225 = smul.addr %s224, 4
      %s226 = scalar_lea.vmem %s0, %s225
      %p227 = scmp.lt.s32.totalorder %s20, 15
      %s228 = scalar_select %p227, %s20, 15
      %s229 = smul.addr %s228, 2
      %s230 = smul.addr %s229, 4
      %s231 = scalar_lea.vmem %s1, %s230
      %p232 = scmp.lt.s32.totalorder %s20, 15
      %s233 = scalar_select %p232, %s20, 15
      %p234 = scmp.lt.s32.totalorder %s21, 0
      %s235 = scalar_select %p234, %s21, 0
      %s236 = sadd.s32 %s235, %s233
      %s237 = smul.addr %s236, 8
      %s238 = scalar_lea.vmem %s2, %s237
      %p240 = scmp.eq.s32.totalorder %s20, 0
      %p241 = scmp.eq.s32.totalorder %s21, 0
      %p242 = pnand %p240, %p241
      %p243 = pneg %p242
      // Predicated region
      $region29: #{generator_forward.9} parent=27 // pred_check
        _
      $region30: #{generator_forward.9} parent=27 // pred_check_branch
        %245 = sbr.rel (%p242) target = $region32
      $region31: #{generator_forward.9} parent=27 // pred_region
        %246 = vst [vmem:[%s3] sm:$0x1] 0.0
        %247 = vst [vmem:[%s4] sm:$0x1] 0.0
      $region32: #{generator_forward.9} parent=27 // pred_fallthru
        _
      %v248 = vld [vmem:[%s226] sm:$0xf]
      %v249 = vld [vmem:[%s231] sm:$0xf]
      %v250 = vld [vmem:[%s231 + $0x4] sm:$0xf]
      %v253 = vunpack.c.l.b16 %v249
      %v254 = vunpack.c.l.b16 %v250
      %v255 = vpack.c.b16 %v254, %v253
      %vm257 = vcmask 130048
      %v259 = vsel %vm257, %v248, 0
      %261 = vmatprep.subr.bf16.mxu0 0
      %262 = vmatpush1.bf16.msra.mxu0 %v255
      %263 = vmatprep.subr.bf16.mxu0 0
      %264 = vmatpush1.bf16.msra.mxu0 0
      %265 = vmatprep.subr.bf16.mxu0 0
      %266 = vmatpush1.bf16.msra.mxu0 0
      %267 = vmatprep.subr.bf16.mxu0 0
      %268 = vmatpush1.bf16.msra.mxu0 0
      %269 = vmatprep.subr.bf16.mxu0 0
      %270 = vmatpush1.bf16.msra.mxu0 0
      %271 = vmatprep.subr.bf16.mxu0 0
      %272 = vmatpush1.bf16.msra.mxu0 0
      %273 = vmatprep.subr.bf16.mxu0 0
      %274 = vmatpush1.bf16.msra.mxu0 0
      %275 = vmatprep.subr.bf16.mxu0 0
      %276 = vmatpush1.bf16.msra.mxu0 0
      %277 = vmatprep.subr.bf16.mxu0 0
      %278 = vmatpush1.bf16.msra.mxu0 0
      %279 = vmatprep.subr.bf16.mxu0 0
      %280 = vmatpush1.bf16.msra.mxu0 0
      %281 = vmatprep.subr.bf16.mxu0 0
      %282 = vmatpush1.bf16.msra.mxu0 0
      %283 = vmatprep.subr.bf16.mxu0 0
      %284 = vmatpush1.bf16.msra.mxu0 0
      %285 = vmatprep.subr.bf16.mxu0 0
      %286 = vmatpush1.bf16.msra.mxu0 0
      %287 = vmatprep.subr.bf16.mxu0 0
      %288 = vmatpush1.bf16.msra.mxu0 0
      %289 = vmatprep.subr.bf16.mxu0 0
      %290 = vmatpush1.bf16.msra.mxu0 0
      %291 = vmatprep.subr.bf16.mxu0 0
      %292 = vmatpush1.bf16.msra.mxu0 0
      %293 = vmatprep.mubr.bf16.mxu0 0
      %294 = vmatmul.mubr.bf16.gmra.mrb[0].mxu0 %v259
      %v295 = vpop.f32.mrb[0].mxu0
      %v296 = vadd.f32 0.0, %v295
      %v297 = vpop.f32.mrb[0].mxu0
      %v298 = vpop.f32.mrb[0].mxu0
      %v299 = vpop.f32.mrb[0].mxu0
      %300 = vdwg.mxu0
      %301 = vst [vmem:[%s238] sm:$0xff] %v296
      %v302 = vld [vmem:[%s3] sm:$0x1]
      %v303 = vrot.slane %v296, 4
      %v304 = vadd.f32 %v296, %v303
      %v305 = vrot.slane %v304, 2
      %v306 = vadd.f32 %v304, %v305
      %v307 = vrot.slane %v306, 1
      %v308 = vadd.f32 %v306, %v307
      %v309 = vadd.f32 %v302, %v308
      %310 = vst [vmem:[%s3] sm:$0x1] %v309
      %v311 = vld [vmem:[%s4] sm:$0x1]
      %v312 = vmul.f32 %v296, %v296
      %v313 = vrot.slane %v312, 4
      %v314 = vadd.f32 %v312, %v313
      %v315 = vrot.slane %v314, 2
      %v316 = vadd.f32 %v314, %v315
      %v317 = vrot.slane %v316, 1
      %v318 = vadd.f32 %v316, %v317
      %v319 = vadd.f32 %v311, %v318
      %320 = vst [vmem:[%s4] sm:$0x1] %v319
      %p321 = scmp.lt.s32.totalorder %s20, 15
      %s322 = scalar_select %p321, %s20, 15
      %p323 = scmp.lt.s32.totalorder %s21, 0
      %s324 = scalar_select %p323, %s21, 0
      %s325 = sadd.s32 %s324, %s322
      %s326 = smul.addr %s325, 8
      %s327 = scalar_lea.vmem %s2, %s326
      // Predicated region
      $region33: #{generator_forward.9} parent=27 // pred_check
        %p328 = pneg %p102
      $region34: #{generator_forward.9} parent=27 // pred_check_branch
        %330 = sbr.rel (%p328) target = $region36
      $region35: #{generator_forward.9} parent=27 // pred_region
        _
      $region36: #{generator_forward.9} parent=27 // pred_fallthru
        _
      // Predicated region
      $region37: #{generator_forward.9} parent=27 // pred_check
        %p331 = pneg %p123
      $region38: #{generator_forward.9} parent=27 // pred_check_branch
        %333 = sbr.rel (%p331) target = $region40
      $region39: #{generator_forward.9} parent=27 // pred_region
        _
      $region40: #{generator_forward.9} parent=27 // pred_fallthru
        _
      // Predicated region
      $region41: #{generator_forward.9} parent=27 // pred_check
        %p334 = pneg %p144
      $region42: #{generator_forward.9} parent=27 // pred_check_branch
        %336 = sbr.rel (%p334) target = $region44
      $region43: #{generator_forward.9} parent=27 // pred_region
        _
      $region44: #{generator_forward.9} parent=27 // pred_fallthru
        _
      // Predicated region
      $region45: #{generator_forward.9} parent=27 // pred_check
        %p337 = pneg %p123
      $region46: #{generator_forward.9} parent=27 // pred_check_branch
        %339 = sbr.rel (%p337) target = $region48
      $region47: #{generator_forward.9} parent=27 // pred_region
        _
      $region48: #{generator_forward.9} parent=27 // pred_fallthru
        _
      // Predicated region
      $region49: #{generator_forward.9} parent=27 // pred_check
        %p340 = pneg %p144
      $region50: #{generator_forward.9} parent=27 // pred_check_branch
        %342 = sbr.rel (%p340) target = $region52
      $region51: #{generator_forward.9} parent=27 // pred_region
        _
      $region52: #{generator_forward.9} parent=27 // pred_fallthru
        _
    $region28: #{generator_forward.9} parent=5 // pred_fallthru
      _
    %p343 = scmp.le.s32.totalorder 2, %s11
    // Predicated region
    $region53: #{generator_forward.9} parent=5 // pred_check
      %p344 = pneg %p343
    $region54: #{generator_forward.9} parent=5 // pred_check_branch
      %346 = sbr.rel (%p344) target = $region56
    $region55: #{generator_forward.9} parent=5 // pred_region
      %s347 = ssub.s32 %s11, 2
      // Predicated region
      $region57: #{generator_forward.9} parent=55 // pred_check
        %p348 = pneg %p108
      $region58: #{generator_forward.9} parent=55 // pred_check_branch
        %350 = sbr.rel (%p348) target = $region60
      $region59: #{generator_forward.9} parent=55 // pred_region
        %p351 = scmp.lt.s32.totalorder %s22, 15
        %s352 = scalar_select %p351, %s22, 15
        %p353 = scmp.lt.s32.totalorder %s23, 0
        %s354 = scalar_select %p353, %s23, 0
        %s355 = sadd.s32 %s354, %s352
        %s356 = smul.addr %s355, 8
        %s357 = scalar_lea.vmem %s2, %s356
      $region60: #{generator_forward.9} parent=55 // pred_fallthru
        _
    $region56: #{generator_forward.9} parent=5 // pred_fallthru
      _
  $region6: #{generator_forward.9} parent=0 // loop_footer
    %s15 = sadd.s32 1, %s11
  $region7: #{generator_forward.9} parent=0 // loop_footer_branch
    %10 = sbr.rel target = $region3
  $region8: #{generator_forward.9} parent=0 // loop_exit
    _

// kernel: generator_forward.12
$region0: #{generator_forward.12}
  #allocation0 [shape = 'u32[]', space=smem, size = 0x4, offset = 0x4, fixed_abs, tag = 'smem constant byte address 0x4 - core index']
  #allocation1 [shape = 'u32[144,128]{1,0:T(1,128)}', space=vmem, size = 0x12000, scoped, tag = 'internal scratch']
  %s0 = inlined_call_operand.vmem [shape: f32[128,128], index: 0, kind: input, shape index: {}]
  %s1 = inlined_call_operand.vmem [shape: f32[1,128], index: 1, kind: input, shape index: {}]
  %s2 = inlined_call_operand.vmem [shape: f32[1,128], index: 2, kind: input, shape index: {}]
  %s3 = inlined_call_operand.vmem [shape: f32[1,128], index: 3, kind: input, shape index: {}]
  %s4 = inlined_call_operand.vmem [shape: f32[1,128], index: 4, kind: input, shape index: {}]
  %s5 = inlined_call_operand.vmem [shape: f32[128,128], index: 5, kind: output, shape index: {}]
  %s6 = sld [smem:[#allocation0]]
  $region53: #{generator_forward.12} parent=0
    _
  %s8 = ssub.s32 1, %s6
  %s9 = scalar_select 0, %s8, %s6
  loop: start=0, step=1, limit=6
  $region2: #{generator_forward.12} parent=0 // loop_pre_header
    _
  $region3: #{generator_forward.12} parent=0 // loop_header
    %s11 = sphi 0, %s15
    %p12 = scmp.ge.s32.totalorder %s11, 6
    %s21 = sphi 0, %s23
    %s24 = sphi 0, %s21
    %s25 = sphi 0, %s24
    %s41 = sphi 0, %s25
    %s45 = sphi 0, %s45
    %s47 = sphi 0, %s45
    %s48 = sphi 0, %s47
    %s62 = sphi 0, %s48
    %s66 = sphi 0, %s66
    %s68 = sphi 0, %s66
    %s69 = sphi 0, %s68
    %s83 = sphi 0, %s69
    %s87 = sphi 0, %s87
    %s89 = sphi 0, %s87
    %s90 = sphi 0, %s89
    %s104 = sphi 0, %s90
    %s108 = sphi 0, %s108
    %s110 = sphi 0, %s108
    %s111 = sphi 0, %s110
    %s125 = sphi 0, %s111
    %s131 = sphi 0, %s133
    %s134 = sphi 0, %s131
    %s135 = sphi 0, %s134
    %s151 = sphi 0, %s135
  $region4: #{generator_forward.12} parent=0 // loop_header_branch
    %14 = sbr.rel (%p12) target = $region8
  $region5: #{generator_forward.12} parent=0 // loop_body
    %s16 = ssub.s32 %s11, 1
    %s17 = ssub.s32 %s11, 2
    %s18 = sadd.s32 %s11, 1
    %s19 = ssub.s32 %s11, %s18
    %p20 = scmp.eq.s32.totalorder %s19, 0
    %s22 = sadd.s32 %s21, 1
    %s23 = scalar_select %p20, %s21, %s22
    %p26 = pneg %p20
    %p27 = scmp.eq.s32.totalorder %s11, 3
    %p28 = por %p26, %p27
    %p29 = scmp.ne.s32.totalorder %s21, %s24
    %p30 = scmp.eq.s32.totalorder %s11, 0
    %p31 = por %p29, %p30
    %p32 = scmp.ne.s32.totalorder %s21, %s24
    %p33 = scmp.eq.s32.totalorder %s16, 3
    %p34 = por %p32, %p33
    %p35 = scmp.ne.s32.totalorder %s24, %s25
    %p36 = scmp.eq.s32.totalorder %s16, 0
    %p37 = por %p35, %p36
    %p38 = scmp.ne.s32.totalorder %s24, %s25
    %p39 = scmp.eq.s32.totalorder %s17, 3
    %p40 = por %p38, %p39
    %p42 = scmp.ne.s32.totalorder %s25, %s41
    %p43 = scmp.eq.s32.totalorder %s17, 0
    %p44 = por %p42, %p43
    %s46 = sadd.s32 %s45, 1
    %p49 = scmp.eq.s32.totalorder %s11, 3
    %p50 = scmp.ne.s32.totalorder %s45, %s47
    %p51 = scmp.eq.s32.totalorder %s11, 0
    %p52 = por %p50, %p51
    %p53 = scmp.ne.s32.totalorder %s45, %s47
    %p54 = scmp.eq.s32.totalorder %s16, 3
    %p55 = por %p53, %p54
    %p56 = scmp.ne.s32.totalorder %s47, %s48
    %p57 = scmp.eq.s32.totalorder %s16, 0
    %p58 = por %p56, %p57
    %p59 = scmp.ne.s32.totalorder %s47, %s48
    %p60 = scmp.eq.s32.totalorder %s17, 3
    %p61 = por %p59, %p60
    %p63 = scmp.ne.s32.totalorder %s48, %s62
    %p64 = scmp.eq.s32.totalorder %s17, 0
    %p65 = por %p63, %p64
    %s67 = sadd.s32 %s66, 1
    %p70 = scmp.eq.s32.totalorder %s11, 3
    %p71 = scmp.ne.s32.totalorder %s66, %s68
    %p72 = scmp.eq.s32.totalorder %s11, 0
    %p73 = por %p71, %p72
    %p74 = scmp.ne.s32.totalorder %s66, %s68
    %p75 = scmp.eq.s32.totalorder %s16, 3
    %p76 = por %p74, %p75
    %p77 = scmp.ne.s32.totalorder %s68, %s69
    %p78 = scmp.eq.s32.totalorder %s16, 0
    %p79 = por %p77, %p78
    %p80 = scmp.ne.s32.totalorder %s68, %s69
    %p81 = scmp.eq.s32.totalorder %s17, 3
    %p82 = por %p80, %p81
    %p84 = scmp.ne.s32.totalorder %s69, %s83
    %p85 = scmp.eq.s32.totalorder %s17, 0
    %p86 = por %p84, %p85
    %s88 = sadd.s32 %s87, 1
    %p91 = scmp.eq.s32.totalorder %s11, 3
    %p92 = scmp.ne.s32.totalorder %s87, %s89
    %p93 = scmp.eq.s32.totalorder %s11, 0
    %p94 = por %p92, %p93
    %p95 = scmp.ne.s32.totalorder %s87, %s89
    %p96 = scmp.eq.s32.totalorder %s16, 3
    %p97 = por %p95, %p96
    %p98 = scmp.ne.s32.totalorder %s89, %s90
    %p99 = scmp.eq.s32.totalorder %s16, 0
    %p100 = por %p98, %p99
    %p101 = scmp.ne.s32.totalorder %s89, %s90
    %p102 = scmp.eq.s32.totalorder %s17, 3
    %p103 = por %p101, %p102
    %p105 = scmp.ne.s32.totalorder %s90, %s104
    %p106 = scmp.eq.s32.totalorder %s17, 0
    %p107 = por %p105, %p106
    %s109 = sadd.s32 %s108, 1
    %p112 = scmp.eq.s32.totalorder %s11, 3
    %p113 = scmp.ne.s32.totalorder %s108, %s110
    %p114 = scmp.eq.s32.totalorder %s11, 0
    %p115 = por %p113, %p114
    %p116 = scmp.ne.s32.totalorder %s108, %s110
    %p117 = scmp.eq.s32.totalorder %s16, 3
    %p118 = por %p116, %p117
    %p119 = scmp.ne.s32.totalorder %s110, %s111
    %p120 = scmp.eq.s32.totalorder %s16, 0
    %p121 = por %p119, %p120
    %p122 = scmp.ne.s32.totalorder %s110, %s111
    %p123 = scmp.eq.s32.totalorder %s17, 3
    %p124 = por %p122, %p123
    %p126 = scmp.ne.s32.totalorder %s111, %s125
    %p127 = scmp.eq.s32.totalorder %s17, 0
    %p128 = por %p126, %p127
    %s129 = ssub.s32 %s11, %s18
    %p130 = scmp.eq.s32.totalorder %s129, 0
    %s132 = sadd.s32 %s131, 1
    %s133 = scalar_select %p130, %s131, %s132
    %p136 = pneg %p130
    %p137 = scmp.eq.s32.totalorder %s11, 3
    %p138 = por %p136, %p137
    %p139 = scmp.ne.s32.totalorder %s131, %s134
    %p140 = scmp.eq.s32.totalorder %s11, 0
    %p141 = por %p139, %p140
    %p142 = scmp.ne.s32.totalorder %s131, %s134
    %p143 = scmp.eq.s32.totalorder %s16, 3
    %p144 = por %p142, %p143
    %p145 = scmp.ne.s32.totalorder %s134, %s135
    %p146 = scmp.eq.s32.totalorder %s16, 0
    %p147 = por %p145, %p146
    %p148 = scmp.ne.s32.totalorder %s134, %s135
    %p149 = scmp.eq.s32.totalorder %s17, 3
    %p150 = por %p148, %p149
    %p152 = scmp.ne.s32.totalorder %s135, %s151
    %p153 = scmp.eq.s32.totalorder %s17, 0
    %p154 = por %p152, %p153
    %p155 = scmp.le.s32.totalorder 1, %s11
    %p156 = scmp.lt.s32.totalorder %s11, 5
    %p157 = pnand %p155, %p156
    %p158 = pneg %p157
    // Predicated region
    $region9: #{generator_forward.12} parent=5 // pred_check
      _
    $region10: #{generator_forward.12} parent=5 // pred_check_branch
      %160 = sbr.rel (%p157) target = $region12
    $region11: #{generator_forward.12} parent=5 // pred_region
      %s161 = ssub.s32 %s11, 1
      // Predicated region
      $region13: #{generator_forward.12} parent=11 // pred_check
        %p162 = pneg %p58
      $region14: #{generator_forward.12} parent=11 // pred_check_branch
        %164 = sbr.rel (%p162) target = $region16
      $region15: #{generator_forward.12} parent=11 // pred_region
        _
      $region16: #{generator_forward.12} parent=11 // pred_fallthru
        _
      // Predicated region
      $region17: #{generator_forward.12} parent=11 // pred_check
        %p165 = pneg %p79
      $region18: #{generator_forward.12} parent=11 // pred_check_branch
        %167 = sbr.rel (%p165) target = $region20
      $region19: #{generator_forward.12} parent=11 // pred_region
        _
      $region20: #{generator_forward.12} parent=11 // pred_fallthru
        _
      // Predicated region
      $region21: #{generator_forward.12} parent=11 // pred_check
        %p168 = pneg %p100
      $region22: #{generator_forward.12} parent=11 // pred_check_branch
        %170 = sbr.rel (%p168) target = $region24
      $region23: #{generator_forward.12} parent=11 // pred_region
        _
      $region24: #{generator_forward.12} parent=11 // pred_fallthru
        _
      // Predicated region
      $region25: #{generator_forward.12} parent=11 // pred_check
        %p171 = pneg %p121
      $region26: #{generator_forward.12} parent=11 // pred_check_branch
        %173 = sbr.rel (%p171) target = $region28
      $region27: #{generator_forward.12} parent=11 // pred_region
        _
      $region28: #{generator_forward.12} parent=11 // pred_fallthru
        _
    $region12: #{generator_forward.12} parent=5 // pred_fallthru
      _
    %p174 = scmp.lt.s32.totalorder %s11, 4
    // Predicated region
    $region29: #{generator_forward.12} parent=5 // pred_check
      %p175 = pneg %p174
    $region30: #{generator_forward.12} parent=5 // pred_check_branch
      %177 = sbr.rel (%p175) target = $region32
    $region31: #{generator_forward.12} parent=5 // pred_region
      // Predicated region
      $region33: #{generator_forward.12} parent=31 // pred_check
        %p178 = pneg %p31
      $region34: #{generator_forward.12} parent=31 // pred_check_branch
        %180 = sbr.rel (%p178) target = $region36
      $region35: #{generator_forward.12} parent=31 // pred_region
        %s181 = smul.u32 4, %s11
        %p182 = scmp.lt.s32.totalorder %s181, 15
        %s183 = scalar_select %p182, %s181, 15
        %s184 = smul.addr %s183, 8
        %s185 = scalar_lea.vmem %s0, %s184
        %s186 = smul.u32 4, %s11
      $region36: #{generator_forward.12} parent=31 // pred_fallthru
        _
    $region32: #{generator_forward.12} parent=5 // pred_fallthru
      _
    %p187 = scmp.le.s32.totalorder 1, %s11
    %p188 = scmp.lt.s32.totalorder %s11, 5
    %p189 = pnand %p187, %p188
    %p190 = pneg %p189
    // Predicated region
    $region37: #{generator_forward.12} parent=5 // pred_check
      _
    $region38: #{generator_forward.12} parent=5 // pred_check_branch
      %192 = sbr.rel (%p189) target = $region40
    $region39: #{generator_forward.12} parent=5 // pred_region
      %s193 = ssub.s32 %s11, 1
      %s194 = smul.u32 4, %s16
      %p195 = scmp.lt.s32.totalorder %s194, 15
      %s196 = scalar_select %p195, %s194, 15
      %s197 = smul.addr %s196, 8
      %s198 = scalar_lea.vmem %s0, %s197
      %p199 = pneg %p37
      %p200 = pneg %p34
      %p201 = pneg %p58
      %p202 = pneg %p55
      %p203 = pneg %p79
      %p204 = pneg %p76
      %p205 = pneg %p100
      %p206 = pneg %p97
      %p207 = pneg %p121
      %p208 = pneg %p118
      %p209 = pneg %p147
      %p210 = pneg %p144
      %s211 = smul.u32 4, %s16
      %p212 = scmp.lt.s32.totalorder %s211, 15
      %s213 = scalar_select %p212, %s211, 15
      %s214 = smul.addr %s213, 8
      %s215 = scalar_lea.vmem %s5, %s214
      %s216 = smul.u32 4, %s16
      %p217 = scmp.lt.s32.totalorder %s216, 15
      %s218 = scalar_select %p217, %s216, 15
      %s219 = smul.addr %s218, 8
      %s220 = scalar_lea.vmem %s0, %s219
      %s221 = smul.u32 4, %s16
      %s222 = smul.u32 4, %s16
      %p223 = scmp.lt.s32.totalorder %s222, 15
      %s224 = scalar_select %p223, %s222, 15
      %s225 = smul.addr %s224, 8
      %s226 = scalar_lea.vmem %s5, %s225
      %s227 = smul.u32 4, %s16
      %v228 = vld [vmem:[%s1] sm:$0x1]
      %v229 = vmul.f32 %v228, 0.0078125
      %v230 = vld [vmem:[%s2] sm:$0x1]
      %v231 = vmul.f32 %v230, 0.0078125
      %v232 = vmul.f32 %v229, %v229
      %v233 = vsub.f32 %v231, %v232
      %v234 = vmax.f32 %v233, 0.0
      %v235 = vld [vmem:[%s3] sm:$0x1]
      %v236 = vadd.f32 %v234, 1e-05
      %v237 = vrsqrt.pop %v236
      %v238 = vmul.f32 %v235, %v237
      %v239 = vld [vmem:[%s4] sm:$0x1]
      %v240 = vmul.f32 %v229, %v238
      %v241 = vsub.f32 %v239, %v240
      %v242 = vld [vmem:[%s220] sm:$0xff]
      %v243 = vld [vmem:[%s220 + $0x8] sm:$0xff]
      %v244 = vld [vmem:[%s220 + $0x10] sm:$0xff]
      %v245 = vld [vmem:[%s220 + $0x18] sm:$0xff]
      %v247 = vlaneseq
      %v248 = vshrl.u32 %v247, 7
      %v249 = vsub.s32 0, %v248
      %v250 = vrot.slane %v238, %v249
      %v252 = vmul.f32 %v242, %v250
      %v253 = vmul.f32 %v243, %v250
      %v254 = vmul.f32 %v244, %v250
      %v255 = vmul.f32 %v245, %v250
      %v257 = vlaneseq
      %v258 = vshrl.u32 %v257, 7
      %v259 = vsub.s32 0, %v258
      %v260 = vrot.slane %v241, %v259
      %v262 = vadd.f32 %v252, %v260
      %v263 = vadd.f32 %v253, %v260
      %v264 = vadd.f32 %v254, %v260
      %v265 = vadd.f32 %v255, %v260
      %v266 = vmax.f32 %v262, 0.0
      %v267 = vmax.f32 %v263, 0.0
      %v268 = vmax.f32 %v264, 0.0
      %v269 = vmax.f32 %v265, 0.0
      %270 = vst [vmem:[%s226] sm:$0xff] %v266
      %271 = vst [vmem:[%s226 + $0x8] sm:$0xff] %v267
      %272 = vst [vmem:[%s226 + $0x10] sm:$0xff] %v268
      %273 = vst [vmem:[%s226 + $0x18] sm:$0xff] %v269
      %s274 = smul.u32 4, %s16
      %p275 = scmp.lt.s32.totalorder %s274, 15
      %s276 = scalar_select %p275, %s274, 15
      %s277 = smul.addr %s276, 8
      %s278 = scalar_lea.vmem %s5, %s277
      // Predicated region
      $region41: #{generator_forward.12} parent=39 // pred_check
        %p279 = pneg %p144
      $region42: #{generator_forward.12} parent=39 // pred_check_branch
        %281 = sbr.rel (%p279) target = $region44
      $region43: #{generator_forward.12} parent=39 // pred_region
        %s282 = smul.u32 4, %s16
      $region44: #{generator_forward.12} parent=39 // pred_fallthru
        _
    $region40: #{generator_forward.12} parent=5 // pred_fallthru
      _
    %p283 = scmp.le.s32.totalorder 2, %s11
    // Predicated region
    $region45: #{generator_forward.12} parent=5 // pred_check
      %p284 = pneg %p283
    $region46: #{generator_forward.12} parent=5 // pred_check_branch
      %286 = sbr.rel (%p284) target = $region48
    $region47: #{generator_forward.12} parent=5 // pred_region
      %s287 = ssub.s32 %s11, 2
      // Predicated region
      $region49: #{generator_forward.12} parent=47 // pred_check
        %p288 = pneg %p150
      $region50: #{generator_forward.12} parent=47 // pred_check_branch
        %290 = sbr.rel (%p288) target = $region52
      $region51: #{generator_forward.12} parent=47 // pred_region
        %s291 = smul.u32 4, %s17
        %p292 = scmp.lt.s32.totalorder %s291, 15
        %s293 = scalar_select %p292, %s291, 15
        %s294 = smul.addr %s293, 8
        %s295 = scalar_lea.vmem %s5, %s294
      $region52: #{generator_forward.12} parent=47 // pred_fallthru
        _
    $region48: #{generator_forward.12} parent=5 // pred_fallthru
      _
  $region6: #{generator_forward.12} parent=0 // loop_footer
    %s15 = sadd.s32 1, %s11
  $region7: #{generator_forward.12} parent=0 // loop_footer_branch
    %10 = sbr.rel target = $region3
  $region8: #{generator_forward.12} parent=0 // loop_exit
    _

// kernel: generator_forward.11
$region0: #{generator_forward.11}
  #allocation0 [shape = 'u32[]', space=smem, size = 0x4, offset = 0x4, fixed_abs, tag = 'smem constant byte address 0x4 - core index']
  #allocation1 [shape = 'u32[144,128]{1,0:T(1,128)}', space=vmem, size = 0x12000, scoped, tag = 'internal scratch']
  %s0 = inlined_call_operand.vmem [shape: bf16[4,32,128], index: 0, kind: input, shape index: {}]
  %s1 = inlined_call_operand.vmem [shape: bf16[4,128,128], index: 1, kind: input, shape index: {}]
  %s2 = inlined_call_operand.vmem [shape: f32[4,32,128], index: 2, kind: output, shape index: {0}]
  %s3 = inlined_call_operand.vmem [shape: f32[1,128], index: 3, kind: output, shape index: {1}]
  %s4 = inlined_call_operand.vmem [shape: f32[1,128], index: 4, kind: output, shape index: {2}]
  %5 = xla_tuple %s2, %s3, %s4
  %s6 = sld [smem:[#allocation0]]
  $region61: #{generator_forward.11} parent=0
    _
  %s8 = ssub.s32 1, %s6
  %s9 = scalar_select 0, %s8, %s6
  loop: start=0, step=1, limit=6
  $region2: #{generator_forward.11} parent=0 // loop_pre_header
    _
  $region3: #{generator_forward.11} parent=0 // loop_header
    %s11 = sphi 0, %s15
    %p12 = scmp.ge.s32.totalorder %s11, 6
    %s18 = sphi 0, %s30
    %s19 = sphi 0, %s26
    %s20 = sphi 0, %s18
    %s21 = sphi 0, %s19
    %s22 = sphi 0, %s20
    %s23 = sphi 0, %s21
    %s35 = sphi 0, %s37
    %s38 = sphi 0, %s35
    %s39 = sphi 0, %s38
    %s55 = sphi 0, %s39
    %s61 = sphi 0, %s63
    %s64 = sphi 0, %s61
    %s65 = sphi 0, %s64
    %s81 = sphi 0, %s65
    %s89 = sphi 0, %s91
    %s92 = sphi 0, %s89
    %s93 = sphi 0, %s92
    %s109 = sphi 0, %s93
    %s113 = sphi 0, %s113
    %s115 = sphi 0, %s113
    %s116 = sphi 0, %s115
    %s130 = sphi 0, %s116
    %s134 = sphi 0, %s134
    %s136 = sphi 0, %s134
    %s137 = sphi 0, %s136
    %s151 = sphi 0, %s137
  $region4: #{generator_forward.11} parent=0 // loop_header_branch
    %14 = sbr.rel (%p12) target = $region8
  $region5: #{generator_forward.11} parent=0 // loop_body
    %s16 = ssub.s32 %s11, 1
    %s17 = ssub.s32 %s11, 2
    %s24 = sadd.s32 1, %s19
    %p25 = scmp.ge.s32.totalorder %s24, 1
    %s26 = scalar_select %p25, 0, %s24
    %s27 = sadd.s32 1, %s18
    %s28 = scalar_select %p25, %s27, %s18
    %p29 = scmp.ge.s32.totalorder %s28, 4
    %s30 = scalar_select %p29, 0, %s28
    %s31 = ssub.s32 %s18, %s30
    %s32 = ssub.s32 %s19, %s26
    %s33 = sor.u32 %s31, %s32
    %p34 = scmp.eq.s32.totalorder %s33, 0
    %s36 = sadd.s32 %s35, 1
    %s37 = scalar_select %p34, %s35, %s36
    %p40 = pneg %p34
    %p41 = scmp.eq.s32.totalorder %s11, 3
    %p42 = por %p40, %p41
    %p43 = scmp.ne.s32.totalorder %s35, %s38
    %p44 = scmp.eq.s32.totalorder %s11, 0
    %p45 = por %p43, %p44
    %p46 = scmp.ne.s32.totalorder %s35, %s38
    %p47 = scmp.eq.s32.totalorder %s16, 3
    %p48 = por %p46, %p47
    %p49 = scmp.ne.s32.totalorder %s38, %s39
    %p50 = scmp.eq.s32.totalorder %s16, 0
    %p51 = por %p49, %p50
    %p52 = scmp.ne.s32.totalorder %s38, %s39
    %p53 = scmp.eq.s32.totalorder %s17, 3
    %p54 = por %p52, %p53
    %p56 = scmp.ne.s32.totalorder %s39, %s55
    %p57 = scmp.eq.s32.totalorder %s17, 0
    %p58 = por %p56, %p57
    %s59 = ssub.s32 %s18, %s30
    %p60 = scmp.eq.s32.totalorder %s59, 0
    %s62 = sadd.s32 %s61, 1
    %s63 = scalar_select %p60, %s61, %s62
    %p66 = pneg %p60
    %p67 = scmp.eq.s32.totalorder %s11, 3
    %p68 = por %p66, %p67
    %p69 = scmp.ne.s32.totalorder %s61, %s64
    %p70 = scmp.eq.s32.totalorder %s11, 0
    %p71 = por %p69, %p70
    %p72 = scmp.ne.s32.totalorder %s61, %s64
    %p73 = scmp.eq.s32.totalorder %s16, 3
    %p74 = por %p72, %p73
    %p75 = scmp.ne.s32.totalorder %s64, %s65
    %p76 = scmp.eq.s32.totalorder %s16, 0
    %p77 = por %p75, %p76
    %p78 = scmp.ne.s32.totalorder %s64, %s65
    %p79 = scmp.eq.s32.totalorder %s17, 3
    %p80 = por %p78, %p79
    %p82 = scmp.ne.s32.totalorder %s65, %s81
    %p83 = scmp.eq.s32.totalorder %s17, 0
    %p84 = por %p82, %p83
    %s85 = ssub.s32 %s18, %s30
    %s86 = ssub.s32 %s19, %s26
    %s87 = sor.u32 %s85, %s86
    %p88 = scmp.eq.s32.totalorder %s87, 0
    %s90 = sadd.s32 %s89, 1
    %s91 = scalar_select %p88, %s89, %s90
    %p94 = pneg %p88
    %p95 = scmp.eq.s32.totalorder %s11, 3
    %p96 = por %p94, %p95
    %p97 = scmp.ne.s32.totalorder %s89, %s92
    %p98 = scmp.eq.s32.totalorder %s11, 0
    %p99 = por %p97, %p98
    %p100 = scmp.ne.s32.totalorder %s89, %s92
    %p101 = scmp.eq.s32.totalorder %s16, 3
    %p102 = por %p100, %p101
    %p103 = scmp.ne.s32.totalorder %s92, %s93
    %p104 = scmp.eq.s32.totalorder %s16, 0
    %p105 = por %p103, %p104
    %p106 = scmp.ne.s32.totalorder %s92, %s93
    %p107 = scmp.eq.s32.totalorder %s17, 3
    %p108 = por %p106, %p107
    %p110 = scmp.ne.s32.totalorder %s93, %s109
    %p111 = scmp.eq.s32.totalorder %s17, 0
    %p112 = por %p110, %p111
    %s114 = sadd.s32 %s113, 1
    %p117 = scmp.eq.s32.totalorder %s11, 3
    %p118 = scmp.ne.s32.totalorder %s113, %s115
    %p119 = scmp.eq.s32.totalorder %s11, 0
    %p120 = por %p118, %p119
    %p121 = scmp.ne.s32.totalorder %s113, %s115
    %p122 = scmp.eq.s32.totalorder %s16, 3
    %p123 = por %p121, %p122
    %p124 = scmp.ne.s32.totalorder %s115, %s116
    %p125 = scmp.eq.s32.totalorder %s16, 0
    %p126 = por %p124, %p125
    %p127 = scmp.ne.s32.totalorder %s115, %s116
    %p128 = scmp.eq.s32.totalorder %s17, 3
    %p129 = por %p127, %p128
    %p131 = scmp.ne.s32.totalorder %s116, %s130
    %p132 = scmp.eq.s32.totalorder %s17, 0
    %p133 = por %p131, %p132
    %s135 = sadd.s32 %s134, 1
    %p138 = scmp.eq.s32.totalorder %s11, 3
    %p139 = scmp.ne.s32.totalorder %s134, %s136
    %p140 = scmp.eq.s32.totalorder %s11, 0
    %p141 = por %p139, %p140
    %p142 = scmp.ne.s32.totalorder %s134, %s136
    %p143 = scmp.eq.s32.totalorder %s16, 3
    %p144 = por %p142, %p143
    %p145 = scmp.ne.s32.totalorder %s136, %s137
    %p146 = scmp.eq.s32.totalorder %s16, 0
    %p147 = por %p145, %p146
    %p148 = scmp.ne.s32.totalorder %s136, %s137
    %p149 = scmp.eq.s32.totalorder %s17, 3
    %p150 = por %p148, %p149
    %p152 = scmp.ne.s32.totalorder %s137, %s151
    %p153 = scmp.eq.s32.totalorder %s17, 0
    %p154 = por %p152, %p153
    %p155 = scmp.le.s32.totalorder 1, %s11
    %p156 = scmp.lt.s32.totalorder %s11, 5
    %p157 = pnand %p155, %p156
    %p158 = pneg %p157
    // Predicated region
    $region9: #{generator_forward.11} parent=5 // pred_check
      _
    $region10: #{generator_forward.11} parent=5 // pred_check_branch
      %160 = sbr.rel (%p157) target = $region12
    $region11: #{generator_forward.11} parent=5 // pred_region
      %s161 = ssub.s32 %s11, 1
    $region12: #{generator_forward.11} parent=5 // pred_fallthru
      _
    %p162 = scmp.lt.s32.totalorder %s11, 4
    // Predicated region
    $region13: #{generator_forward.11} parent=5 // pred_check
      %p163 = pneg %p162
    $region14: #{generator_forward.11} parent=5 // pred_check_branch
      %165 = sbr.rel (%p163) target = $region16
    $region15: #{generator_forward.11} parent=5 // pred_region
      // Predicated region
      $region17: #{generator_forward.11} parent=15 // pred_check
        %p166 = pneg %p45
      $region18: #{generator_forward.11} parent=15 // pred_check_branch
        %168 = sbr.rel (%p166) target = $region20
      $region19: #{generator_forward.11} parent=15 // pred_region
        %s169 = smul.u32 4, %s19
        %p170 = scmp.lt.s32.totalorder %s18, 3
        %s171 = scalar_select %p170, %s18, 3
        %p172 = scmp.lt.s32.totalorder %s169, 3
        %s173 = scalar_select %p172, %s169, 3
        %s174 = smul.addr %s171, 4
        %s175 = sadd.s32 %s173, %s174
        %s176 = smul.addr %s175, 4
        %s177 = scalar_lea.vmem %s0, %s176
        %s178 = smul.u32 4, %s19
      $region20: #{generator_forward.11} parent=15 // pred_fallthru
        _
      // Predicated region
      $region21: #{generator_forward.11} parent=15 // pred_check
        %p179 = pneg %p71
      $region22: #{generator_forward.11} parent=15 // pred_check_branch
        %181 = sbr.rel (%p179) target = $region24
      $region23: #{generator_forward.11} parent=15 // pred_region
        %p182 = scmp.lt.s32.totalorder %s18, 3
        %s183 = scalar_select %p182, %s18, 3
        %s184 = smul.addr %s183, 16
        %s185 = smul.addr %s184, 4
        %s186 = scalar_lea.vmem %s1, %s185
      $region24: #{generator_forward.11} parent=15 // pred_fallthru
        _
    $region16: #{generator_forward.11} parent=5 // pred_fallthru
      _
    %p187 = scmp.le.s32.totalorder 1, %s11
    %p188 = scmp.lt.s32.totalorder %s11, 5
    %p189 = pnand %p187, %p188
    %p190 = pneg %p189
    // Predicated region
    $region25: #{generator_forward.11} parent=5 // pred_check
      _
    $region26: #{generator_forward.11} parent=5 // pred_check_branch
      %192 = sbr.rel (%p189) target = $region28
    $region27: #{generator_forward.11} parent=5 // pred_region
      %s193 = ssub.s32 %s11, 1
      %s194 = smul.u32 4, %s21
      %p195 = scmp.lt.s32.totalorder %s20, 3
      %s196 = scalar_select %p195, %s20, 3
      %p197 = scmp.lt.s32.totalorder %s194, 3
      %s198 = scalar_select %p197, %s194, 3
      %s199 = smul.addr %s196, 4
      %s200 = sadd.s32 %s198, %s199
      %s201 = smul.addr %s200, 4
      %s202 = scalar_lea.vmem %s0, %s201
      %p203 = pneg %p51
      %p204 = pneg %p48
      %p205 = scmp.lt.s32.totalorder %s20, 3
      %s206 = scalar_select %p205, %s20, 3
      %s207 = smul.addr %s206, 16
      %s208 = smul.addr %s207, 4
      %s209 = scalar_lea.vmem %s1, %s208
      %p210 = pneg %p77
      %p211 = pneg %p74
      %p212 = pneg %p105
      %p213 = pneg %p102
      %s214 = smul.u32 4, %s21
      %p215 = scmp.lt.s32.totalorder %s20, 3
      %s216 = scalar_select %p215, %s20, 3
      %p217 = scmp.lt.s32.totalorder %s214, 3
      %s218 = scalar_select %p217, %s214, 3
      %s219 = smul.addr %s216, 4
      %s220 = sadd.s32 %s218, %s219
      %s221 = smul.addr %s220, 8
      %s222 = scalar_lea.vmem %s2, %s221
      %p223 = pneg %p126
      %p224 = pneg %p123
      %p225 = pneg %p147
      %p226 = pneg %p144
      %s227 = smul.u32 4, %s21
      %p228 = scmp.lt.s32.totalorder %s20, 3
      %s229 = scalar_select %p228, %s20, 3
      %p230 = scmp.lt.s32.totalorder %s227, 3
      %s231 = scalar_select %p230, %s227, 3
      %s232 = smul.addr %s229, 4
      %s233 = sadd.s32 %s231, %s232
      %s234 = smul.addr %s233, 4
      %s235 = scalar_lea.vmem %s0, %s234
      %s236 = smul.u32 4, %s21
      %p237 = scmp.lt.s32.totalorder %s20, 3
      %s238 = scalar_select %p237, %s20, 3
      %s239 = smul.addr %s238, 16
      %s240 = smul.addr %s239, 4
      %s241 = scalar_lea.vmem %s1, %s240
      %s242 = smul.u32 4, %s21
      %p243 = scmp.lt.s32.totalorder %s20, 3
      %s244 = scalar_select %p243, %s20, 3
      %p245 = scmp.lt.s32.totalorder %s242, 3
      %s246 = scalar_select %p245, %s242, 3
      %s247 = smul.addr %s244, 4
      %s248 = sadd.s32 %s246, %s247
      %s249 = smul.addr %s248, 8
      %s250 = scalar_lea.vmem %s2, %s249
      %s251 = smul.u32 4, %s21
      %p253 = scmp.eq.s32.totalorder %s20, 0
      %p254 = scmp.eq.s32.totalorder %s21, 0
      %p255 = pnand %p253, %p254
      %p256 = pneg %p255
      // Predicated region
      $region29: #{generator_forward.11} parent=27 // pred_check
        _
      $region30: #{generator_forward.11} parent=27 // pred_check_branch
        %258 = sbr.rel (%p255) target = $region32
      $region31: #{generator_forward.11} parent=27 // pred_region
        %259 = vst [vmem:[%s3] sm:$0x1] 0.0
        %260 = vst [vmem:[%s4] sm:$0x1] 0.0
      $region32: #{generator_forward.11} parent=27 // pred_fallthru
        _
      %v261 = vld [vmem:[%s235] sm:$0xf]
      %v262 = vld [vmem:[%s235 + $0x4] sm:$0xf]
      %v263 = vld [vmem:[%s235 + $0x8] sm:$0xf]
      %v264 = vld [vmem:[%s235 + $0xc] sm:$0xf]
      %v265 = vld [vmem:[%s241] sm:$0xf]
      %v266 = vld [vmem:[%s241 + $0x4] sm:$0xf]
      %v267 = vld [vmem:[%s241 + $0x8] sm:$0xf]
      %v268 = vld [vmem:[%s241 + $0xc] sm:$0xf]
      %v269 = vld [vmem:[%s241 + $0x10] sm:$0xf]
      %v270 = vld [vmem:[%s241 + $0x14] sm:$0xf]
      %v271 = vld [vmem:[%s241 + $0x18] sm:$0xf]
      %v272 = vld [vmem:[%s241 + $0x1c] sm:$0xf]
      %v273 = vld [vmem:[%s241 + $0x20] sm:$0xf]
      %v274 = vld [vmem:[%s241 + $0x24] sm:$0xf]
      %v275 = vld [vmem:[%s241 + $0x28] sm:$0xf]
      %v276 = vld [vmem:[%s241 + $0x2c] sm:$0xf]
      %v277 = vld [vmem:[%s241 + $0x30] sm:$0xf]
      %v278 = vld [vmem:[%s241 + $0x34] sm:$0xf]
      %v279 = vld [vmem:[%s241 + $0x38] sm:$0xf]
      %v280 = vld [vmem:[%s241 + $0x3c] sm:$0xf]
      %v285 = vunpack.c.l.b16 %v261
      %v286 = vunpack.c.l.b16 %v262
      %v287 = vunpack.c.l.b16 %v263
      %v288 = vunpack.c.l.b16 %v264
      %v289 = vpack.c.b16 %v286, %v285
      %v290 = vpack.c.b16 %v288, %v287
      %v309 = vunpack.c.l.b16 %v265
      %v310 = vunpack.c.l.b16 %v266
      %v311 = vunpack.c.l.b16 %v267
      %v312 = vunpack.c.l.b16 %v268
      %v313 = vunpack.c.l.b16 %v269
      %v314 = vunpack.c.l.b16 %v270
      %v315 = vunpack.c.l.b16 %v271
      %v316 = vunpack.c.l.b16 %v272
      %v317 = vunpack.c.l.b16 %v273
      %v318 = vunpack.c.l.b16 %v274
      %v319 = vunpack.c.l.b16 %v275
      %v320 = vunpack.c.l.b16 %v276
      %v321 = vunpack.c.l.b16 %v277
      %v322 = vunpack.c.l.b16 %v278
      %v323 = vunpack.c.l.b16 %v279
      %v324 = vunpack.c.l.b16 %v280
      %v325 = vpack.c.b16 %v310, %v309
      %v326 = vpack.c.b16 %v312, %v311
      %v327 = vpack.c.b16 %v314, %v313
      %v328 = vpack.c.b16 %v316, %v315
      %v329 = vpack.c.b16 %v318, %v317
      %v330 = vpack.c.b16 %v320, %v319
      %v331 = vpack.c.b16 %v322, %v321
      %v332 = vpack.c.b16 %v324, %v323
      %341 = vmatprep.subr.bf16.mxu0 0
      %342 = vmatpush1.bf16.msra.mxu0 %v325
      %343 = vmatprep.subr.bf16.mxu0 0
      %344 = vmatpush1.bf16.msra.mxu0 %v326
      %345 = vmatprep.subr.bf16.mxu0 0
      %346 = vmatpush1.bf16.msra.mxu0 %v327
      %347 = vmatprep.subr.bf16.mxu0 0
      %348 = vmatpush1.bf16.msra.mxu0 %v328
      %349 = vmatprep.subr.bf16.mxu0 0
      %350 = vmatpush1.bf16.msra.mxu0 %v329
      %351 = vmatprep.subr.bf16.mxu0 0
      %352 = vmatpush1.bf16.msra.mxu0 %v330
      %353 = vmatprep.subr.bf16.mxu0 0
      %354 = vmatpush1.bf16.msra.mxu0 %v331
      %355 = vmatprep.subr.bf16.mxu0 0
      %356 = vmatpush1.bf16.msra.mxu0 %v332
      %357 = vmatprep.subr.bf16.mxu0 0
      %358 = vmatpush1.bf16.msra.mxu0 0
      %359 = vmatprep.subr.bf16.mxu0 0
      %360 = vmatpush1.bf16.msra.mxu0 0
      %361 = vmatprep.subr.bf16.mxu0 0
      %362 = vmatpush1.bf16.msra.mxu0 0
      %363 = vmatprep.subr.bf16.mxu0 0
      %364 = vmatpush1.bf16.msra.mxu0 0
      %365 = vmatprep.subr.bf16.mxu0 0
      %366 = vmatpush1.bf16.msra.mxu0 0
      %367 = vmatprep.subr.bf16.mxu0 0
      %368 = vmatpush1.bf16.msra.mxu0 0
      %369 = vmatprep.subr.bf16.mxu0 0
      %370 = vmatpush1.bf16.msra.mxu0 0
      %371 = vmatprep.subr.bf16.mxu0 0
      %372 = vmatpush1.bf16.msra.mxu0 0
      %373 = vmatprep.mubr.bf16.mxu0 0
      %374 = vmatmul.mubr.bf16.gmra.mrb[0].mxu0 %v289
      %v375 = vpop.f32.mrb[0].mxu0
      %v376 = vadd.f32 0.0, %v375
      %v377 = vpop.f32.mrb[0].mxu0
      %v378 = vpop.f32.mrb[0].mxu0
      %v379 = vadd.f32 0.0, %v378
      %v380 = vpop.f32.mrb[0].mxu0
      %381 = vmatprep.mubr.bf16.mxu0 0
      %382 = vmatmul.mubr.bf16.gmra.mrb[0].mxu0 %v290
      %v383 = vpop.f32.mrb[0].mxu0
      %v384 = vadd.f32 0.0, %v383
      %v385 = vpop.f32.mrb[0].mxu0
      %v386 = vpop.f32.mrb[0].mxu0
      %v387 = vadd.f32 0.0, %v386
      %v388 = vpop.f32.mrb[0].mxu0
      %389 = vdwg.mxu0
      %390 = vst [vmem:[%s250] sm:$0xff] %v376
      %391 = vst [vmem:[%s250 + $0x8] sm:$0xff] %v379
      %392 = vst [vmem:[%s250 + $0x10] sm:$0xff] %v384
      %393 = vst [vmem:[%s250 + $0x18] sm:$0xff] %v387
      %v394 = vld [vmem:[%s3] sm:$0x1]
      %v395 = vadd.f32 %v376, %v379
      %v396 = vadd.f32 %v395, %v384
      %v397 = vadd.f32 %v396, %v387
      %v398 = vrot.slane %v397, 4
      %v399 = vadd.f32 %v397, %v398
      %v400 = vrot.slane %v399, 2
      %v401 = vadd.f32 %v399, %v400
      %v402 = vrot.slane %v401, 1
      %v403 = vadd.f32 %v401, %v402
      %v404 = vadd.f32 %v394, %v403
      %405 = vst [vmem:[%s3] sm:$0x1] %v404
      %v406 = vld [vmem:[%s4] sm:$0x1]
      %v407 = vmul.f32 %v376, %v376
      %v408 = vmul.f32 %v379, %v379
      %v409 = vmul.f32 %v384, %v384
      %v410 = vmul.f32 %v387, %v387
      %v411 = vadd.f32 %v407, %v408
      %v412 = vadd.f32 %v411, %v409
      %v413 = vadd.f32 %v412, %v410
      %v414 = vrot.slane %v413, 4
      %v415 = vadd.f32 %v413, %v414
      %v416 = vrot.slane %v415, 2
      %v417 = vadd.f32 %v415, %v416
      %v418 = vrot.slane %v417, 1
      %v419 = vadd.f32 %v417, %v418
      %v420 = vadd.f32 %v406, %v419
      %421 = vst [vmem:[%s4] sm:$0x1] %v420
      %s422 = smul.u32 4, %s21
      %p423 = scmp.lt.s32.totalorder %s20, 3
      %s424 = scalar_select %p423, %s20, 3
      %p425 = scmp.lt.s32.totalorder %s422, 3
      %s426 = scalar_select %p425, %s422, 3
      %s427 = smul.addr %s424, 4
      %s428 = sadd.s32 %s426, %s427
      %s429 = smul.addr %s428, 8
      %s430 = scalar_lea.vmem %s2, %s429
      // Predicated region
      $region33: #{generator_forward.11} parent=27 // pred_check
        %p431 = pneg %p102
      $region34: #{generator_forward.11} parent=27 // pred_check_branch
        %433 = sbr.rel (%p431) target = $region36
      $region35: #{generator_forward.11} parent=27 // pred_region
        %s434 = smul.u32 4, %s21
      $region36: #{generator_forward.11} parent=27 // pred_fallthru
        _
      // Predicated region
      $region37: #{generator_forward.11} parent=27 // pred_check
        %p435 = pneg %p123
      $region38: #{generator_forward.11} parent=27 // pred_check_branch
        %437 = sbr.rel (%p435) target = $region40
      $region39: #{generator_forward.11} parent=27 // pred_region
        _
      $region40: #{generator_forward.11} parent=27 // pred_fallthru
        _
      // Predicated region
      $region41: #{generator_forward.11} parent=27 // pred_check
        %p438 = pneg %p144
      $region42: #{generator_forward.11} parent=27 // pred_check_branch
        %440 = sbr.rel (%p438) target = $region44
      $region43: #{generator_forward.11} parent=27 // pred_region
        _
      $region44: #{generator_forward.11} parent=27 // pred_fallthru
        _
      // Predicated region
      $region45: #{generator_forward.11} parent=27 // pred_check
        %p441 = pneg %p123
      $region46: #{generator_forward.11} parent=27 // pred_check_branch
        %443 = sbr.rel (%p441) target = $region48
      $region47: #{generator_forward.11} parent=27 // pred_region
        _
      $region48: #{generator_forward.11} parent=27 // pred_fallthru
        _
      // Predicated region
      $region49: #{generator_forward.11} parent=27 // pred_check
        %p444 = pneg %p144
      $region50: #{generator_forward.11} parent=27 // pred_check_branch
        %446 = sbr.rel (%p444) target = $region52
      $region51: #{generator_forward.11} parent=27 // pred_region
        _
      $region52: #{generator_forward.11} parent=27 // pred_fallthru
        _
    $region28: #{generator_forward.11} parent=5 // pred_fallthru
      _
    %p447 = scmp.le.s32.totalorder 2, %s11
    // Predicated region
    $region53: #{generator_forward.11} parent=5 // pred_check
      %p448 = pneg %p447
    $region54: #{generator_forward.11} parent=5 // pred_check_branch
      %450 = sbr.rel (%p448) target = $region56
    $region55: #{generator_forward.11} parent=5 // pred_region
      %s451 = ssub.s32 %s11, 2
      // Predicated region
      $region57: #{generator_forward.11} parent=55 // pred_check
        %p452 = pneg %p108
      $region58: #{generator_forward.11} parent=55 // pred_check_branch
        %454 = sbr.rel (%p452) target = $region60
      $region59: #{generator_forward.11} parent=55 // pred_region
        %s455 = smul.u32 4, %s23
        %p456 = scmp.lt.s32.totalorder %s22, 3
        %s457 = scalar_select %p456, %s22, 3
        %p458 = scmp.lt.s32.totalorder %s455, 3
        %s459 = scalar_select %p458, %s455, 3
        %s460 = smul.addr %s457, 4
        %s461 = sadd.s32 %s459, %s460
        %s462 = smul.addr %s461, 8
        %s463 = scalar_lea.vmem %s2, %s462
      $region60: #{generator_forward.11} parent=55 // pred_fallthru
        _
    $region56: #{generator_forward.11} parent=5 // pred_fallthru
      _
  $region6: #{generator_forward.11} parent=0 // loop_footer
    %s15 = sadd.s32 1, %s11
  $region7: #{generator_forward.11} parent=0 // loop_footer_branch
    %10 = sbr.rel target = $region3
  $region8: #{generator_forward.11} parent=0 // loop_exit
    _

// kernel: generator_forward.14
$region0: #{generator_forward.14}
  #allocation0 [shape = 'u32[]', space=smem, size = 0x4, offset = 0x4, fixed_abs, tag = 'smem constant byte address 0x4 - core index']
  #allocation1 [shape = 'u32[144,128]{1,0:T(1,128)}', space=vmem, size = 0x12000, scoped, tag = 'internal scratch']
  %s0 = inlined_call_operand.vmem [shape: f32[512,128], index: 0, kind: input, shape index: {}]
  %s1 = inlined_call_operand.vmem [shape: f32[1,128], index: 1, kind: input, shape index: {}]
  %s2 = inlined_call_operand.vmem [shape: f32[1,128], index: 2, kind: input, shape index: {}]
  %s3 = inlined_call_operand.vmem [shape: f32[1,128], index: 3, kind: input, shape index: {}]
  %s4 = inlined_call_operand.vmem [shape: f32[1,128], index: 4, kind: input, shape index: {}]
  %s5 = inlined_call_operand.vmem [shape: f32[512,128], index: 5, kind: output, shape index: {}]
  %s6 = sld [smem:[#allocation0]]
  $region53: #{generator_forward.14} parent=0
    _
  %s8 = ssub.s32 1, %s6
  %s9 = scalar_select 0, %s8, %s6
  loop: start=0, step=1, limit=6
  $region2: #{generator_forward.14} parent=0 // loop_pre_header
    _
  $region3: #{generator_forward.14} parent=0 // loop_header
    %s11 = sphi 0, %s15
    %p12 = scmp.ge.s32.totalorder %s11, 6
    %s21 = sphi 0, %s23
    %s24 = sphi 0, %s21
    %s25 = sphi 0, %s24
    %s41 = sphi 0, %s25
    %s45 = sphi 0, %s45
    %s47 = sphi 0, %s45
    %s48 = sphi 0, %s47
    %s62 = sphi 0, %s48
    %s66 = sphi 0, %s66
    %s68 = sphi 0, %s66
    %s69 = sphi 0, %s68
    %s83 = sphi 0, %s69
    %s87 = sphi 0, %s87
    %s89 = sphi 0, %s87
    %s90 = sphi 0, %s89
    %s104 = sphi 0, %s90
    %s108 = sphi 0, %s108
    %s110 = sphi 0, %s108
    %s111 = sphi 0, %s110
    %s125 = sphi 0, %s111
    %s131 = sphi 0, %s133
    %s134 = sphi 0, %s131
    %s135 = sphi 0, %s134
    %s151 = sphi 0, %s135
  $region4: #{generator_forward.14} parent=0 // loop_header_branch
    %14 = sbr.rel (%p12) target = $region8
  $region5: #{generator_forward.14} parent=0 // loop_body
    %s16 = ssub.s32 %s11, 1
    %s17 = ssub.s32 %s11, 2
    %s18 = sadd.s32 %s11, 1
    %s19 = ssub.s32 %s11, %s18
    %p20 = scmp.eq.s32.totalorder %s19, 0
    %s22 = sadd.s32 %s21, 1
    %s23 = scalar_select %p20, %s21, %s22
    %p26 = pneg %p20
    %p27 = scmp.eq.s32.totalorder %s11, 3
    %p28 = por %p26, %p27
    %p29 = scmp.ne.s32.totalorder %s21, %s24
    %p30 = scmp.eq.s32.totalorder %s11, 0
    %p31 = por %p29, %p30
    %p32 = scmp.ne.s32.totalorder %s21, %s24
    %p33 = scmp.eq.s32.totalorder %s16, 3
    %p34 = por %p32, %p33
    %p35 = scmp.ne.s32.totalorder %s24, %s25
    %p36 = scmp.eq.s32.totalorder %s16, 0
    %p37 = por %p35, %p36
    %p38 = scmp.ne.s32.totalorder %s24, %s25
    %p39 = scmp.eq.s32.totalorder %s17, 3
    %p40 = por %p38, %p39
    %p42 = scmp.ne.s32.totalorder %s25, %s41
    %p43 = scmp.eq.s32.totalorder %s17, 0
    %p44 = por %p42, %p43
    %s46 = sadd.s32 %s45, 1
    %p49 = scmp.eq.s32.totalorder %s11, 3
    %p50 = scmp.ne.s32.totalorder %s45, %s47
    %p51 = scmp.eq.s32.totalorder %s11, 0
    %p52 = por %p50, %p51
    %p53 = scmp.ne.s32.totalorder %s45, %s47
    %p54 = scmp.eq.s32.totalorder %s16, 3
    %p55 = por %p53, %p54
    %p56 = scmp.ne.s32.totalorder %s47, %s48
    %p57 = scmp.eq.s32.totalorder %s16, 0
    %p58 = por %p56, %p57
    %p59 = scmp.ne.s32.totalorder %s47, %s48
    %p60 = scmp.eq.s32.totalorder %s17, 3
    %p61 = por %p59, %p60
    %p63 = scmp.ne.s32.totalorder %s48, %s62
    %p64 = scmp.eq.s32.totalorder %s17, 0
    %p65 = por %p63, %p64
    %s67 = sadd.s32 %s66, 1
    %p70 = scmp.eq.s32.totalorder %s11, 3
    %p71 = scmp.ne.s32.totalorder %s66, %s68
    %p72 = scmp.eq.s32.totalorder %s11, 0
    %p73 = por %p71, %p72
    %p74 = scmp.ne.s32.totalorder %s66, %s68
    %p75 = scmp.eq.s32.totalorder %s16, 3
    %p76 = por %p74, %p75
    %p77 = scmp.ne.s32.totalorder %s68, %s69
    %p78 = scmp.eq.s32.totalorder %s16, 0
    %p79 = por %p77, %p78
    %p80 = scmp.ne.s32.totalorder %s68, %s69
    %p81 = scmp.eq.s32.totalorder %s17, 3
    %p82 = por %p80, %p81
    %p84 = scmp.ne.s32.totalorder %s69, %s83
    %p85 = scmp.eq.s32.totalorder %s17, 0
    %p86 = por %p84, %p85
    %s88 = sadd.s32 %s87, 1
    %p91 = scmp.eq.s32.totalorder %s11, 3
    %p92 = scmp.ne.s32.totalorder %s87, %s89
    %p93 = scmp.eq.s32.totalorder %s11, 0
    %p94 = por %p92, %p93
    %p95 = scmp.ne.s32.totalorder %s87, %s89
    %p96 = scmp.eq.s32.totalorder %s16, 3
    %p97 = por %p95, %p96
    %p98 = scmp.ne.s32.totalorder %s89, %s90
    %p99 = scmp.eq.s32.totalorder %s16, 0
    %p100 = por %p98, %p99
    %p101 = scmp.ne.s32.totalorder %s89, %s90
    %p102 = scmp.eq.s32.totalorder %s17, 3
    %p103 = por %p101, %p102
    %p105 = scmp.ne.s32.totalorder %s90, %s104
    %p106 = scmp.eq.s32.totalorder %s17, 0
    %p107 = por %p105, %p106
    %s109 = sadd.s32 %s108, 1
    %p112 = scmp.eq.s32.totalorder %s11, 3
    %p113 = scmp.ne.s32.totalorder %s108, %s110
    %p114 = scmp.eq.s32.totalorder %s11, 0
    %p115 = por %p113, %p114
    %p116 = scmp.ne.s32.totalorder %s108, %s110
    %p117 = scmp.eq.s32.totalorder %s16, 3
    %p118 = por %p116, %p117
    %p119 = scmp.ne.s32.totalorder %s110, %s111
    %p120 = scmp.eq.s32.totalorder %s16, 0
    %p121 = por %p119, %p120
    %p122 = scmp.ne.s32.totalorder %s110, %s111
    %p123 = scmp.eq.s32.totalorder %s17, 3
    %p124 = por %p122, %p123
    %p126 = scmp.ne.s32.totalorder %s111, %s125
    %p127 = scmp.eq.s32.totalorder %s17, 0
    %p128 = por %p126, %p127
    %s129 = ssub.s32 %s11, %s18
    %p130 = scmp.eq.s32.totalorder %s129, 0
    %s132 = sadd.s32 %s131, 1
    %s133 = scalar_select %p130, %s131, %s132
    %p136 = pneg %p130
    %p137 = scmp.eq.s32.totalorder %s11, 3
    %p138 = por %p136, %p137
    %p139 = scmp.ne.s32.totalorder %s131, %s134
    %p140 = scmp.eq.s32.totalorder %s11, 0
    %p141 = por %p139, %p140
    %p142 = scmp.ne.s32.totalorder %s131, %s134
    %p143 = scmp.eq.s32.totalorder %s16, 3
    %p144 = por %p142, %p143
    %p145 = scmp.ne.s32.totalorder %s134, %s135
    %p146 = scmp.eq.s32.totalorder %s16, 0
    %p147 = por %p145, %p146
    %p148 = scmp.ne.s32.totalorder %s134, %s135
    %p149 = scmp.eq.s32.totalorder %s17, 3
    %p150 = por %p148, %p149
    %p152 = scmp.ne.s32.totalorder %s135, %s151
    %p153 = scmp.eq.s32.totalorder %s17, 0
    %p154 = por %p152, %p153
    %p155 = scmp.le.s32.totalorder 1, %s11
    %p156 = scmp.lt.s32.totalorder %s11, 5
    %p157 = pnand %p155, %p156
    %p158 = pneg %p157
    // Predicated region
    $region9: #{generator_forward.14} parent=5 // pred_check
      _
    $region10: #{generator_forward.14} parent=5 // pred_check_branch
      %160 = sbr.rel (%p157) target = $region12
    $region11: #{generator_forward.14} parent=5 // pred_region
      %s161 = ssub.s32 %s11, 1
      // Predicated region
      $region13: #{generator_forward.14} parent=11 // pred_check
        %p162 = pneg %p58
      $region14: #{generator_forward.14} parent=11 // pred_check_branch
        %164 = sbr.rel (%p162) target = $region16
      $region15: #{generator_forward.14} parent=11 // pred_region
        _
      $region16: #{generator_forward.14} parent=11 // pred_fallthru
        _
      // Predicated region
      $region17: #{generator_forward.14} parent=11 // pred_check
        %p165 = pneg %p79
      $region18: #{generator_forward.14} parent=11 // pred_check_branch
        %167 = sbr.rel (%p165) target = $region20
      $region19: #{generator_forward.14} parent=11 // pred_region
        _
      $region20: #{generator_forward.14} parent=11 // pred_fallthru
        _
      // Predicated region
      $region21: #{generator_forward.14} parent=11 // pred_check
        %p168 = pneg %p100
      $region22: #{generator_forward.14} parent=11 // pred_check_branch
        %170 = sbr.rel (%p168) target = $region24
      $region23: #{generator_forward.14} parent=11 // pred_region
        _
      $region24: #{generator_forward.14} parent=11 // pred_fallthru
        _
      // Predicated region
      $region25: #{generator_forward.14} parent=11 // pred_check
        %p171 = pneg %p121
      $region26: #{generator_forward.14} parent=11 // pred_check_branch
        %173 = sbr.rel (%p171) target = $region28
      $region27: #{generator_forward.14} parent=11 // pred_region
        _
      $region28: #{generator_forward.14} parent=11 // pred_fallthru
        _
    $region12: #{generator_forward.14} parent=5 // pred_fallthru
      _
    %p174 = scmp.lt.s32.totalorder %s11, 4
    // Predicated region
    $region29: #{generator_forward.14} parent=5 // pred_check
      %p175 = pneg %p174
    $region30: #{generator_forward.14} parent=5 // pred_check_branch
      %177 = sbr.rel (%p175) target = $region32
    $region31: #{generator_forward.14} parent=5 // pred_region
      // Predicated region
      $region33: #{generator_forward.14} parent=31 // pred_check
        %p178 = pneg %p31
      $region34: #{generator_forward.14} parent=31 // pred_check_branch
        %180 = sbr.rel (%p178) target = $region36
      $region35: #{generator_forward.14} parent=31 // pred_region
        %s181 = smul.u32 16, %s11
        %p182 = scmp.lt.s32.totalorder %s181, 63
        %s183 = scalar_select %p182, %s181, 63
        %s184 = smul.addr %s183, 8
        %s185 = scalar_lea.vmem %s0, %s184
        %s186 = smul.u32 16, %s11
      $region36: #{generator_forward.14} parent=31 // pred_fallthru
        _
    $region32: #{generator_forward.14} parent=5 // pred_fallthru
      _
    %p187 = scmp.le.s32.totalorder 1, %s11
    %p188 = scmp.lt.s32.totalorder %s11, 5
    %p189 = pnand %p187, %p188
    %p190 = pneg %p189
    // Predicated region
    $region37: #{generator_forward.14} parent=5 // pred_check
      _
    $region38: #{generator_forward.14} parent=5 // pred_check_branch
      %192 = sbr.rel (%p189) target = $region40
    $region39: #{generator_forward.14} parent=5 // pred_region
      %s193 = ssub.s32 %s11, 1
      %s194 = smul.u32 16, %s16
      %p195 = scmp.lt.s32.totalorder %s194, 63
      %s196 = scalar_select %p195, %s194, 63
      %s197 = smul.addr %s196, 8
      %s198 = scalar_lea.vmem %s0, %s197
      %p199 = pneg %p37
      %p200 = pneg %p34
      %p201 = pneg %p58
      %p202 = pneg %p55
      %p203 = pneg %p79
      %p204 = pneg %p76
      %p205 = pneg %p100
      %p206 = pneg %p97
      %p207 = pneg %p121
      %p208 = pneg %p118
      %p209 = pneg %p147
      %p210 = pneg %p144
      %s211 = smul.u32 16, %s16
      %p212 = scmp.lt.s32.totalorder %s211, 63
      %s213 = scalar_select %p212, %s211, 63
      %s214 = smul.addr %s213, 8
      %s215 = scalar_lea.vmem %s5, %s214
      %s216 = smul.u32 16, %s16
      %p217 = scmp.lt.s32.totalorder %s216, 63
      %s218 = scalar_select %p217, %s216, 63
      %s219 = smul.addr %s218, 8
      %s220 = scalar_lea.vmem %s0, %s219
      %s221 = smul.u32 16, %s16
      %s222 = smul.u32 16, %s16
      %p223 = scmp.lt.s32.totalorder %s222, 63
      %s224 = scalar_select %p223, %s222, 63
      %s225 = smul.addr %s224, 8
      %s226 = scalar_lea.vmem %s5, %s225
      %s227 = smul.u32 16, %s16
      %v228 = vld [vmem:[%s1] sm:$0x1]
      %v229 = vmul.f32 %v228, 0.001953125
      %v230 = vld [vmem:[%s2] sm:$0x1]
      %v231 = vmul.f32 %v230, 0.001953125
      %v232 = vmul.f32 %v229, %v229
      %v233 = vsub.f32 %v231, %v232
      %v234 = vmax.f32 %v233, 0.0
      %v235 = vld [vmem:[%s3] sm:$0x1]
      %v236 = vadd.f32 %v234, 1e-05
      %v237 = vrsqrt.pop %v236
      %v238 = vmul.f32 %v235, %v237
      %v239 = vld [vmem:[%s4] sm:$0x1]
      %v240 = vmul.f32 %v229, %v238
      %v241 = vsub.f32 %v239, %v240
      %v242 = vld [vmem:[%s220] sm:$0xff]
      %v243 = vld [vmem:[%s220 + $0x8] sm:$0xff]
      %v244 = vld [vmem:[%s220 + $0x10] sm:$0xff]
      %v245 = vld [vmem:[%s220 + $0x18] sm:$0xff]
      %v246 = vld [vmem:[%s220 + $0x20] sm:$0xff]
      %v247 = vld [vmem:[%s220 + $0x28] sm:$0xff]
      %v248 = vld [vmem:[%s220 + $0x30] sm:$0xff]
      %v249 = vld [vmem:[%s220 + $0x38] sm:$0xff]
      %v250 = vld [vmem:[%s220 + $0x40] sm:$0xff]
      %v251 = vld [vmem:[%s220 + $0x48] sm:$0xff]
      %v252 = vld [vmem:[%s220 + $0x50] sm:$0xff]
      %v253 = vld [vmem:[%s220 + $0x58] sm:$0xff]
      %v254 = vld [vmem:[%s220 + $0x60] sm:$0xff]
      %v255 = vld [vmem:[%s220 + $0x68] sm:$0xff]
      %v256 = vld [vmem:[%s220 + $0x70] sm:$0xff]
      %v257 = vld [vmem:[%s220 + $0x78] sm:$0xff]
      %v259 = vlaneseq
      %v260 = vshrl.u32 %v259, 7
      %v261 = vsub.s32 0, %v260
      %v262 = vrot.slane %v238, %v261
      %v264 = vmul.f32 %v242, %v262
      %v265 = vmul.f32 %v243, %v262
      %v266 = vmul.f32 %v244, %v262
      %v267 = vmul.f32 %v245, %v262
      %v268 = vmul.f32 %v246, %v262
      %v269 = vmul.f32 %v247, %v262
      %v270 = vmul.f32 %v248, %v262
      %v271 = vmul.f32 %v249, %v262
      %v272 = vmul.f32 %v250, %v262
      %v273 = vmul.f32 %v251, %v262
      %v274 = vmul.f32 %v252, %v262
      %v275 = vmul.f32 %v253, %v262
      %v276 = vmul.f32 %v254, %v262
      %v277 = vmul.f32 %v255, %v262
      %v278 = vmul.f32 %v256, %v262
      %v279 = vmul.f32 %v257, %v262
      %v281 = vlaneseq
      %v282 = vshrl.u32 %v281, 7
      %v283 = vsub.s32 0, %v282
      %v284 = vrot.slane %v241, %v283
      %v286 = vadd.f32 %v264, %v284
      %v287 = vadd.f32 %v265, %v284
      %v288 = vadd.f32 %v266, %v284
      %v289 = vadd.f32 %v267, %v284
      %v290 = vadd.f32 %v268, %v284
      %v291 = vadd.f32 %v269, %v284
      %v292 = vadd.f32 %v270, %v284
      %v293 = vadd.f32 %v271, %v284
      %v294 = vadd.f32 %v272, %v284
      %v295 = vadd.f32 %v273, %v284
      %v296 = vadd.f32 %v274, %v284
      %v297 = vadd.f32 %v275, %v284
      %v298 = vadd.f32 %v276, %v284
      %v299 = vadd.f32 %v277, %v284
      %v300 = vadd.f32 %v278, %v284
      %v301 = vadd.f32 %v279, %v284
      %v302 = vmax.f32 %v286, 0.0
      %v303 = vmax.f32 %v287, 0.0
      %v304 = vmax.f32 %v288, 0.0
      %v305 = vmax.f32 %v289, 0.0
      %v306 = vmax.f32 %v290, 0.0
      %v307 = vmax.f32 %v291, 0.0
      %v308 = vmax.f32 %v292, 0.0
      %v309 = vmax.f32 %v293, 0.0
      %v310 = vmax.f32 %v294, 0.0
      %v311 = vmax.f32 %v295, 0.0
      %v312 = vmax.f32 %v296, 0.0
      %v313 = vmax.f32 %v297, 0.0
      %v314 = vmax.f32 %v298, 0.0
      %v315 = vmax.f32 %v299, 0.0
      %v316 = vmax.f32 %v300, 0.0
      %v317 = vmax.f32 %v301, 0.0
      %318 = vst [vmem:[%s226] sm:$0xff] %v302
      %319 = vst [vmem:[%s226 + $0x8] sm:$0xff] %v303
      %320 = vst [vmem:[%s226 + $0x10] sm:$0xff] %v304
      %321 = vst [vmem:[%s226 + $0x18] sm:$0xff] %v305
      %322 = vst [vmem:[%s226 + $0x20] sm:$0xff] %v306
      %323 = vst [vmem:[%s226 + $0x28] sm:$0xff] %v307
      %324 = vst [vmem:[%s226 + $0x30] sm:$0xff] %v308
      %325 = vst [vmem:[%s226 + $0x38] sm:$0xff] %v309
      %326 = vst [vmem:[%s226 + $0x40] sm:$0xff] %v310
      %327 = vst [vmem:[%s226 + $0x48] sm:$0xff] %v311
      %328 = vst [vmem:[%s226 + $0x50] sm:$0xff] %v312
      %329 = vst [vmem:[%s226 + $0x58] sm:$0xff] %v313
      %330 = vst [vmem:[%s226 + $0x60] sm:$0xff] %v314
      %331 = vst [vmem:[%s226 + $0x68] sm:$0xff] %v315
      %332 = vst [vmem:[%s226 + $0x70] sm:$0xff] %v316
      %333 = vst [vmem:[%s226 + $0x78] sm:$0xff] %v317
      %s334 = smul.u32 16, %s16
      %p335 = scmp.lt.s32.totalorder %s334, 63
      %s336 = scalar_select %p335, %s334, 63
      %s337 = smul.addr %s336, 8
      %s338 = scalar_lea.vmem %s5, %s337
      // Predicated region
      $region41: #{generator_forward.14} parent=39 // pred_check
        %p339 = pneg %p144
      $region42: #{generator_forward.14} parent=39 // pred_check_branch
        %341 = sbr.rel (%p339) target = $region44
      $region43: #{generator_forward.14} parent=39 // pred_region
        %s342 = smul.u32 16, %s16
      $region44: #{generator_forward.14} parent=39 // pred_fallthru
        _
    $region40: #{generator_forward.14} parent=5 // pred_fallthru
      _
    %p343 = scmp.le.s32.totalorder 2, %s11
    // Predicated region
    $region45: #{generator_forward.14} parent=5 // pred_check
      %p344 = pneg %p343
    $region46: #{generator_forward.14} parent=5 // pred_check_branch
      %346 = sbr.rel (%p344) target = $region48
    $region47: #{generator_forward.14} parent=5 // pred_region
      %s347 = ssub.s32 %s11, 2
      // Predicated region
      $region49: #{generator_forward.14} parent=47 // pred_check
        %p348 = pneg %p150
      $region50: #{generator_forward.14} parent=47 // pred_check_branch
        %350 = sbr.rel (%p348) target = $region52
      $region51: #{generator_forward.14} parent=47 // pred_region
        %s351 = smul.u32 16, %s17
        %p352 = scmp.lt.s32.totalorder %s351, 63
        %s353 = scalar_select %p352, %s351, 63
        %s354 = smul.addr %s353, 8
        %s355 = scalar_lea.vmem %s5, %s354
      $region52: #{generator_forward.14} parent=47 // pred_fallthru
        _
    $region48: #{generator_forward.14} parent=5 // pred_fallthru
      _
  $region6: #{generator_forward.14} parent=0 // loop_footer
    %s15 = sadd.s32 1, %s11
  $region7: #{generator_forward.14} parent=0 // loop_footer_branch
    %10 = sbr.rel target = $region3
  $region8: #{generator_forward.14} parent=0 // loop_exit
    _

// kernel: generator_forward.13
$region0: #{generator_forward.13}
  #allocation0 [shape = 'u32[]', space=smem, size = 0x4, offset = 0x4, fixed_abs, tag = 'smem constant byte address 0x4 - core index']
  #allocation1 [shape = 'u32[144,128]{1,0:T(1,128)}', space=vmem, size = 0x12000, scoped, tag = 'internal scratch']
  %s0 = inlined_call_operand.vmem [shape: bf16[4,128,64], index: 0, kind: input, shape index: {}]
  %s1 = inlined_call_operand.vmem [shape: bf16[4,64,128], index: 1, kind: input, shape index: {}]
  %s2 = inlined_call_operand.vmem [shape: f32[4,128,128], index: 2, kind: output, shape index: {0}]
  %s3 = inlined_call_operand.vmem [shape: f32[1,128], index: 3, kind: output, shape index: {1}]
  %s4 = inlined_call_operand.vmem [shape: f32[1,128], index: 4, kind: output, shape index: {2}]
  %5 = xla_tuple %s2, %s3, %s4
  %s6 = sld [smem:[#allocation0]]
  $region61: #{generator_forward.13} parent=0
    _
  %s8 = ssub.s32 1, %s6
  %s9 = scalar_select 0, %s8, %s6
  loop: start=0, step=1, limit=6
  $region2: #{generator_forward.13} parent=0 // loop_pre_header
    _
  $region3: #{generator_forward.13} parent=0 // loop_header
    %s11 = sphi 0, %s15
    %p12 = scmp.ge.s32.totalorder %s11, 6
    %s18 = sphi 0, %s30
    %s19 = sphi 0, %s26
    %s20 = sphi 0, %s18
    %s21 = sphi 0, %s19
    %s22 = sphi 0, %s20
    %s23 = sphi 0, %s21
    %s35 = sphi 0, %s37
    %s38 = sphi 0, %s35
    %s39 = sphi 0, %s38
    %s55 = sphi 0, %s39
    %s61 = sphi 0, %s63
    %s64 = sphi 0, %s61
    %s65 = sphi 0, %s64
    %s81 = sphi 0, %s65
    %s89 = sphi 0, %s91
    %s92 = sphi 0, %s89
    %s93 = sphi 0, %s92
    %s109 = sphi 0, %s93
    %s113 = sphi 0, %s113
    %s115 = sphi 0, %s113
    %s116 = sphi 0, %s115
    %s130 = sphi 0, %s116
    %s134 = sphi 0, %s134
    %s136 = sphi 0, %s134
    %s137 = sphi 0, %s136
    %s151 = sphi 0, %s137
  $region4: #{generator_forward.13} parent=0 // loop_header_branch
    %14 = sbr.rel (%p12) target = $region8
  $region5: #{generator_forward.13} parent=0 // loop_body
    %s16 = ssub.s32 %s11, 1
    %s17 = ssub.s32 %s11, 2
    %s24 = sadd.s32 1, %s19
    %p25 = scmp.ge.s32.totalorder %s24, 1
    %s26 = scalar_select %p25, 0, %s24
    %s27 = sadd.s32 1, %s18
    %s28 = scalar_select %p25, %s27, %s18
    %p29 = scmp.ge.s32.totalorder %s28, 4
    %s30 = scalar_select %p29, 0, %s28
    %s31 = ssub.s32 %s18, %s30
    %s32 = ssub.s32 %s19, %s26
    %s33 = sor.u32 %s31, %s32
    %p34 = scmp.eq.s32.totalorder %s33, 0
    %s36 = sadd.s32 %s35, 1
    %s37 = scalar_select %p34, %s35, %s36
    %p40 = pneg %p34
    %p41 = scmp.eq.s32.totalorder %s11, 3
    %p42 = por %p40, %p41
    %p43 = scmp.ne.s32.totalorder %s35, %s38
    %p44 = scmp.eq.s32.totalorder %s11, 0
    %p45 = por %p43, %p44
    %p46 = scmp.ne.s32.totalorder %s35, %s38
    %p47 = scmp.eq.s32.totalorder %s16, 3
    %p48 = por %p46, %p47
    %p49 = scmp.ne.s32.totalorder %s38, %s39
    %p50 = scmp.eq.s32.totalorder %s16, 0
    %p51 = por %p49, %p50
    %p52 = scmp.ne.s32.totalorder %s38, %s39
    %p53 = scmp.eq.s32.totalorder %s17, 3
    %p54 = por %p52, %p53
    %p56 = scmp.ne.s32.totalorder %s39, %s55
    %p57 = scmp.eq.s32.totalorder %s17, 0
    %p58 = por %p56, %p57
    %s59 = ssub.s32 %s18, %s30
    %p60 = scmp.eq.s32.totalorder %s59, 0
    %s62 = sadd.s32 %s61, 1
    %s63 = scalar_select %p60, %s61, %s62
    %p66 = pneg %p60
    %p67 = scmp.eq.s32.totalorder %s11, 3
    %p68 = por %p66, %p67
    %p69 = scmp.ne.s32.totalorder %s61, %s64
    %p70 = scmp.eq.s32.totalorder %s11, 0
    %p71 = por %p69, %p70
    %p72 = scmp.ne.s32.totalorder %s61, %s64
    %p73 = scmp.eq.s32.totalorder %s16, 3
    %p74 = por %p72, %p73
    %p75 = scmp.ne.s32.totalorder %s64, %s65
    %p76 = scmp.eq.s32.totalorder %s16, 0
    %p77 = por %p75, %p76
    %p78 = scmp.ne.s32.totalorder %s64, %s65
    %p79 = scmp.eq.s32.totalorder %s17, 3
    %p80 = por %p78, %p79
    %p82 = scmp.ne.s32.totalorder %s65, %s81
    %p83 = scmp.eq.s32.totalorder %s17, 0
    %p84 = por %p82, %p83
    %s85 = ssub.s32 %s18, %s30
    %s86 = ssub.s32 %s19, %s26
    %s87 = sor.u32 %s85, %s86
    %p88 = scmp.eq.s32.totalorder %s87, 0
    %s90 = sadd.s32 %s89, 1
    %s91 = scalar_select %p88, %s89, %s90
    %p94 = pneg %p88
    %p95 = scmp.eq.s32.totalorder %s11, 3
    %p96 = por %p94, %p95
    %p97 = scmp.ne.s32.totalorder %s89, %s92
    %p98 = scmp.eq.s32.totalorder %s11, 0
    %p99 = por %p97, %p98
    %p100 = scmp.ne.s32.totalorder %s89, %s92
    %p101 = scmp.eq.s32.totalorder %s16, 3
    %p102 = por %p100, %p101
    %p103 = scmp.ne.s32.totalorder %s92, %s93
    %p104 = scmp.eq.s32.totalorder %s16, 0
    %p105 = por %p103, %p104
    %p106 = scmp.ne.s32.totalorder %s92, %s93
    %p107 = scmp.eq.s32.totalorder %s17, 3
    %p108 = por %p106, %p107
    %p110 = scmp.ne.s32.totalorder %s93, %s109
    %p111 = scmp.eq.s32.totalorder %s17, 0
    %p112 = por %p110, %p111
    %s114 = sadd.s32 %s113, 1
    %p117 = scmp.eq.s32.totalorder %s11, 3
    %p118 = scmp.ne.s32.totalorder %s113, %s115
    %p119 = scmp.eq.s32.totalorder %s11, 0
    %p120 = por %p118, %p119
    %p121 = scmp.ne.s32.totalorder %s113, %s115
    %p122 = scmp.eq.s32.totalorder %s16, 3
    %p123 = por %p121, %p122
    %p124 = scmp.ne.s32.totalorder %s115, %s116
    %p125 = scmp.eq.s32.totalorder %s16, 0
    %p126 = por %p124, %p125
    %p127 = scmp.ne.s32.totalorder %s115, %s116
    %p128 = scmp.eq.s32.totalorder %s17, 3
    %p129 = por %p127, %p128
    %p131 = scmp.ne.s32.totalorder %s116, %s130
    %p132 = scmp.eq.s32.totalorder %s17, 0
    %p133 = por %p131, %p132
    %s135 = sadd.s32 %s134, 1
    %p138 = scmp.eq.s32.totalorder %s11, 3
    %p139 = scmp.ne.s32.totalorder %s134, %s136
    %p140 = scmp.eq.s32.totalorder %s11, 0
    %p141 = por %p139, %p140
    %p142 = scmp.ne.s32.totalorder %s134, %s136
    %p143 = scmp.eq.s32.totalorder %s16, 3
    %p144 = por %p142, %p143
    %p145 = scmp.ne.s32.totalorder %s136, %s137
    %p146 = scmp.eq.s32.totalorder %s16, 0
    %p147 = por %p145, %p146
    %p148 = scmp.ne.s32.totalorder %s136, %s137
    %p149 = scmp.eq.s32.totalorder %s17, 3
    %p150 = por %p148, %p149
    %p152 = scmp.ne.s32.totalorder %s137, %s151
    %p153 = scmp.eq.s32.totalorder %s17, 0
    %p154 = por %p152, %p153
    %p155 = scmp.le.s32.totalorder 1, %s11
    %p156 = scmp.lt.s32.totalorder %s11, 5
    %p157 = pnand %p155, %p156
    %p158 = pneg %p157
    // Predicated region
    $region9: #{generator_forward.13} parent=5 // pred_check
      _
    $region10: #{generator_forward.13} parent=5 // pred_check_branch
      %160 = sbr.rel (%p157) target = $region12
    $region11: #{generator_forward.13} parent=5 // pred_region
      %s161 = ssub.s32 %s11, 1
    $region12: #{generator_forward.13} parent=5 // pred_fallthru
      _
    %p162 = scmp.lt.s32.totalorder %s11, 4
    // Predicated region
    $region13: #{generator_forward.13} parent=5 // pred_check
      %p163 = pneg %p162
    $region14: #{generator_forward.13} parent=5 // pred_check_branch
      %165 = sbr.rel (%p163) target = $region16
    $region15: #{generator_forward.13} parent=5 // pred_region
      // Predicated region
      $region17: #{generator_forward.13} parent=15 // pred_check
        %p166 = pneg %p45
      $region18: #{generator_forward.13} parent=15 // pred_check_branch
        %168 = sbr.rel (%p166) target = $region20
      $region19: #{generator_forward.13} parent=15 // pred_region
        %s169 = smul.u32 16, %s19
        %p170 = scmp.lt.s32.totalorder %s18, 3
        %s171 = scalar_select %p170, %s18, 3
        %p172 = scmp.lt.s32.totalorder %s169, 15
        %s173 = scalar_select %p172, %s169, 15
        %s174 = smul.addr %s171, 16
        %s175 = sadd.s32 %s173, %s174
        %s176 = smul.addr %s175, 4
        %s177 = scalar_lea.vmem %s0, %s176
        %s178 = smul.u32 16, %s19
      $region20: #{generator_forward.13} parent=15 // pred_fallthru
        _
      // Predicated region
      $region21: #{generator_forward.13} parent=15 // pred_check
        %p179 = pneg %p71
      $region22: #{generator_forward.13} parent=15 // pred_check_branch
        %181 = sbr.rel (%p179) target = $region24
      $region23: #{generator_forward.13} parent=15 // pred_region
        %p182 = scmp.lt.s32.totalorder %s18, 3
        %s183 = scalar_select %p182, %s18, 3
        %s184 = smul.addr %s183, 8
        %s185 = smul.addr %s184, 4
        %s186 = scalar_lea.vmem %s1, %s185
      $region24: #{generator_forward.13} parent=15 // pred_fallthru
        _
    $region16: #{generator_forward.13} parent=5 // pred_fallthru
      _
    %p187 = scmp.le.s32.totalorder 1, %s11
    %p188 = scmp.lt.s32.totalorder %s11, 5
    %p189 = pnand %p187, %p188
    %p190 = pneg %p189
    // Predicated region
    $region25: #{generator_forward.13} parent=5 // pred_check
      _
    $region26: #{generator_forward.13} parent=5 // pred_check_branch
      %192 = sbr.rel (%p189) target = $region28
    $region27: #{generator_forward.13} parent=5 // pred_region
      %s193 = ssub.s32 %s11, 1
      %s194 = smul.u32 16, %s21
      %p195 = scmp.lt.s32.totalorder %s20, 3
      %s196 = scalar_select %p195, %s20, 3
      %p197 = scmp.lt.s32.totalorder %s194, 15
      %s198 = scalar_select %p197, %s194, 15
      %s199 = smul.addr %s196, 16
      %s200 = sadd.s32 %s198, %s199
      %s201 = smul.addr %s200, 4
      %s202 = scalar_lea.vmem %s0, %s201
      %p203 = pneg %p51
      %p204 = pneg %p48
      %p205 = scmp.lt.s32.totalorder %s20, 3
      %s206 = scalar_select %p205, %s20, 3
      %s207 = smul.addr %s206, 8
      %s208 = smul.addr %s207, 4
      %s209 = scalar_lea.vmem %s1, %s208
      %p210 = pneg %p77
      %p211 = pneg %p74
      %p212 = pneg %p105
      %p213 = pneg %p102
      %s214 = smul.u32 16, %s21
      %p215 = scmp.lt.s32.totalorder %s20, 3
      %s216 = scalar_select %p215, %s20, 3
      %p217 = scmp.lt.s32.totalorder %s214, 15
      %s218 = scalar_select %p217, %s214, 15
      %s219 = smul.addr %s216, 16
      %s220 = sadd.s32 %s218, %s219
      %s221 = smul.addr %s220, 8
      %s222 = scalar_lea.vmem %s2, %s221
      %p223 = pneg %p126
      %p224 = pneg %p123
      %p225 = pneg %p147
      %p226 = pneg %p144
      %s227 = smul.u32 16, %s21
      %p228 = scmp.lt.s32.totalorder %s20, 3
      %s229 = scalar_select %p228, %s20, 3
      %p230 = scmp.lt.s32.totalorder %s227, 15
      %s231 = scalar_select %p230, %s227, 15
      %s232 = smul.addr %s229, 16
      %s233 = sadd.s32 %s231, %s232
      %s234 = smul.addr %s233, 4
      %s235 = scalar_lea.vmem %s0, %s234
      %s236 = smul.u32 16, %s21
      %p237 = scmp.lt.s32.totalorder %s20, 3
      %s238 = scalar_select %p237, %s20, 3
      %s239 = smul.addr %s238, 8
      %s240 = smul.addr %s239, 4
      %s241 = scalar_lea.vmem %s1, %s240
      %s242 = smul.u32 16, %s21
      %p243 = scmp.lt.s32.totalorder %s20, 3
      %s244 = scalar_select %p243, %s20, 3
      %p245 = scmp.lt.s32.totalorder %s242, 15
      %s246 = scalar_select %p245, %s242, 15
      %s247 = smul.addr %s244, 16
      %s248 = sadd.s32 %s246, %s247
      %s249 = smul.addr %s248, 8
      %s250 = scalar_lea.vmem %s2, %s249
      %s251 = smul.u32 16, %s21
      %p253 = scmp.eq.s32.totalorder %s20, 0
      %p254 = scmp.eq.s32.totalorder %s21, 0
      %p255 = pnand %p253, %p254
      %p256 = pneg %p255
      // Predicated region
      $region29: #{generator_forward.13} parent=27 // pred_check
        _
      $region30: #{generator_forward.13} parent=27 // pred_check_branch
        %258 = sbr.rel (%p255) target = $region32
      $region31: #{generator_forward.13} parent=27 // pred_region
        %259 = vst [vmem:[%s3] sm:$0x1] 0.0
        %260 = vst [vmem:[%s4] sm:$0x1] 0.0
      $region32: #{generator_forward.13} parent=27 // pred_fallthru
        _
      %v261 = vld [vmem:[%s235] sm:$0xf]
      %v262 = vld [vmem:[%s235 + $0x4] sm:$0xf]
      %v263 = vld [vmem:[%s235 + $0x8] sm:$0xf]
      %v264 = vld [vmem:[%s235 + $0xc] sm:$0xf]
      %v265 = vld [vmem:[%s235 + $0x10] sm:$0xf]
      %v266 = vld [vmem:[%s235 + $0x14] sm:$0xf]
      %v267 = vld [vmem:[%s235 + $0x18] sm:$0xf]
      %v268 = vld [vmem:[%s235 + $0x1c] sm:$0xf]
      %v269 = vld [vmem:[%s235 + $0x20] sm:$0xf]
      %v270 = vld [vmem:[%s235 + $0x24] sm:$0xf]
      %v271 = vld [vmem:[%s235 + $0x28] sm:$0xf]
      %v272 = vld [vmem:[%s235 + $0x2c] sm:$0xf]
      %v273 = vld [vmem:[%s235 + $0x30] sm:$0xf]
      %v274 = vld [vmem:[%s235 + $0x34] sm:$0xf]
      %v275 = vld [vmem:[%s235 + $0x38] sm:$0xf]
      %v276 = vld [vmem:[%s235 + $0x3c] sm:$0xf]
      %v277 = vld [vmem:[%s241] sm:$0xf]
      %v278 = vld [vmem:[%s241 + $0x4] sm:$0xf]
      %v279 = vld [vmem:[%s241 + $0x8] sm:$0xf]
      %v280 = vld [vmem:[%s241 + $0xc] sm:$0xf]
      %v281 = vld [vmem:[%s241 + $0x10] sm:$0xf]
      %v282 = vld [vmem:[%s241 + $0x14] sm:$0xf]
      %v283 = vld [vmem:[%s241 + $0x18] sm:$0xf]
      %v284 = vld [vmem:[%s241 + $0x1c] sm:$0xf]
      %v301 = vunpack.c.l.b16 %v261
      %v302 = vunpack.c.l.b16 %v262
      %v303 = vunpack.c.l.b16 %v263
      %v304 = vunpack.c.l.b16 %v264
      %v305 = vunpack.c.l.b16 %v265
      %v306 = vunpack.c.l.b16 %v266
      %v307 = vunpack.c.l.b16 %v267
      %v308 = vunpack.c.l.b16 %v268
      %v309 = vunpack.c.l.b16 %v269
      %v310 = vunpack.c.l.b16 %v270
      %v311 = vunpack.c.l.b16 %v271
      %v312 = vunpack.c.l.b16 %v272
      %v313 = vunpack.c.l.b16 %v273
      %v314 = vunpack.c.l.b16 %v274
      %v315 = vunpack.c.l.b16 %v275
      %v316 = vunpack.c.l.b16 %v276
      %v317 = vpack.c.b16 %v302, %v301
      %v318 = vpack.c.b16 %v304, %v303
      %v319 = vpack.c.b16 %v306, %v305
      %v320 = vpack.c.b16 %v308, %v307
      %v321 = vpack.c.b16 %v310, %v309
      %v322 = vpack.c.b16 %v312, %v311
      %v323 = vpack.c.b16 %v314, %v313
      %v324 = vpack.c.b16 %v316, %v315
      %v333 = vunpack.c.l.b16 %v277
      %v334 = vunpack.c.l.b16 %v278
      %v335 = vunpack.c.l.b16 %v279
      %v336 = vunpack.c.l.b16 %v280
      %v337 = vunpack.c.l.b16 %v281
      %v338 = vunpack.c.l.b16 %v282
      %v339 = vunpack.c.l.b16 %v283
      %v340 = vunpack.c.l.b16 %v284
      %v341 = vpack.c.b16 %v334, %v333
      %v342 = vpack.c.b16 %v336, %v335
      %v343 = vpack.c.b16 %v338, %v337
      %v344 = vpack.c.b16 %v340, %v339
      %vm349 = vcmask 523264
      %v351 = vsel %vm349, %v317, 0
      %v354 = vsel %vm349, %v318, 0
      %v357 = vsel %vm349, %v319, 0
      %v360 = vsel %vm349, %v320, 0
      %v363 = vsel %vm349, %v321, 0
      %v366 = vsel %vm349, %v322, 0
      %v369 = vsel %vm349, %v323, 0
      %v372 = vsel %vm349, %v324, 0
      %374 = vmatprep.subr.bf16.mxu0 0
      %375 = vmatpush1.bf16.msra.mxu0 %v341
      %376 = vmatprep.subr.bf16.mxu0 0
      %377 = vmatpush1.bf16.msra.mxu0 %v342
      %378 = vmatprep.subr.bf16.mxu0 0
      %379 = vmatpush1.bf16.msra.mxu0 %v343
      %380 = vmatprep.subr.bf16.mxu0 0
      %381 = vmatpush1.bf16.msra.mxu0 %v344
      %382 = vmatprep.subr.bf16.mxu0 0
      %383 = vmatpush1.bf16.msra.mxu0 0
      %384 = vmatprep.subr.bf16.mxu0 0
      %385 = vmatpush1.bf16.msra.mxu0 0
      %386 = vmatprep.subr.bf16.mxu0 0
      %387 = vmatpush1.bf16.msra.mxu0 0
      %388 = vmatprep.subr.bf16.mxu0 0
      %389 = vmatpush1.bf16.msra.mxu0 0
      %390 = vmatprep.subr.bf16.mxu0 0
      %391 = vmatpush1.bf16.msra.mxu0 0
      %392 = vmatprep.subr.bf16.mxu0 0
      %393 = vmatpush1.bf16.msra.mxu0 0
      %394 = vmatprep.subr.bf16.mxu0 0
      %395 = vmatpush1.bf16.msra.mxu0 0
      %396 = vmatprep.subr.bf16.mxu0 0
      %397 = vmatpush1.bf16.msra.mxu0 0
      %398 = vmatprep.subr.bf16.mxu0 0
      %399 = vmatpush1.bf16.msra.mxu0 0
      %400 = vmatprep.subr.bf16.mxu0 0
      %401 = vmatpush1.bf16.msra.mxu0 0
      %402 = vmatprep.subr.bf16.mxu0 0
      %403 = vmatpush1.bf16.msra.mxu0 0
      %404 = vmatprep.subr.bf16.mxu0 0
      %405 = vmatpush1.bf16.msra.mxu0 0
      %406 = vmatprep.mubr.bf16.mxu0 0
      %407 = vmatmul.mubr.bf16.gmra.mrb[0].mxu0 %v351
      %v408 = vpop.f32.mrb[0].mxu0
      %v409 = vadd.f32 0.0, %v408
      %v410 = vpop.f32.mrb[0].mxu0
      %v411 = vpop.f32.mrb[0].mxu0
      %v412 = vadd.f32 0.0, %v411
      %v413 = vpop.f32.mrb[0].mxu0
      %414 = vmatprep.mubr.bf16.mxu0 0
      %415 = vmatmul.mubr.bf16.gmra.mrb[0].mxu0 %v354
      %v416 = vpop.f32.mrb[0].mxu0
      %v417 = vadd.f32 0.0, %v416
      %v418 = vpop.f32.mrb[0].mxu0
      %v419 = vpop.f32.mrb[0].mxu0
      %v420 = vadd.f32 0.0, %v419
      %v421 = vpop.f32.mrb[0].mxu0
      %422 = vmatprep.mubr.bf16.mxu0 0
      %423 = vmatmul.mubr.bf16.gmra.mrb[0].mxu0 %v357
      %v424 = vpop.f32.mrb[0].mxu0
      %v425 = vadd.f32 0.0, %v424
      %v426 = vpop.f32.mrb[0].mxu0
      %v427 = vpop.f32.mrb[0].mxu0
      %v428 = vadd.f32 0.0, %v427
      %v429 = vpop.f32.mrb[0].mxu0
      %430 = vmatprep.mubr.bf16.mxu0 0
      %431 = vmatmul.mubr.bf16.gmra.mrb[0].mxu0 %v360
      %v432 = vpop.f32.mrb[0].mxu0
      %v433 = vadd.f32 0.0, %v432
      %v434 = vpop.f32.mrb[0].mxu0
      %v435 = vpop.f32.mrb[0].mxu0
      %v436 = vadd.f32 0.0, %v435
      %v437 = vpop.f32.mrb[0].mxu0
      %438 = vmatprep.mubr.bf16.mxu0 0
      %439 = vmatmul.mubr.bf16.gmra.mrb[0].mxu0 %v363
      %v440 = vpop.f32.mrb[0].mxu0
      %v441 = vadd.f32 0.0, %v440
      %v442 = vpop.f32.mrb[0].mxu0
      %v443 = vpop.f32.mrb[0].mxu0
      %v444 = vadd.f32 0.0, %v443
      %v445 = vpop.f32.mrb[0].mxu0
      %446 = vmatprep.mubr.bf16.mxu0 0
      %447 = vmatmul.mubr.bf16.gmra.mrb[0].mxu0 %v366
      %v448 = vpop.f32.mrb[0].mxu0
      %v449 = vadd.f32 0.0, %v448
      %v450 = vpop.f32.mrb[0].mxu0
      %v451 = vpop.f32.mrb[0].mxu0
      %v452 = vadd.f32 0.0, %v451
      %v453 = vpop.f32.mrb[0].mxu0
      %454 = vmatprep.mubr.bf16.mxu0 0
      %455 = vmatmul.mubr.bf16.gmra.mrb[0].mxu0 %v369
      %v456 = vpop.f32.mrb[0].mxu0
      %v457 = vadd.f32 0.0, %v456
      %v458 = vpop.f32.mrb[0].mxu0
      %v459 = vpop.f32.mrb[0].mxu0
      %v460 = vadd.f32 0.0, %v459
      %v461 = vpop.f32.mrb[0].mxu0
      %462 = vmatprep.mubr.bf16.mxu0 0
      %463 = vmatmul.mubr.bf16.gmra.mrb[0].mxu0 %v372
      %v464 = vpop.f32.mrb[0].mxu0
      %v465 = vadd.f32 0.0, %v464
      %v466 = vpop.f32.mrb[0].mxu0
      %v467 = vpop.f32.mrb[0].mxu0
      %v468 = vadd.f32 0.0, %v467
      %v469 = vpop.f32.mrb[0].mxu0
      %470 = vdwg.mxu0
      %471 = vst [vmem:[%s250] sm:$0xff] %v409
      %472 = vst [vmem:[%s250 + $0x8] sm:$0xff] %v412
      %473 = vst [vmem:[%s250 + $0x10] sm:$0xff] %v417
      %474 = vst [vmem:[%s250 + $0x18] sm:$0xff] %v420
      %475 = vst [vmem:[%s250 + $0x20] sm:$0xff] %v425
      %476 = vst [vmem:[%s250 + $0x28] sm:$0xff] %v428
      %477 = vst [vmem:[%s250 + $0x30] sm:$0xff] %v433
      %478 = vst [vmem:[%s250 + $0x38] sm:$0xff] %v436
      %479 = vst [vmem:[%s250 + $0x40] sm:$0xff] %v441
      %480 = vst [vmem:[%s250 + $0x48] sm:$0xff] %v444
      %481 = vst [vmem:[%s250 + $0x50] sm:$0xff] %v449
      %482 = vst [vmem:[%s250 + $0x58] sm:$0xff] %v452
      %483 = vst [vmem:[%s250 + $0x60] sm:$0xff] %v457
      %484 = vst [vmem:[%s250 + $0x68] sm:$0xff] %v460
      %485 = vst [vmem:[%s250 + $0x70] sm:$0xff] %v465
      %486 = vst [vmem:[%s250 + $0x78] sm:$0xff] %v468
      %v487 = vld [vmem:[%s3] sm:$0x1]
      %v488 = vadd.f32 %v409, %v412
      %v489 = vadd.f32 %v488, %v417
      %v490 = vadd.f32 %v489, %v420
      %v491 = vadd.f32 %v490, %v425
      %v492 = vadd.f32 %v491, %v428
      %v493 = vadd.f32 %v492, %v433
      %v494 = vadd.f32 %v493, %v436
      %v495 = vadd.f32 %v494, %v441
      %v496 = vadd.f32 %v495, %v444
      %v497 = vadd.f32 %v496, %v449
      %v498 = vadd.f32 %v497, %v452
      %v499 = vadd.f32 %v498, %v457
      %v500 = vadd.f32 %v499, %v460
      %v501 = vadd.f32 %v500, %v465
      %v502 = vadd.f32 %v501, %v468
      %v503 = vrot.slane %v502, 4
      %v504 = vadd.f32 %v502, %v503
      %v505 = vrot.slane %v504, 2
      %v506 = vadd.f32 %v504, %v505
      %v507 = vrot.slane %v506, 1
      %v508 = vadd.f32 %v506, %v507
      %v509 = vadd.f32 %v487, %v508
      %510 = vst [vmem:[%s3] sm:$0x1] %v509
      %v511 = vld [vmem:[%s4] sm:$0x1]
      %v512 = vmul.f32 %v409, %v409
      %v513 = vmul.f32 %v412, %v412
      %v514 = vmul.f32 %v417, %v417
      %v515 = vmul.f32 %v420, %v420
      %v516 = vmul.f32 %v425, %v425
      %v517 = vmul.f32 %v428, %v428
      %v518 = vmul.f32 %v433, %v433
      %v519 = vmul.f32 %v436, %v436
      %v520 = vmul.f32 %v441, %v441
      %v521 = vmul.f32 %v444, %v444
      %v522 = vmul.f32 %v449, %v449
      %v523 = vmul.f32 %v452, %v452
      %v524 = vmul.f32 %v457, %v457
      %v525 = vmul.f32 %v460, %v460
      %v526 = vmul.f32 %v465, %v465
      %v527 = vmul.f32 %v468, %v468
      %v528 = vadd.f32 %v512, %v513
      %v529 = vadd.f32 %v528, %v514
      %v530 = vadd.f32 %v529, %v515
      %v531 = vadd.f32 %v530, %v516
      %v532 = vadd.f32 %v531, %v517
      %v533 = vadd.f32 %v532, %v518
      %v534 = vadd.f32 %v533, %v519
      %v535 = vadd.f32 %v534, %v520
      %v536 = vadd.f32 %v535, %v521
      %v537 = vadd.f32 %v536, %v522
      %v538 = vadd.f32 %v537, %v523
      %v539 = vadd.f32 %v538, %v524
      %v540 = vadd.f32 %v539, %v525
      %v541 = vadd.f32 %v540, %v526
      %v542 = vadd.f32 %v541, %v527
      %v543 = vrot.slane %v542, 4
      %v544 = vadd.f32 %v542, %v543
      %v545 = vrot.slane %v544, 2
      %v546 = vadd.f32 %v544, %v545
      %v547 = vrot.slane %v546, 1
      %v548 = vadd.f32 %v546, %v547
      %v549 = vadd.f32 %v511, %v548
      %550 = vst [vmem:[%s4] sm:$0x1] %v549
      %s551 = smul.u32 16, %s21
      %p552 = scmp.lt.s32.totalorder %s20, 3
      %s553 = scalar_select %p552, %s20, 3
      %p554 = scmp.lt.s32.totalorder %s551, 15
      %s555 = scalar_select %p554, %s551, 15
      %s556 = smul.addr %s553, 16
      %s557 = sadd.s32 %s555, %s556
      %s558 = smul.addr %s557, 8
      %s559 = scalar_lea.vmem %s2, %s558
      // Predicated region
      $region33: #{generator_forward.13} parent=27 // pred_check
        %p560 = pneg %p102
      $region34: #{generator_forward.13} parent=27 // pred_check_branch
        %562 = sbr.rel (%p560) target = $region36
      $region35: #{generator_forward.13} parent=27 // pred_region
        %s563 = smul.u32 16, %s21
      $region36: #{generator_forward.13} parent=27 // pred_fallthru
        _
      // Predicated region
      $region37: #{generator_forward.13} parent=27 // pred_check
        %p564 = pneg %p123
      $region38: #{generator_forward.13} parent=27 // pred_check_branch
        %566 = sbr.rel (%p564) target = $region40
      $region39: #{generator_forward.13} parent=27 // pred_region
        _
      $region40: #{generator_forward.13} parent=27 // pred_fallthru
        _
      // Predicated region
      $region41: #{generator_forward.13} parent=27 // pred_check
        %p567 = pneg %p144
      $region42: #{generator_forward.13} parent=27 // pred_check_branch
        %569 = sbr.rel (%p567) target = $region44
      $region43: #{generator_forward.13} parent=27 // pred_region
        _
      $region44: #{generator_forward.13} parent=27 // pred_fallthru
        _
      // Predicated region
      $region45: #{generator_forward.13} parent=27 // pred_check
        %p570 = pneg %p123
      $region46: #{generator_forward.13} parent=27 // pred_check_branch
        %572 = sbr.rel (%p570) target = $region48
      $region47: #{generator_forward.13} parent=27 // pred_region
        _
      $region48: #{generator_forward.13} parent=27 // pred_fallthru
        _
      // Predicated region
      $region49: #{generator_forward.13} parent=27 // pred_check
        %p573 = pneg %p144
      $region50: #{generator_forward.13} parent=27 // pred_check_branch
        %575 = sbr.rel (%p573) target = $region52
      $region51: #{generator_forward.13} parent=27 // pred_region
        _
      $region52: #{generator_forward.13} parent=27 // pred_fallthru
        _
    $region28: #{generator_forward.13} parent=5 // pred_fallthru
      _
    %p576 = scmp.le.s32.totalorder 2, %s11
    // Predicated region
    $region53: #{generator_forward.13} parent=5 // pred_check
      %p577 = pneg %p576
    $region54: #{generator_forward.13} parent=5 // pred_check_branch
      %579 = sbr.rel (%p577) target = $region56
    $region55: #{generator_forward.13} parent=5 // pred_region
      %s580 = ssub.s32 %s11, 2
      // Predicated region
      $region57: #{generator_forward.13} parent=55 // pred_check
        %p581 = pneg %p108
      $region58: #{generator_forward.13} parent=55 // pred_check_branch
        %583 = sbr.rel (%p581) target = $region60
      $region59: #{generator_forward.13} parent=55 // pred_region
        %s584 = smul.u32 16, %s23
        %p585 = scmp.lt.s32.totalorder %s22, 3
        %s586 = scalar_select %p585, %s22, 3
        %p587 = scmp.lt.s32.totalorder %s584, 15
        %s588 = scalar_select %p587, %s584, 15
        %s589 = smul.addr %s586, 16
        %s590 = sadd.s32 %s588, %s589
        %s591 = smul.addr %s590, 8
        %s592 = scalar_lea.vmem %s2, %s591
      $region60: #{generator_forward.13} parent=55 // pred_fallthru
        _
    $region56: #{generator_forward.13} parent=5 // pred_fallthru
      _
  $region6: #{generator_forward.13} parent=0 // loop_footer
    %s15 = sadd.s32 1, %s11
  $region7: #{generator_forward.13} parent=0 // loop_footer_branch
    %10 = sbr.rel target = $region3
  $region8: #{generator_forward.13} parent=0 // loop_exit
    _

// kernel: generator_forward.16
$region0: #{generator_forward.16}
  #allocation0 [shape = 'u32[]', space=smem, size = 0x4, offset = 0x4, fixed_abs, tag = 'smem constant byte address 0x4 - core index']
  #allocation1 [shape = 'u32[144,128]{1,0:T(1,128)}', space=vmem, size = 0x12000, scoped, tag = 'internal scratch']
  %s0 = inlined_call_operand.vmem [shape: f32[2048,128], index: 0, kind: input, shape index: {}]
  %s1 = inlined_call_operand.vmem [shape: f32[1,128], index: 1, kind: input, shape index: {}]
  %s2 = inlined_call_operand.vmem [shape: f32[1,128], index: 2, kind: input, shape index: {}]
  %s3 = inlined_call_operand.vmem [shape: f32[1,128], index: 3, kind: input, shape index: {}]
  %s4 = inlined_call_operand.vmem [shape: f32[1,128], index: 4, kind: input, shape index: {}]
  %s5 = inlined_call_operand.vmem [shape: f32[2048,128], index: 5, kind: output, shape index: {}]
  %s6 = sld [smem:[#allocation0]]
  $region53: #{generator_forward.16} parent=0
    _
  %s8 = ssub.s32 1, %s6
  %s9 = scalar_select 0, %s8, %s6
  loop: start=0, step=1, limit=6
  $region2: #{generator_forward.16} parent=0 // loop_pre_header
    _
  $region3: #{generator_forward.16} parent=0 // loop_header
    %s11 = sphi 0, %s15
    %p12 = scmp.ge.s32.totalorder %s11, 6
    %s21 = sphi 0, %s23
    %s24 = sphi 0, %s21
    %s25 = sphi 0, %s24
    %s41 = sphi 0, %s25
    %s45 = sphi 0, %s45
    %s47 = sphi 0, %s45
    %s48 = sphi 0, %s47
    %s62 = sphi 0, %s48
    %s66 = sphi 0, %s66
    %s68 = sphi 0, %s66
    %s69 = sphi 0, %s68
    %s83 = sphi 0, %s69
    %s87 = sphi 0, %s87
    %s89 = sphi 0, %s87
    %s90 = sphi 0, %s89
    %s104 = sphi 0, %s90
    %s108 = sphi 0, %s108
    %s110 = sphi 0, %s108
    %s111 = sphi 0, %s110
    %s125 = sphi 0, %s111
    %s131 = sphi 0, %s133
    %s134 = sphi 0, %s131
    %s135 = sphi 0, %s134
    %s151 = sphi 0, %s135
  $region4: #{generator_forward.16} parent=0 // loop_header_branch
    %14 = sbr.rel (%p12) target = $region8
  $region5: #{generator_forward.16} parent=0 // loop_body
    %s16 = ssub.s32 %s11, 1
    %s17 = ssub.s32 %s11, 2
    %s18 = sadd.s32 %s11, 1
    %s19 = ssub.s32 %s11, %s18
    %p20 = scmp.eq.s32.totalorder %s19, 0
    %s22 = sadd.s32 %s21, 1
    %s23 = scalar_select %p20, %s21, %s22
    %p26 = pneg %p20
    %p27 = scmp.eq.s32.totalorder %s11, 3
    %p28 = por %p26, %p27
    %p29 = scmp.ne.s32.totalorder %s21, %s24
    %p30 = scmp.eq.s32.totalorder %s11, 0
    %p31 = por %p29, %p30
    %p32 = scmp.ne.s32.totalorder %s21, %s24
    %p33 = scmp.eq.s32.totalorder %s16, 3
    %p34 = por %p32, %p33
    %p35 = scmp.ne.s32.totalorder %s24, %s25
    %p36 = scmp.eq.s32.totalorder %s16, 0
    %p37 = por %p35, %p36
    %p38 = scmp.ne.s32.totalorder %s24, %s25
    %p39 = scmp.eq.s32.totalorder %s17, 3
    %p40 = por %p38, %p39
    %p42 = scmp.ne.s32.totalorder %s25, %s41
    %p43 = scmp.eq.s32.totalorder %s17, 0
    %p44 = por %p42, %p43
    %s46 = sadd.s32 %s45, 1
    %p49 = scmp.eq.s32.totalorder %s11, 3
    %p50 = scmp.ne.s32.totalorder %s45, %s47
    %p51 = scmp.eq.s32.totalorder %s11, 0
    %p52 = por %p50, %p51
    %p53 = scmp.ne.s32.totalorder %s45, %s47
    %p54 = scmp.eq.s32.totalorder %s16, 3
    %p55 = por %p53, %p54
    %p56 = scmp.ne.s32.totalorder %s47, %s48
    %p57 = scmp.eq.s32.totalorder %s16, 0
    %p58 = por %p56, %p57
    %p59 = scmp.ne.s32.totalorder %s47, %s48
    %p60 = scmp.eq.s32.totalorder %s17, 3
    %p61 = por %p59, %p60
    %p63 = scmp.ne.s32.totalorder %s48, %s62
    %p64 = scmp.eq.s32.totalorder %s17, 0
    %p65 = por %p63, %p64
    %s67 = sadd.s32 %s66, 1
    %p70 = scmp.eq.s32.totalorder %s11, 3
    %p71 = scmp.ne.s32.totalorder %s66, %s68
    %p72 = scmp.eq.s32.totalorder %s11, 0
    %p73 = por %p71, %p72
    %p74 = scmp.ne.s32.totalorder %s66, %s68
    %p75 = scmp.eq.s32.totalorder %s16, 3
    %p76 = por %p74, %p75
    %p77 = scmp.ne.s32.totalorder %s68, %s69
    %p78 = scmp.eq.s32.totalorder %s16, 0
    %p79 = por %p77, %p78
    %p80 = scmp.ne.s32.totalorder %s68, %s69
    %p81 = scmp.eq.s32.totalorder %s17, 3
    %p82 = por %p80, %p81
    %p84 = scmp.ne.s32.totalorder %s69, %s83
    %p85 = scmp.eq.s32.totalorder %s17, 0
    %p86 = por %p84, %p85
    %s88 = sadd.s32 %s87, 1
    %p91 = scmp.eq.s32.totalorder %s11, 3
    %p92 = scmp.ne.s32.totalorder %s87, %s89
    %p93 = scmp.eq.s32.totalorder %s11, 0
    %p94 = por %p92, %p93
    %p95 = scmp.ne.s32.totalorder %s87, %s89
    %p96 = scmp.eq.s32.totalorder %s16, 3
    %p97 = por %p95, %p96
    %p98 = scmp.ne.s32.totalorder %s89, %s90
    %p99 = scmp.eq.s32.totalorder %s16, 0
    %p100 = por %p98, %p99
    %p101 = scmp.ne.s32.totalorder %s89, %s90
    %p102 = scmp.eq.s32.totalorder %s17, 3
    %p103 = por %p101, %p102
    %p105 = scmp.ne.s32.totalorder %s90, %s104
    %p106 = scmp.eq.s32.totalorder %s17, 0
    %p107 = por %p105, %p106
    %s109 = sadd.s32 %s108, 1
    %p112 = scmp.eq.s32.totalorder %s11, 3
    %p113 = scmp.ne.s32.totalorder %s108, %s110
    %p114 = scmp.eq.s32.totalorder %s11, 0
    %p115 = por %p113, %p114
    %p116 = scmp.ne.s32.totalorder %s108, %s110
    %p117 = scmp.eq.s32.totalorder %s16, 3
    %p118 = por %p116, %p117
    %p119 = scmp.ne.s32.totalorder %s110, %s111
    %p120 = scmp.eq.s32.totalorder %s16, 0
    %p121 = por %p119, %p120
    %p122 = scmp.ne.s32.totalorder %s110, %s111
    %p123 = scmp.eq.s32.totalorder %s17, 3
    %p124 = por %p122, %p123
    %p126 = scmp.ne.s32.totalorder %s111, %s125
    %p127 = scmp.eq.s32.totalorder %s17, 0
    %p128 = por %p126, %p127
    %s129 = ssub.s32 %s11, %s18
    %p130 = scmp.eq.s32.totalorder %s129, 0
    %s132 = sadd.s32 %s131, 1
    %s133 = scalar_select %p130, %s131, %s132
    %p136 = pneg %p130
    %p137 = scmp.eq.s32.totalorder %s11, 3
    %p138 = por %p136, %p137
    %p139 = scmp.ne.s32.totalorder %s131, %s134
    %p140 = scmp.eq.s32.totalorder %s11, 0
    %p141 = por %p139, %p140
    %p142 = scmp.ne.s32.totalorder %s131, %s134
    %p143 = scmp.eq.s32.totalorder %s16, 3
    %p144 = por %p142, %p143
    %p145 = scmp.ne.s32.totalorder %s134, %s135
    %p146 = scmp.eq.s32.totalorder %s16, 0
    %p147 = por %p145, %p146
    %p148 = scmp.ne.s32.totalorder %s134, %s135
    %p149 = scmp.eq.s32.totalorder %s17, 3
    %p150 = por %p148, %p149
    %p152 = scmp.ne.s32.totalorder %s135, %s151
    %p153 = scmp.eq.s32.totalorder %s17, 0
    %p154 = por %p152, %p153
    %p155 = scmp.le.s32.totalorder 1, %s11
    %p156 = scmp.lt.s32.totalorder %s11, 5
    %p157 = pnand %p155, %p156
    %p158 = pneg %p157
    // Predicated region
    $region9: #{generator_forward.16} parent=5 // pred_check
      _
    $region10: #{generator_forward.16} parent=5 // pred_check_branch
      %160 = sbr.rel (%p157) target = $region12
    $region11: #{generator_forward.16} parent=5 // pred_region
      %s161 = ssub.s32 %s11, 1
      // Predicated region
      $region13: #{generator_forward.16} parent=11 // pred_check
        %p162 = pneg %p58
      $region14: #{generator_forward.16} parent=11 // pred_check_branch
        %164 = sbr.rel (%p162) target = $region16
      $region15: #{generator_forward.16} parent=11 // pred_region
        _
      $region16: #{generator_forward.16} parent=11 // pred_fallthru
        _
      // Predicated region
      $region17: #{generator_forward.16} parent=11 // pred_check
        %p165 = pneg %p79
      $region18: #{generator_forward.16} parent=11 // pred_check_branch
        %167 = sbr.rel (%p165) target = $region20
      $region19: #{generator_forward.16} parent=11 // pred_region
        _
      $region20: #{generator_forward.16} parent=11 // pred_fallthru
        _
      // Predicated region
      $region21: #{generator_forward.16} parent=11 // pred_check
        %p168 = pneg %p100
      $region22: #{generator_forward.16} parent=11 // pred_check_branch
        %170 = sbr.rel (%p168) target = $region24
      $region23: #{generator_forward.16} parent=11 // pred_region
        _
      $region24: #{generator_forward.16} parent=11 // pred_fallthru
        _
      // Predicated region
      $region25: #{generator_forward.16} parent=11 // pred_check
        %p171 = pneg %p121
      $region26: #{generator_forward.16} parent=11 // pred_check_branch
        %173 = sbr.rel (%p171) target = $region28
      $region27: #{generator_forward.16} parent=11 // pred_region
        _
      $region28: #{generator_forward.16} parent=11 // pred_fallthru
        _
    $region12: #{generator_forward.16} parent=5 // pred_fallthru
      _
    %p174 = scmp.lt.s32.totalorder %s11, 4
    // Predicated region
    $region29: #{generator_forward.16} parent=5 // pred_check
      %p175 = pneg %p174
    $region30: #{generator_forward.16} parent=5 // pred_check_branch
      %177 = sbr.rel (%p175) target = $region32
    $region31: #{generator_forward.16} parent=5 // pred_region
      // Predicated region
      $region33: #{generator_forward.16} parent=31 // pred_check
        %p178 = pneg %p31
      $region34: #{generator_forward.16} parent=31 // pred_check_branch
        %180 = sbr.rel (%p178) target = $region36
      $region35: #{generator_forward.16} parent=31 // pred_region
        %s181 = smul.u32 64, %s11
        %p182 = scmp.lt.s32.totalorder %s181, 255
        %s183 = scalar_select %p182, %s181, 255
        %s184 = smul.addr %s183, 8
        %s185 = scalar_lea.vmem %s0, %s184
        %s186 = smul.u32 64, %s11
      $region36: #{generator_forward.16} parent=31 // pred_fallthru
        _
    $region32: #{generator_forward.16} parent=5 // pred_fallthru
      _
    %p187 = scmp.le.s32.totalorder 1, %s11
    %p188 = scmp.lt.s32.totalorder %s11, 5
    %p189 = pnand %p187, %p188
    %p190 = pneg %p189
    // Predicated region
    $region37: #{generator_forward.16} parent=5 // pred_check
      _
    $region38: #{generator_forward.16} parent=5 // pred_check_branch
      %192 = sbr.rel (%p189) target = $region40
    $region39: #{generator_forward.16} parent=5 // pred_region
      %s193 = ssub.s32 %s11, 1
      %s194 = smul.u32 64, %s16
      %p195 = scmp.lt.s32.totalorder %s194, 255
      %s196 = scalar_select %p195, %s194, 255
      %s197 = smul.addr %s196, 8
      %s198 = scalar_lea.vmem %s0, %s197
      %p199 = pneg %p37
      %p200 = pneg %p34
      %p201 = pneg %p58
      %p202 = pneg %p55
      %p203 = pneg %p79
      %p204 = pneg %p76
      %p205 = pneg %p100
      %p206 = pneg %p97
      %p207 = pneg %p121
      %p208 = pneg %p118
      %p209 = pneg %p147
      %p210 = pneg %p144
      %s211 = smul.u32 64, %s16
      %p212 = scmp.lt.s32.totalorder %s211, 255
      %s213 = scalar_select %p212, %s211, 255
      %s214 = smul.addr %s213, 8
      %s215 = scalar_lea.vmem %s5, %s214
      %s216 = smul.u32 64, %s16
      %p217 = scmp.lt.s32.totalorder %s216, 255
      %s218 = scalar_select %p217, %s216, 255
      %s219 = smul.addr %s218, 8
      %s220 = scalar_lea.vmem %s0, %s219
      %s221 = smul.u32 64, %s16
      %s222 = smul.u32 64, %s16
      %p223 = scmp.lt.s32.totalorder %s222, 255
      %s224 = scalar_select %p223, %s222, 255
      %s225 = smul.addr %s224, 8
      %s226 = scalar_lea.vmem %s5, %s225
      %s227 = smul.u32 64, %s16
      %v228 = vld [vmem:[%s1] sm:$0x1]
      %v229 = vmul.f32 %v228, 0.00048828125
      %v230 = vld [vmem:[%s2] sm:$0x1]
      %v231 = vmul.f32 %v230, 0.00048828125
      %v232 = vmul.f32 %v229, %v229
      %v233 = vsub.f32 %v231, %v232
      %v234 = vmax.f32 %v233, 0.0
      %v235 = vld [vmem:[%s3] sm:$0x1]
      %v236 = vadd.f32 %v234, 1e-05
      %v237 = vrsqrt.pop %v236
      %v238 = vmul.f32 %v235, %v237
      %v239 = vld [vmem:[%s4] sm:$0x1]
      %v240 = vmul.f32 %v229, %v238
      %v241 = vsub.f32 %v239, %v240
      %v242 = vld [vmem:[%s220] sm:$0xff]
      %v243 = vld [vmem:[%s220 + $0x8] sm:$0xff]
      %v244 = vld [vmem:[%s220 + $0x10] sm:$0xff]
      %v245 = vld [vmem:[%s220 + $0x18] sm:$0xff]
      %v246 = vld [vmem:[%s220 + $0x20] sm:$0xff]
      %v247 = vld [vmem:[%s220 + $0x28] sm:$0xff]
      %v248 = vld [vmem:[%s220 + $0x30] sm:$0xff]
      %v249 = vld [vmem:[%s220 + $0x38] sm:$0xff]
      %v250 = vld [vmem:[%s220 + $0x40] sm:$0xff]
      %v251 = vld [vmem:[%s220 + $0x48] sm:$0xff]
      %v252 = vld [vmem:[%s220 + $0x50] sm:$0xff]
      %v253 = vld [vmem:[%s220 + $0x58] sm:$0xff]
      %v254 = vld [vmem:[%s220 + $0x60] sm:$0xff]
      %v255 = vld [vmem:[%s220 + $0x68] sm:$0xff]
      %v256 = vld [vmem:[%s220 + $0x70] sm:$0xff]
      %v257 = vld [vmem:[%s220 + $0x78] sm:$0xff]
      %v258 = vld [vmem:[%s220 + $0x80] sm:$0xff]
      %v259 = vld [vmem:[%s220 + $0x88] sm:$0xff]
      %v260 = vld [vmem:[%s220 + $0x90] sm:$0xff]
      %v261 = vld [vmem:[%s220 + $0x98] sm:$0xff]
      %v262 = vld [vmem:[%s220 + $0xa0] sm:$0xff]
      %v263 = vld [vmem:[%s220 + $0xa8] sm:$0xff]
      %v264 = vld [vmem:[%s220 + $0xb0] sm:$0xff]
      %v265 = vld [vmem:[%s220 + $0xb8] sm:$0xff]
      %v266 = vld [vmem:[%s220 + $0xc0] sm:$0xff]
      %v267 = vld [vmem:[%s220 + $0xc8] sm:$0xff]
      %v268 = vld [vmem:[%s220 + $0xd0] sm:$0xff]
      %v269 = vld [vmem:[%s220 + $0xd8] sm:$0xff]
      %v270 = vld [vmem:[%s220 + $0xe0] sm:$0xff]
      %v271 = vld [vmem:[%s220 + $0xe8] sm:$0xff]
      %v272 = vld [vmem:[%s220 + $0xf0] sm:$0xff]
      %v273 = vld [vmem:[%s220 + $0xf8] sm:$0xff]
      %v274 = vld [vmem:[%s220 + $0x100] sm:$0xff]
      %v275 = vld [vmem:[%s220 + $0x108] sm:$0xff]
      %v276 = vld [vmem:[%s220 + $0x110] sm:$0xff]
      %v277 = vld [vmem:[%s220 + $0x118] sm:$0xff]
      %v278 = vld [vmem:[%s220 + $0x120] sm:$0xff]
      %v279 = vld [vmem:[%s220 + $0x128] sm:$0xff]
      %v280 = vld [vmem:[%s220 + $0x130] sm:$0xff]
      %v281 = vld [vmem:[%s220 + $0x138] sm:$0xff]
      %v282 = vld [vmem:[%s220 + $0x140] sm:$0xff]
      %v283 = vld [vmem:[%s220 + $0x148] sm:$0xff]
      %v284 = vld [vmem:[%s220 + $0x150] sm:$0xff]
      %v285 = vld [vmem:[%s220 + $0x158] sm:$0xff]
      %v286 = vld [vmem:[%s220 + $0x160] sm:$0xff]
      %v287 = vld [vmem:[%s220 + $0x168] sm:$0xff]
      %v288 = vld [vmem:[%s220 + $0x170] sm:$0xff]
      %v289 = vld [vmem:[%s220 + $0x178] sm:$0xff]
      %v290 = vld [vmem:[%s220 + $0x180] sm:$0xff]
      %v291 = vld [vmem:[%s220 + $0x188] sm:$0xff]
      %v292 = vld [vmem:[%s220 + $0x190] sm:$0xff]
      %v293 = vld [vmem:[%s220 + $0x198] sm:$0xff]
      %v294 = vld [vmem:[%s220 + $0x1a0] sm:$0xff]
      %v295 = vld [vmem:[%s220 + $0x1a8] sm:$0xff]
      %v296 = vld [vmem:[%s220 + $0x1b0] sm:$0xff]
      %v297 = vld [vmem:[%s220 + $0x1b8] sm:$0xff]
      %v298 = vld [vmem:[%s220 + $0x1c0] sm:$0xff]
      %v299 = vld [vmem:[%s220 + $0x1c8] sm:$0xff]
      %v300 = vld [vmem:[%s220 + $0x1d0] sm:$0xff]
      %v301 = vld [vmem:[%s220 + $0x1d8] sm:$0xff]
      %v302 = vld [vmem:[%s220 + $0x1e0] sm:$0xff]
      %v303 = vld [vmem:[%s220 + $0x1e8] sm:$0xff]
      %v304 = vld [vmem:[%s220 + $0x1f0] sm:$0xff]
      %v305 = vld [vmem:[%s220 + $0x1f8] sm:$0xff]
      %v307 = vlaneseq
      %v308 = vshrl.u32 %v307, 7
      %v309 = vsub.s32 0, %v308
      %v310 = vrot.slane %v238, %v309
      %v312 = vmul.f32 %v242, %v310
      %v313 = vmul.f32 %v243, %v310
      %v314 = vmul.f32 %v244, %v310
      %v315 = vmul.f32 %v245, %v310
      %v316 = vmul.f32 %v246, %v310
      %v317 = vmul.f32 %v247, %v310
      %v318 = vmul.f32 %v248, %v310
      %v319 = vmul.f32 %v249, %v310
      %v320 = vmul.f32 %v250, %v310
      %v321 = vmul.f32 %v251, %v310
      %v322 = vmul.f32 %v252, %v310
      %v323 = vmul.f32 %v253, %v310
      %v324 = vmul.f32 %v254, %v310
      %v325 = vmul.f32 %v255, %v310
      %v326 = vmul.f32 %v256, %v310
      %v327 = vmul.f32 %v257, %v310
      %v328 = vmul.f32 %v258, %v310
      %v329 = vmul.f32 %v259, %v310
      %v330 = vmul.f32 %v260, %v310
      %v331 = vmul.f32 %v261, %v310
      %v332 = vmul.f32 %v262, %v310
      %v333 = vmul.f32 %v263, %v310
      %v334 = vmul.f32 %v264, %v310
      %v335 = vmul.f32 %v265, %v310
      %v336 = vmul.f32 %v266, %v310
      %v337 = vmul.f32 %v267, %v310
      %v338 = vmul.f32 %v268, %v310
      %v339 = vmul.f32 %v269, %v310
      %v340 = vmul.f32 %v270, %v310
      %v341 = vmul.f32 %v271, %v310
      %v342 = vmul.f32 %v272, %v310
      %v343 = vmul.f32 %v273, %v310
      %v344 = vmul.f32 %v274, %v310
      %v345 = vmul.f32 %v275, %v310
      %v346 = vmul.f32 %v276, %v310
      %v347 = vmul.f32 %v277, %v310
      %v348 = vmul.f32 %v278, %v310
      %v349 = vmul.f32 %v279, %v310
      %v350 = vmul.f32 %v280, %v310
      %v351 = vmul.f32 %v281, %v310
      %v352 = vmul.f32 %v282, %v310
      %v353 = vmul.f32 %v283, %v310
      %v354 = vmul.f32 %v284, %v310
      %v355 = vmul.f32 %v285, %v310
      %v356 = vmul.f32 %v286, %v310
      %v357 = vmul.f32 %v287, %v310
      %v358 = vmul.f32 %v288, %v310
      %v359 = vmul.f32 %v289, %v310
      %v360 = vmul.f32 %v290, %v310
      %v361 = vmul.f32 %v291, %v310
      %v362 = vmul.f32 %v292, %v310
      %v363 = vmul.f32 %v293, %v310
      %v364 = vmul.f32 %v294, %v310
      %v365 = vmul.f32 %v295, %v310
      %v366 = vmul.f32 %v296, %v310
      %v367 = vmul.f32 %v297, %v310
      %v368 = vmul.f32 %v298, %v310
      %v369 = vmul.f32 %v299, %v310
      %v370 = vmul.f32 %v300, %v310
      %v371 = vmul.f32 %v301, %v310
      %v372 = vmul.f32 %v302, %v310
      %v373 = vmul.f32 %v303, %v310
      %v374 = vmul.f32 %v304, %v310
      %v375 = vmul.f32 %v305, %v310
      %v377 = vlaneseq
      %v378 = vshrl.u32 %v377, 7
      %v379 = vsub.s32 0, %v378
      %v380 = vrot.slane %v241, %v379
      %v382 = vadd.f32 %v312, %v380
      %v383 = vadd.f32 %v313, %v380
      %v384 = vadd.f32 %v314, %v380
      %v385 = vadd.f32 %v315, %v380
      %v386 = vadd.f32 %v316, %v380
      %v387 = vadd.f32 %v317, %v380
      %v388 = vadd.f32 %v318, %v380
      %v389 = vadd.f32 %v319, %v380
      %v390 = vadd.f32 %v320, %v380
      %v391 = vadd.f32 %v321, %v380
      %v392 = vadd.f32 %v322, %v380
      %v393 = vadd.f32 %v323, %v380
      %v394 = vadd.f32 %v324, %v380
      %v395 = vadd.f32 %v325, %v380
      %v396 = vadd.f32 %v326, %v380
      %v397 = vadd.f32 %v327, %v380
      %v398 = vadd.f32 %v328, %v380
      %v399 = vadd.f32 %v329, %v380
      %v400 = vadd.f32 %v330, %v380
      %v401 = vadd.f32 %v331, %v380
      %v402 = vadd.f32 %v332, %v380
      %v403 = vadd.f32 %v333, %v380
      %v404 = vadd.f32 %v334, %v380
      %v405 = vadd.f32 %v335, %v380
      %v406 = vadd.f32 %v336, %v380
      %v407 = vadd.f32 %v337, %v380
      %v408 = vadd.f32 %v338, %v380
      %v409 = vadd.f32 %v339, %v380
      %v410 = vadd.f32 %v340, %v380
      %v411 = vadd.f32 %v341, %v380
      %v412 = vadd.f32 %v342, %v380
      %v413 = vadd.f32 %v343, %v380
      %v414 = vadd.f32 %v344, %v380
      %v415 = vadd.f32 %v345, %v380
      %v416 = vadd.f32 %v346, %v380
      %v417 = vadd.f32 %v347, %v380
      %v418 = vadd.f32 %v348, %v380
      %v419 = vadd.f32 %v349, %v380
      %v420 = vadd.f32 %v350, %v380
      %v421 = vadd.f32 %v351, %v380
      %v422 = vadd.f32 %v352, %v380
      %v423 = vadd.f32 %v353, %v380
      %v424 = vadd.f32 %v354, %v380
      %v425 = vadd.f32 %v355, %v380
      %v426 = vadd.f32 %v356, %v380
      %v427 = vadd.f32 %v357, %v380
      %v428 = vadd.f32 %v358, %v380
      %v429 = vadd.f32 %v359, %v380
      %v430 = vadd.f32 %v360, %v380
      %v431 = vadd.f32 %v361, %v380
      %v432 = vadd.f32 %v362, %v380
      %v433 = vadd.f32 %v363, %v380
      %v434 = vadd.f32 %v364, %v380
      %v435 = vadd.f32 %v365, %v380
      %v436 = vadd.f32 %v366, %v380
      %v437 = vadd.f32 %v367, %v380
      %v438 = vadd.f32 %v368, %v380
      %v439 = vadd.f32 %v369, %v380
      %v440 = vadd.f32 %v370, %v380
      %v441 = vadd.f32 %v371, %v380
      %v442 = vadd.f32 %v372, %v380
      %v443 = vadd.f32 %v373, %v380
      %v444 = vadd.f32 %v374, %v380
      %v445 = vadd.f32 %v375, %v380
      %v446 = vmax.f32 %v382, 0.0
      %v447 = vmax.f32 %v383, 0.0
      %v448 = vmax.f32 %v384, 0.0
      %v449 = vmax.f32 %v385, 0.0
      %v450 = vmax.f32 %v386, 0.0
      %v451 = vmax.f32 %v387, 0.0
      %v452 = vmax.f32 %v388, 0.0
      %v453 = vmax.f32 %v389, 0.0
      %v454 = vmax.f32 %v390, 0.0
      %v455 = vmax.f32 %v391, 0.0
      %v456 = vmax.f32 %v392, 0.0
      %v457 = vmax.f32 %v393, 0.0
      %v458 = vmax.f32 %v394, 0.0
      %v459 = vmax.f32 %v395, 0.0
      %v460 = vmax.f32 %v396, 0.0
      %v461 = vmax.f32 %v397, 0.0
      %v462 = vmax.f32 %v398, 0.0
      %v463 = vmax.f32 %v399, 0.0
      %v464 = vmax.f32 %v400, 0.0
      %v465 = vmax.f32 %v401, 0.0
      %v466 = vmax.f32 %v402, 0.0
      %v467 = vmax.f32 %v403, 0.0
      %v468 = vmax.f32 %v404, 0.0
      %v469 = vmax.f32 %v405, 0.0
      %v470 = vmax.f32 %v406, 0.0
      %v471 = vmax.f32 %v407, 0.0
      %v472 = vmax.f32 %v408, 0.0
      %v473 = vmax.f32 %v409, 0.0
      %v474 = vmax.f32 %v410, 0.0
      %v475 = vmax.f32 %v411, 0.0
      %v476 = vmax.f32 %v412, 0.0
      %v477 = vmax.f32 %v413, 0.0
      %v478 = vmax.f32 %v414, 0.0
      %v479 = vmax.f32 %v415, 0.0
      %v480 = vmax.f32 %v416, 0.0
      %v481 = vmax.f32 %v417, 0.0
      %v482 = vmax.f32 %v418, 0.0
      %v483 = vmax.f32 %v419, 0.0
      %v484 = vmax.f32 %v420, 0.0
      %v485 = vmax.f32 %v421, 0.0
      %v486 = vmax.f32 %v422, 0.0
      %v487 = vmax.f32 %v423, 0.0
      %v488 = vmax.f32 %v424, 0.0
      %v489 = vmax.f32 %v425, 0.0
      %v490 = vmax.f32 %v426, 0.0
      %v491 = vmax.f32 %v427, 0.0
      %v492 = vmax.f32 %v428, 0.0
      %v493 = vmax.f32 %v429, 0.0
      %v494 = vmax.f32 %v430, 0.0
      %v495 = vmax.f32 %v431, 0.0
      %v496 = vmax.f32 %v432, 0.0
      %v497 = vmax.f32 %v433, 0.0
      %v498 = vmax.f32 %v434, 0.0
      %v499 = vmax.f32 %v435, 0.0
      %v500 = vmax.f32 %v436, 0.0
      %v501 = vmax.f32 %v437, 0.0
      %v502 = vmax.f32 %v438, 0.0
      %v503 = vmax.f32 %v439, 0.0
      %v504 = vmax.f32 %v440, 0.0
      %v505 = vmax.f32 %v441, 0.0
      %v506 = vmax.f32 %v442, 0.0
      %v507 = vmax.f32 %v443, 0.0
      %v508 = vmax.f32 %v444, 0.0
      %v509 = vmax.f32 %v445, 0.0
      %510 = vst [vmem:[%s226] sm:$0xff] %v446
      %511 = vst [vmem:[%s226 + $0x8] sm:$0xff] %v447
      %512 = vst [vmem:[%s226 + $0x10] sm:$0xff] %v448
      %513 = vst [vmem:[%s226 + $0x18] sm:$0xff] %v449
      %514 = vst [vmem:[%s226 + $0x20] sm:$0xff] %v450
      %515 = vst [vmem:[%s226 + $0x28] sm:$0xff] %v451
      %516 = vst [vmem:[%s226 + $0x30] sm:$0xff] %v452
      %517 = vst [vmem:[%s226 + $0x38] sm:$0xff] %v453
      %518 = vst [vmem:[%s226 + $0x40] sm:$0xff] %v454
      %519 = vst [vmem:[%s226 + $0x48] sm:$0xff] %v455
      %520 = vst [vmem:[%s226 + $0x50] sm:$0xff] %v456
      %521 = vst [vmem:[%s226 + $0x58] sm:$0xff] %v457
      %522 = vst [vmem:[%s226 + $0x60] sm:$0xff] %v458
      %523 = vst [vmem:[%s226 + $0x68] sm:$0xff] %v459
      %524 = vst [vmem:[%s226 + $0x70] sm:$0xff] %v460
      %525 = vst [vmem:[%s226 + $0x78] sm:$0xff] %v461
      %526 = vst [vmem:[%s226 + $0x80] sm:$0xff] %v462
      %527 = vst [vmem:[%s226 + $0x88] sm:$0xff] %v463
      %528 = vst [vmem:[%s226 + $0x90] sm:$0xff] %v464
      %529 = vst [vmem:[%s226 + $0x98] sm:$0xff] %v465
      %530 = vst [vmem:[%s226 + $0xa0] sm:$0xff] %v466
      %531 = vst [vmem:[%s226 + $0xa8] sm:$0xff] %v467
      %532 = vst [vmem:[%s226 + $0xb0] sm:$0xff] %v468
      %533 = vst [vmem:[%s226 + $0xb8] sm:$0xff] %v469
      %534 = vst [vmem:[%s226 + $0xc0] sm:$0xff] %v470
      %535 = vst [vmem:[%s226 + $0xc8] sm:$0xff] %v471
      %536 = vst [vmem:[%s226 + $0xd0] sm:$0xff] %v472
      %537 = vst [vmem:[%s226 + $0xd8] sm:$0xff] %v473
      %538 = vst [vmem:[%s226 + $0xe0] sm:$0xff] %v474
      %539 = vst [vmem:[%s226 + $0xe8] sm:$0xff] %v475
      %540 = vst [vmem:[%s226 + $0xf0] sm:$0xff] %v476
      %541 = vst [vmem:[%s226 + $0xf8] sm:$0xff] %v477
      %542 = vst [vmem:[%s226 + $0x100] sm:$0xff] %v478
      %543 = vst [vmem:[%s226 + $0x108] sm:$0xff] %v479
      %544 = vst [vmem:[%s226 + $0x110] sm:$0xff] %v480
      %545 = vst [vmem:[%s226 + $0x118] sm:$0xff] %v481
      %546 = vst [vmem:[%s226 + $0x120] sm:$0xff] %v482
      %547 = vst [vmem:[%s226 + $0x128] sm:$0xff] %v483
      %548 = vst [vmem:[%s226 + $0x130] sm:$0xff] %v484
      %549 = vst [vmem:[%s226 + $0x138] sm:$0xff] %v485
      %550 = vst [vmem:[%s226 + $0x140] sm:$0xff] %v486
      %551 = vst [vmem:[%s226 + $0x148] sm:$0xff] %v487
      %552 = vst [vmem:[%s226 + $0x150] sm:$0xff] %v488
      %553 = vst [vmem:[%s226 + $0x158] sm:$0xff] %v489
      %554 = vst [vmem:[%s226 + $0x160] sm:$0xff] %v490
      %555 = vst [vmem:[%s226 + $0x168] sm:$0xff] %v491
      %556 = vst [vmem:[%s226 + $0x170] sm:$0xff] %v492
      %557 = vst [vmem:[%s226 + $0x178] sm:$0xff] %v493
      %558 = vst [vmem:[%s226 + $0x180] sm:$0xff] %v494
      %559 = vst [vmem:[%s226 + $0x188] sm:$0xff] %v495
      %560 = vst [vmem:[%s226 + $0x190] sm:$0xff] %v496
      %561 = vst [vmem:[%s226 + $0x198] sm:$0xff] %v497
      %562 = vst [vmem:[%s226 + $0x1a0] sm:$0xff] %v498
      %563 = vst [vmem:[%s226 + $0x1a8] sm:$0xff] %v499
      %564 = vst [vmem:[%s226 + $0x1b0] sm:$0xff] %v500
      %565 = vst [vmem:[%s226 + $0x1b8] sm:$0xff] %v501
      %566 = vst [vmem:[%s226 + $0x1c0] sm:$0xff] %v502
      %567 = vst [vmem:[%s226 + $0x1c8] sm:$0xff] %v503
      %568 = vst [vmem:[%s226 + $0x1d0] sm:$0xff] %v504
      %569 = vst [vmem:[%s226 + $0x1d8] sm:$0xff] %v505
      %570 = vst [vmem:[%s226 + $0x1e0] sm:$0xff] %v506
      %571 = vst [vmem:[%s226 + $0x1e8] sm:$0xff] %v507
      %572 = vst [vmem:[%s226 + $0x1f0] sm:$0xff] %v508
      %573 = vst [vmem:[%s226 + $0x1f8] sm:$0xff] %v509
      %s574 = smul.u32 64, %s16
      %p575 = scmp.lt.s32.totalorder %s574, 255
      %s576 = scalar_select %p575, %s574, 255
      %s577 = smul.addr %s576, 8
      %s578 = scalar_lea.vmem %s5, %s577
      // Predicated region
      $region41: #{generator_forward.16} parent=39 // pred_check
        %p579 = pneg %p144
      $region42: #{generator_forward.16} parent=39 // pred_check_branch
        %581 = sbr.rel (%p579) target = $region44
      $region43: #{generator_forward.16} parent=39 // pred_region
        %s582 = smul.u32 64, %s16
      $region44: #{generator_forward.16} parent=39 // pred_fallthru
        _
    $region40: #{generator_forward.16} parent=5 // pred_fallthru
      _
    %p583 = scmp.le.s32.totalorder 2, %s11
    // Predicated region
    $region45: #{generator_forward.16} parent=5 // pred_check
      %p584 = pneg %p583
    $region46: #{generator_forward.16} parent=5 // pred_check_branch
      %586 = sbr.rel (%p584) target = $region48
    $region47: #{generator_forward.16} parent=5 // pred_region
      %s587 = ssub.s32 %s11, 2
      // Predicated region
      $region49: #{generator_forward.16} parent=47 // pred_check
        %p588 = pneg %p150
      $region50: #{generator_forward.16} parent=47 // pred_check_branch
        %590 = sbr.rel (%p588) target = $region52
      $region51: #{generator_forward.16} parent=47 // pred_region
        %s591 = smul.u32 64, %s17
        %p592 = scmp.lt.s32.totalorder %s591, 255
        %s593 = scalar_select %p592, %s591, 255
        %s594 = smul.addr %s593, 8
        %s595 = scalar_lea.vmem %s5, %s594
      $region52: #{generator_forward.16} parent=47 // pred_fallthru
        _
    $region48: #{generator_forward.16} parent=5 // pred_fallthru
      _
  $region6: #{generator_forward.16} parent=0 // loop_footer
    %s15 = sadd.s32 1, %s11
  $region7: #{generator_forward.16} parent=0 // loop_footer_branch
    %10 = sbr.rel target = $region3
  $region8: #{generator_forward.16} parent=0 // loop_exit
    _

// kernel: generator_forward.15
$region0: #{generator_forward.15}
  #allocation0 [shape = 'u32[]', space=smem, size = 0x4, offset = 0x4, fixed_abs, tag = 'smem constant byte address 0x4 - core index']
  #allocation1 [shape = 'u32[144,128]{1,0:T(1,128)}', space=vmem, size = 0x12000, scoped, tag = 'internal scratch']
  %s0 = inlined_call_operand.vmem [shape: bf16[4,512,32], index: 0, kind: input, shape index: {}]
  %s1 = inlined_call_operand.vmem [shape: bf16[4,32,128], index: 1, kind: input, shape index: {}]
  %s2 = inlined_call_operand.vmem [shape: f32[4,512,128], index: 2, kind: output, shape index: {0}]
  %s3 = inlined_call_operand.vmem [shape: f32[1,128], index: 3, kind: output, shape index: {1}]
  %s4 = inlined_call_operand.vmem [shape: f32[1,128], index: 4, kind: output, shape index: {2}]
  %5 = xla_tuple %s2, %s3, %s4
  %s6 = sld [smem:[#allocation0]]
  $region61: #{generator_forward.15} parent=0
    _
  %s8 = ssub.s32 1, %s6
  %s9 = scalar_select 0, %s8, %s6
  loop: start=0, step=1, limit=6
  $region2: #{generator_forward.15} parent=0 // loop_pre_header
    _
  $region3: #{generator_forward.15} parent=0 // loop_header
    %s11 = sphi 0, %s15
    %p12 = scmp.ge.s32.totalorder %s11, 6
    %s18 = sphi 0, %s30
    %s19 = sphi 0, %s26
    %s20 = sphi 0, %s18
    %s21 = sphi 0, %s19
    %s22 = sphi 0, %s20
    %s23 = sphi 0, %s21
    %s35 = sphi 0, %s37
    %s38 = sphi 0, %s35
    %s39 = sphi 0, %s38
    %s55 = sphi 0, %s39
    %s61 = sphi 0, %s63
    %s64 = sphi 0, %s61
    %s65 = sphi 0, %s64
    %s81 = sphi 0, %s65
    %s89 = sphi 0, %s91
    %s92 = sphi 0, %s89
    %s93 = sphi 0, %s92
    %s109 = sphi 0, %s93
    %s113 = sphi 0, %s113
    %s115 = sphi 0, %s113
    %s116 = sphi 0, %s115
    %s130 = sphi 0, %s116
    %s134 = sphi 0, %s134
    %s136 = sphi 0, %s134
    %s137 = sphi 0, %s136
    %s151 = sphi 0, %s137
  $region4: #{generator_forward.15} parent=0 // loop_header_branch
    %14 = sbr.rel (%p12) target = $region8
  $region5: #{generator_forward.15} parent=0 // loop_body
    %s16 = ssub.s32 %s11, 1
    %s17 = ssub.s32 %s11, 2
    %s24 = sadd.s32 1, %s19
    %p25 = scmp.ge.s32.totalorder %s24, 1
    %s26 = scalar_select %p25, 0, %s24
    %s27 = sadd.s32 1, %s18
    %s28 = scalar_select %p25, %s27, %s18
    %p29 = scmp.ge.s32.totalorder %s28, 4
    %s30 = scalar_select %p29, 0, %s28
    %s31 = ssub.s32 %s18, %s30
    %s32 = ssub.s32 %s19, %s26
    %s33 = sor.u32 %s31, %s32
    %p34 = scmp.eq.s32.totalorder %s33, 0
    %s36 = sadd.s32 %s35, 1
    %s37 = scalar_select %p34, %s35, %s36
    %p40 = pneg %p34
    %p41 = scmp.eq.s32.totalorder %s11, 3
    %p42 = por %p40, %p41
    %p43 = scmp.ne.s32.totalorder %s35, %s38
    %p44 = scmp.eq.s32.totalorder %s11, 0
    %p45 = por %p43, %p44
    %p46 = scmp.ne.s32.totalorder %s35, %s38
    %p47 = scmp.eq.s32.totalorder %s16, 3
    %p48 = por %p46, %p47
    %p49 = scmp.ne.s32.totalorder %s38, %s39
    %p50 = scmp.eq.s32.totalorder %s16, 0
    %p51 = por %p49, %p50
    %p52 = scmp.ne.s32.totalorder %s38, %s39
    %p53 = scmp.eq.s32.totalorder %s17, 3
    %p54 = por %p52, %p53
    %p56 = scmp.ne.s32.totalorder %s39, %s55
    %p57 = scmp.eq.s32.totalorder %s17, 0
    %p58 = por %p56, %p57
    %s59 = ssub.s32 %s18, %s30
    %p60 = scmp.eq.s32.totalorder %s59, 0
    %s62 = sadd.s32 %s61, 1
    %s63 = scalar_select %p60, %s61, %s62
    %p66 = pneg %p60
    %p67 = scmp.eq.s32.totalorder %s11, 3
    %p68 = por %p66, %p67
    %p69 = scmp.ne.s32.totalorder %s61, %s64
    %p70 = scmp.eq.s32.totalorder %s11, 0
    %p71 = por %p69, %p70
    %p72 = scmp.ne.s32.totalorder %s61, %s64
    %p73 = scmp.eq.s32.totalorder %s16, 3
    %p74 = por %p72, %p73
    %p75 = scmp.ne.s32.totalorder %s64, %s65
    %p76 = scmp.eq.s32.totalorder %s16, 0
    %p77 = por %p75, %p76
    %p78 = scmp.ne.s32.totalorder %s64, %s65
    %p79 = scmp.eq.s32.totalorder %s17, 3
    %p80 = por %p78, %p79
    %p82 = scmp.ne.s32.totalorder %s65, %s81
    %p83 = scmp.eq.s32.totalorder %s17, 0
    %p84 = por %p82, %p83
    %s85 = ssub.s32 %s18, %s30
    %s86 = ssub.s32 %s19, %s26
    %s87 = sor.u32 %s85, %s86
    %p88 = scmp.eq.s32.totalorder %s87, 0
    %s90 = sadd.s32 %s89, 1
    %s91 = scalar_select %p88, %s89, %s90
    %p94 = pneg %p88
    %p95 = scmp.eq.s32.totalorder %s11, 3
    %p96 = por %p94, %p95
    %p97 = scmp.ne.s32.totalorder %s89, %s92
    %p98 = scmp.eq.s32.totalorder %s11, 0
    %p99 = por %p97, %p98
    %p100 = scmp.ne.s32.totalorder %s89, %s92
    %p101 = scmp.eq.s32.totalorder %s16, 3
    %p102 = por %p100, %p101
    %p103 = scmp.ne.s32.totalorder %s92, %s93
    %p104 = scmp.eq.s32.totalorder %s16, 0
    %p105 = por %p103, %p104
    %p106 = scmp.ne.s32.totalorder %s92, %s93
    %p107 = scmp.eq.s32.totalorder %s17, 3
    %p108 = por %p106, %p107
    %p110 = scmp.ne.s32.totalorder %s93, %s109
    %p111 = scmp.eq.s32.totalorder %s17, 0
    %p112 = por %p110, %p111
    %s114 = sadd.s32 %s113, 1
    %p117 = scmp.eq.s32.totalorder %s11, 3
    %p118 = scmp.ne.s32.totalorder %s113, %s115
    %p119 = scmp.eq.s32.totalorder %s11, 0
    %p120 = por %p118, %p119
    %p121 = scmp.ne.s32.totalorder %s113, %s115
    %p122 = scmp.eq.s32.totalorder %s16, 3
    %p123 = por %p121, %p122
    %p124 = scmp.ne.s32.totalorder %s115, %s116
    %p125 = scmp.eq.s32.totalorder %s16, 0
    %p126 = por %p124, %p125
    %p127 = scmp.ne.s32.totalorder %s115, %s116
    %p128 = scmp.eq.s32.totalorder %s17, 3
    %p129 = por %p127, %p128
    %p131 = scmp.ne.s32.totalorder %s116, %s130
    %p132 = scmp.eq.s32.totalorder %s17, 0
    %p133 = por %p131, %p132
    %s135 = sadd.s32 %s134, 1
    %p138 = scmp.eq.s32.totalorder %s11, 3
    %p139 = scmp.ne.s32.totalorder %s134, %s136
    %p140 = scmp.eq.s32.totalorder %s11, 0
    %p141 = por %p139, %p140
    %p142 = scmp.ne.s32.totalorder %s134, %s136
    %p143 = scmp.eq.s32.totalorder %s16, 3
    %p144 = por %p142, %p143
    %p145 = scmp.ne.s32.totalorder %s136, %s137
    %p146 = scmp.eq.s32.totalorder %s16, 0
    %p147 = por %p145, %p146
    %p148 = scmp.ne.s32.totalorder %s136, %s137
    %p149 = scmp.eq.s32.totalorder %s17, 3
    %p150 = por %p148, %p149
    %p152 = scmp.ne.s32.totalorder %s137, %s151
    %p153 = scmp.eq.s32.totalorder %s17, 0
    %p154 = por %p152, %p153
    %p155 = scmp.le.s32.totalorder 1, %s11
    %p156 = scmp.lt.s32.totalorder %s11, 5
    %p157 = pnand %p155, %p156
    %p158 = pneg %p157
    // Predicated region
    $region9: #{generator_forward.15} parent=5 // pred_check
      _
    $region10: #{generator_forward.15} parent=5 // pred_check_branch
      %160 = sbr.rel (%p157) target = $region12
    $region11: #{generator_forward.15} parent=5 // pred_region
      %s161 = ssub.s32 %s11, 1
    $region12: #{generator_forward.15} parent=5 // pred_fallthru
      _
    %p162 = scmp.lt.s32.totalorder %s11, 4
    // Predicated region
    $region13: #{generator_forward.15} parent=5 // pred_check
      %p163 = pneg %p162
    $region14: #{generator_forward.15} parent=5 // pred_check_branch
      %165 = sbr.rel (%p163) target = $region16
    $region15: #{generator_forward.15} parent=5 // pred_region
      // Predicated region
      $region17: #{generator_forward.15} parent=15 // pred_check
        %p166 = pneg %p45
      $region18: #{generator_forward.15} parent=15 // pred_check_branch
        %168 = sbr.rel (%p166) target = $region20
      $region19: #{generator_forward.15} parent=15 // pred_region
        %s169 = smul.u32 64, %s19
        %p170 = scmp.lt.s32.totalorder %s18, 3
        %s171 = scalar_select %p170, %s18, 3
        %p172 = scmp.lt.s32.totalorder %s169, 63
        %s173 = scalar_select %p172, %s169, 63
        %s174 = smul.addr %s171, 64
        %s175 = sadd.s32 %s173, %s174
        %s176 = smul.addr %s175, 4
        %s177 = scalar_lea.vmem %s0, %s176
        %s178 = smul.u32 64, %s19
      $region20: #{generator_forward.15} parent=15 // pred_fallthru
        _
      // Predicated region
      $region21: #{generator_forward.15} parent=15 // pred_check
        %p179 = pneg %p71
      $region22: #{generator_forward.15} parent=15 // pred_check_branch
        %181 = sbr.rel (%p179) target = $region24
      $region23: #{generator_forward.15} parent=15 // pred_region
        %p182 = scmp.lt.s32.totalorder %s18, 3
        %s183 = scalar_select %p182, %s18, 3
        %s184 = smul.addr %s183, 4
        %s185 = smul.addr %s184, 4
        %s186 = scalar_lea.vmem %s1, %s185
      $region24: #{generator_forward.15} parent=15 // pred_fallthru
        _
    $region16: #{generator_forward.15} parent=5 // pred_fallthru
      _
    %p187 = scmp.le.s32.totalorder 1, %s11
    %p188 = scmp.lt.s32.totalorder %s11, 5
    %p189 = pnand %p187, %p188
    %p190 = pneg %p189
    // Predicated region
    $region25: #{generator_forward.15} parent=5 // pred_check
      _
    $region26: #{generator_forward.15} parent=5 // pred_check_branch
      %192 = sbr.rel (%p189) target = $region28
    $region27: #{generator_forward.15} parent=5 // pred_region
      %s193 = ssub.s32 %s11, 1
      %s194 = smul.u32 64, %s21
      %p195 = scmp.lt.s32.totalorder %s20, 3
      %s196 = scalar_select %p195, %s20, 3
      %p197 = scmp.lt.s32.totalorder %s194, 63
      %s198 = scalar_select %p197, %s194, 63
      %s199 = smul.addr %s196, 64
      %s200 = sadd.s32 %s198, %s199
      %s201 = smul.addr %s200, 4
      %s202 = scalar_lea.vmem %s0, %s201
      %p203 = pneg %p51
      %p204 = pneg %p48
      %p205 = scmp.lt.s32.totalorder %s20, 3
      %s206 = scalar_select %p205, %s20, 3
      %s207 = smul.addr %s206, 4
      %s208 = smul.addr %s207, 4
      %s209 = scalar_lea.vmem %s1, %s208
      %p210 = pneg %p77
      %p211 = pneg %p74
      %p212 = pneg %p105
      %p213 = pneg %p102
      %s214 = smul.u32 64, %s21
      %p215 = scmp.lt.s32.totalorder %s20, 3
      %s216 = scalar_select %p215, %s20, 3
      %p217 = scmp.lt.s32.totalorder %s214, 63
      %s218 = scalar_select %p217, %s214, 63
      %s219 = smul.addr %s216, 64
      %s220 = sadd.s32 %s218, %s219
      %s221 = smul.addr %s220, 8
      %s222 = scalar_lea.vmem %s2, %s221
      %p223 = pneg %p126
      %p224 = pneg %p123
      %p225 = pneg %p147
      %p226 = pneg %p144
      %s227 = smul.u32 64, %s21
      %p228 = scmp.lt.s32.totalorder %s20, 3
      %s229 = scalar_select %p228, %s20, 3
      %p230 = scmp.lt.s32.totalorder %s227, 63
      %s231 = scalar_select %p230, %s227, 63
      %s232 = smul.addr %s229, 64
      %s233 = sadd.s32 %s231, %s232
      %s234 = smul.addr %s233, 4
      %s235 = scalar_lea.vmem %s0, %s234
      %s236 = smul.u32 64, %s21
      %p237 = scmp.lt.s32.totalorder %s20, 3
      %s238 = scalar_select %p237, %s20, 3
      %s239 = smul.addr %s238, 4
      %s240 = smul.addr %s239, 4
      %s241 = scalar_lea.vmem %s1, %s240
      %s242 = smul.u32 64, %s21
      %p243 = scmp.lt.s32.totalorder %s20, 3
      %s244 = scalar_select %p243, %s20, 3
      %p245 = scmp.lt.s32.totalorder %s242, 63
      %s246 = scalar_select %p245, %s242, 63
      %s247 = smul.addr %s244, 64
      %s248 = sadd.s32 %s246, %s247
      %s249 = smul.addr %s248, 8
      %s250 = scalar_lea.vmem %s2, %s249
      %s251 = smul.u32 64, %s21
      %p253 = scmp.eq.s32.totalorder %s20, 0
      %p254 = scmp.eq.s32.totalorder %s21, 0
      %p255 = pnand %p253, %p254
      %p256 = pneg %p255
      // Predicated region
      $region29: #{generator_forward.15} parent=27 // pred_check
        _
      $region30: #{generator_forward.15} parent=27 // pred_check_branch
        %258 = sbr.rel (%p255) target = $region32
      $region31: #{generator_forward.15} parent=27 // pred_region
        %259 = vst [vmem:[%s3] sm:$0x1] 0.0
        %260 = vst [vmem:[%s4] sm:$0x1] 0.0
      $region32: #{generator_forward.15} parent=27 // pred_fallthru
        _
      %v261 = vld [vmem:[%s235] sm:$0xf]
      %v262 = vld [vmem:[%s235 + $0x4] sm:$0xf]
      %v263 = vld [vmem:[%s235 + $0x8] sm:$0xf]
      %v264 = vld [vmem:[%s235 + $0xc] sm:$0xf]
      %v265 = vld [vmem:[%s235 + $0x10] sm:$0xf]
      %v266 = vld [vmem:[%s235 + $0x14] sm:$0xf]
      %v267 = vld [vmem:[%s235 + $0x18] sm:$0xf]
      %v268 = vld [vmem:[%s235 + $0x1c] sm:$0xf]
      %v269 = vld [vmem:[%s235 + $0x20] sm:$0xf]
      %v270 = vld [vmem:[%s235 + $0x24] sm:$0xf]
      %v271 = vld [vmem:[%s235 + $0x28] sm:$0xf]
      %v272 = vld [vmem:[%s235 + $0x2c] sm:$0xf]
      %v273 = vld [vmem:[%s235 + $0x30] sm:$0xf]
      %v274 = vld [vmem:[%s235 + $0x34] sm:$0xf]
      %v275 = vld [vmem:[%s235 + $0x38] sm:$0xf]
      %v276 = vld [vmem:[%s235 + $0x3c] sm:$0xf]
      %v277 = vld [vmem:[%s235 + $0x40] sm:$0xf]
      %v278 = vld [vmem:[%s235 + $0x44] sm:$0xf]
      %v279 = vld [vmem:[%s235 + $0x48] sm:$0xf]
      %v280 = vld [vmem:[%s235 + $0x4c] sm:$0xf]
      %v281 = vld [vmem:[%s235 + $0x50] sm:$0xf]
      %v282 = vld [vmem:[%s235 + $0x54] sm:$0xf]
      %v283 = vld [vmem:[%s235 + $0x58] sm:$0xf]
      %v284 = vld [vmem:[%s235 + $0x5c] sm:$0xf]
      %v285 = vld [vmem:[%s235 + $0x60] sm:$0xf]
      %v286 = vld [vmem:[%s235 + $0x64] sm:$0xf]
      %v287 = vld [vmem:[%s235 + $0x68] sm:$0xf]
      %v288 = vld [vmem:[%s235 + $0x6c] sm:$0xf]
      %v289 = vld [vmem:[%s235 + $0x70] sm:$0xf]
      %v290 = vld [vmem:[%s235 + $0x74] sm:$0xf]
      %v291 = vld [vmem:[%s235 + $0x78] sm:$0xf]
      %v292 = vld [vmem:[%s235 + $0x7c] sm:$0xf]
      %v293 = vld [vmem:[%s235 + $0x80] sm:$0xf]
      %v294 = vld [vmem:[%s235 + $0x84] sm:$0xf]
      %v295 = vld [vmem:[%s235 + $0x88] sm:$0xf]
      %v296 = vld [vmem:[%s235 + $0x8c] sm:$0xf]
      %v297 = vld [vmem:[%s235 + $0x90] sm:$0xf]
      %v298 = vld [vmem:[%s235 + $0x94] sm:$0xf]
      %v299 = vld [vmem:[%s235 + $0x98] sm:$0xf]
      %v300 = vld [vmem:[%s235 + $0x9c] sm:$0xf]
      %v301 = vld [vmem:[%s235 + $0xa0] sm:$0xf]
      %v302 = vld [vmem:[%s235 + $0xa4] sm:$0xf]
      %v303 = vld [vmem:[%s235 + $0xa8] sm:$0xf]
      %v304 = vld [vmem:[%s235 + $0xac] sm:$0xf]
      %v305 = vld [vmem:[%s235 + $0xb0] sm:$0xf]
      %v306 = vld [vmem:[%s235 + $0xb4] sm:$0xf]
      %v307 = vld [vmem:[%s235 + $0xb8] sm:$0xf]
      %v308 = vld [vmem:[%s235 + $0xbc] sm:$0xf]
      %v309 = vld [vmem:[%s235 + $0xc0] sm:$0xf]
      %v310 = vld [vmem:[%s235 + $0xc4] sm:$0xf]
      %v311 = vld [vmem:[%s235 + $0xc8] sm:$0xf]
      %v312 = vld [vmem:[%s235 + $0xcc] sm:$0xf]
      %v313 = vld [vmem:[%s235 + $0xd0] sm:$0xf]
      %v314 = vld [vmem:[%s235 + $0xd4] sm:$0xf]
      %v315 = vld [vmem:[%s235 + $0xd8] sm:$0xf]
      %v316 = vld [vmem:[%s235 + $0xdc] sm:$0xf]
      %v317 = vld [vmem:[%s235 + $0xe0] sm:$0xf]
      %v318 = vld [vmem:[%s235 + $0xe4] sm:$0xf]
      %v319 = vld [vmem:[%s235 + $0xe8] sm:$0xf]
      %v320 = vld [vmem:[%s235 + $0xec] sm:$0xf]
      %v321 = vld [vmem:[%s235 + $0xf0] sm:$0xf]
      %v322 = vld [vmem:[%s235 + $0xf4] sm:$0xf]
      %v323 = vld [vmem:[%s235 + $0xf8] sm:$0xf]
      %v324 = vld [vmem:[%s235 + $0xfc] sm:$0xf]
      %v325 = vld [vmem:[%s241] sm:$0xf]
      %v326 = vld [vmem:[%s241 + $0x4] sm:$0xf]
      %v327 = vld [vmem:[%s241 + $0x8] sm:$0xf]
      %v328 = vld [vmem:[%s241 + $0xc] sm:$0xf]
      %v393 = vunpack.c.l.b16 %v261
      %v394 = vunpack.c.l.b16 %v262
      %v395 = vunpack.c.l.b16 %v263
      %v396 = vunpack.c.l.b16 %v264
      %v397 = vunpack.c.l.b16 %v265
      %v398 = vunpack.c.l.b16 %v266
      %v399 = vunpack.c.l.b16 %v267
      %v400 = vunpack.c.l.b16 %v268
      %v401 = vunpack.c.l.b16 %v269
      %v402 = vunpack.c.l.b16 %v270
      %v403 = vunpack.c.l.b16 %v271
      %v404 = vunpack.c.l.b16 %v272
      %v405 = vunpack.c.l.b16 %v273
      %v406 = vunpack.c.l.b16 %v274
      %v407 = vunpack.c.l.b16 %v275
      %v408 = vunpack.c.l.b16 %v276
      %v409 = vunpack.c.l.b16 %v277
      %v410 = vunpack.c.l.b16 %v278
      %v411 = vunpack.c.l.b16 %v279
      %v412 = vunpack.c.l.b16 %v280
      %v413 = vunpack.c.l.b16 %v281
      %v414 = vunpack.c.l.b16 %v282
      %v415 = vunpack.c.l.b16 %v283
      %v416 = vunpack.c.l.b16 %v284
      %v417 = vunpack.c.l.b16 %v285
      %v418 = vunpack.c.l.b16 %v286
      %v419 = vunpack.c.l.b16 %v287
      %v420 = vunpack.c.l.b16 %v288
      %v421 = vunpack.c.l.b16 %v289
      %v422 = vunpack.c.l.b16 %v290
      %v423 = vunpack.c.l.b16 %v291
      %v424 = vunpack.c.l.b16 %v292
      %v425 = vunpack.c.l.b16 %v293
      %v426 = vunpack.c.l.b16 %v294
      %v427 = vunpack.c.l.b16 %v295
      %v428 = vunpack.c.l.b16 %v296
      %v429 = vunpack.c.l.b16 %v297
      %v430 = vunpack.c.l.b16 %v298
      %v431 = vunpack.c.l.b16 %v299
      %v432 = vunpack.c.l.b16 %v300
      %v433 = vunpack.c.l.b16 %v301
      %v434 = vunpack.c.l.b16 %v302
      %v435 = vunpack.c.l.b16 %v303
      %v436 = vunpack.c.l.b16 %v304
      %v437 = vunpack.c.l.b16 %v305
      %v438 = vunpack.c.l.b16 %v306
      %v439 = vunpack.c.l.b16 %v307
      %v440 = vunpack.c.l.b16 %v308
      %v441 = vunpack.c.l.b16 %v309
      %v442 = vunpack.c.l.b16 %v310
      %v443 = vunpack.c.l.b16 %v311
      %v444 = vunpack.c.l.b16 %v312
      %v445 = vunpack.c.l.b16 %v313
      %v446 = vunpack.c.l.b16 %v314
      %v447 = vunpack.c.l.b16 %v315
      %v448 = vunpack.c.l.b16 %v316
      %v449 = vunpack.c.l.b16 %v317
      %v450 = vunpack.c.l.b16 %v318
      %v451 = vunpack.c.l.b16 %v319
      %v452 = vunpack.c.l.b16 %v320
      %v453 = vunpack.c.l.b16 %v321
      %v454 = vunpack.c.l.b16 %v322
      %v455 = vunpack.c.l.b16 %v323
      %v456 = vunpack.c.l.b16 %v324
      %v457 = vpack.c.b16 %v394, %v393
      %v458 = vpack.c.b16 %v396, %v395
      %v459 = vpack.c.b16 %v398, %v397
      %v460 = vpack.c.b16 %v400, %v399
      %v461 = vpack.c.b16 %v402, %v401
      %v462 = vpack.c.b16 %v404, %v403
      %v463 = vpack.c.b16 %v406, %v405
      %v464 = vpack.c.b16 %v408, %v407
      %v465 = vpack.c.b16 %v410, %v409
      %v466 = vpack.c.b16 %v412, %v411
      %v467 = vpack.c.b16 %v414, %v413
      %v468 = vpack.c.b16 %v416, %v415
      %v469 = vpack.c.b16 %v418, %v417
      %v470 = vpack.c.b16 %v420, %v419
      %v471 = vpack.c.b16 %v422, %v421
      %v472 = vpack.c.b16 %v424, %v423
      %v473 = vpack.c.b16 %v426, %v425
      %v474 = vpack.c.b16 %v428, %v427
      %v475 = vpack.c.b16 %v430, %v429
      %v476 = vpack.c.b16 %v432, %v431
      %v477 = vpack.c.b16 %v434, %v433
      %v478 = vpack.c.b16 %v436, %v435
      %v479 = vpack.c.b16 %v438, %v437
      %v480 = vpack.c.b16 %v440, %v439
      %v481 = vpack.c.b16 %v442, %v441
      %v482 = vpack.c.b16 %v444, %v443
      %v483 = vpack.c.b16 %v446, %v445
      %v484 = vpack.c.b16 %v448, %v447
      %v485 = vpack.c.b16 %v450, %v449
      %v486 = vpack.c.b16 %v452, %v451
      %v487 = vpack.c.b16 %v454, %v453
      %v488 = vpack.c.b16 %v456, %v455
      %v493 = vunpack.c.l.b16 %v325
      %v494 = vunpack.c.l.b16 %v326
      %v495 = vunpack.c.l.b16 %v327
      %v496 = vunpack.c.l.b16 %v328
      %v497 = vpack.c.b16 %v494, %v493
      %v498 = vpack.c.b16 %v496, %v495
      %vm501 = vcmask 261120
      %v503 = vsel %vm501, %v457, 0
      %v506 = vsel %vm501, %v458, 0
      %v509 = vsel %vm501, %v459, 0
      %v512 = vsel %vm501, %v460, 0
      %v515 = vsel %vm501, %v461, 0
      %v518 = vsel %vm501, %v462, 0
      %v521 = vsel %vm501, %v463, 0
      %v524 = vsel %vm501, %v464, 0
      %v527 = vsel %vm501, %v465, 0
      %v530 = vsel %vm501, %v466, 0
      %v533 = vsel %vm501, %v467, 0
      %v536 = vsel %vm501, %v468, 0
      %v539 = vsel %vm501, %v469, 0
      %v542 = vsel %vm501, %v470, 0
      %v545 = vsel %vm501, %v471, 0
      %v548 = vsel %vm501, %v472, 0
      %v551 = vsel %vm501, %v473, 0
      %v554 = vsel %vm501, %v474, 0
      %v557 = vsel %vm501, %v475, 0
      %v560 = vsel %vm501, %v476, 0
      %v563 = vsel %vm501, %v477, 0
      %v566 = vsel %vm501, %v478, 0
      %v569 = vsel %vm501, %v479, 0
      %v572 = vsel %vm501, %v480, 0
      %v575 = vsel %vm501, %v481, 0
      %v578 = vsel %vm501, %v482, 0
      %v581 = vsel %vm501, %v483, 0
      %v584 = vsel %vm501, %v484, 0
      %v587 = vsel %vm501, %v485, 0
      %v590 = vsel %vm501, %v486, 0
      %v593 = vsel %vm501, %v487, 0
      %v596 = vsel %vm501, %v488, 0
      %598 = vmatprep.subr.bf16.mxu0 0
      %599 = vmatpush1.bf16.msra.mxu0 %v497
      %600 = vmatprep.subr.bf16.mxu0 0
      %601 = vmatpush1.bf16.msra.mxu0 %v498
      %602 = vmatprep.subr.bf16.mxu0 0
      %603 = vmatpush1.bf16.msra.mxu0 0
      %604 = vmatprep.subr.bf16.mxu0 0
      %605 = vmatpush1.bf16.msra.mxu0 0
      %606 = vmatprep.subr.bf16.mxu0 0
      %607 = vmatpush1.bf16.msra.mxu0 0
      %608 = vmatprep.subr.bf16.mxu0 0
      %609 = vmatpush1.bf16.msra.mxu0 0
      %610 = vmatprep.subr.bf16.mxu0 0
      %611 = vmatpush1.bf16.msra.mxu0 0
      %612 = vmatprep.subr.bf16.mxu0 0
      %613 = vmatpush1.bf16.msra.mxu0 0
      %614 = vmatprep.subr.bf16.mxu0 0
      %615 = vmatpush1.bf16.msra.mxu0 0
      %616 = vmatprep.subr.bf16.mxu0 0
      %617 = vmatpush1.bf16.msra.mxu0 0
      %618 = vmatprep.subr.bf16.mxu0 0
      %619 = vmatpush1.bf16.msra.mxu0 0
      %620 = vmatprep.subr.bf16.mxu0 0
      %621 = vmatpush1.bf16.msra.mxu0 0
      %622 = vmatprep.subr.bf16.mxu0 0
      %623 = vmatpush1.bf16.msra.mxu0 0
      %624 = vmatprep.subr.bf16.mxu0 0
      %625 = vmatpush1.bf16.msra.mxu0 0
      %626 = vmatprep.subr.bf16.mxu0 0
      %627 = vmatpush1.bf16.msra.mxu0 0
      %628 = vmatprep.subr.bf16.mxu0 0
      %629 = vmatpush1.bf16.msra.mxu0 0
      %630 = vmatprep.mubr.bf16.mxu0 0
      %631 = vmatmul.mubr.bf16.gmra.mrb[0].mxu0 %v503
      %v632 = vpop.f32.mrb[0].mxu0
      %v633 = vadd.f32 0.0, %v632
      %v634 = vpop.f32.mrb[0].mxu0
      %v635 = vpop.f32.mrb[0].mxu0
      %v636 = vadd.f32 0.0, %v635
      %v637 = vpop.f32.mrb[0].mxu0
      %638 = vmatprep.mubr.bf16.mxu0 0
      %639 = vmatmul.mubr.bf16.gmra.mrb[0].mxu0 %v506
      %v640 = vpop.f32.mrb[0].mxu0
      %v641 = vadd.f32 0.0, %v640
      %v642 = vpop.f32.mrb[0].mxu0
      %v643 = vpop.f32.mrb[0].mxu0
      %v644 = vadd.f32 0.0, %v643
      %v645 = vpop.f32.mrb[0].mxu0
      %646 = vmatprep.mubr.bf16.mxu0 0
      %647 = vmatmul.mubr.bf16.gmra.mrb[0].mxu0 %v509
      %v648 = vpop.f32.mrb[0].mxu0
      %v649 = vadd.f32 0.0, %v648
      %v650 = vpop.f32.mrb[0].mxu0
      %v651 = vpop.f32.mrb[0].mxu0
      %v652 = vadd.f32 0.0, %v651
      %v653 = vpop.f32.mrb[0].mxu0
      %654 = vmatprep.mubr.bf16.mxu0 0
      %655 = vmatmul.mubr.bf16.gmra.mrb[0].mxu0 %v512
      %v656 = vpop.f32.mrb[0].mxu0
      %v657 = vadd.f32 0.0, %v656
      %v658 = vpop.f32.mrb[0].mxu0
      %v659 = vpop.f32.mrb[0].mxu0
      %v660 = vadd.f32 0.0, %v659
      %v661 = vpop.f32.mrb[0].mxu0
      %662 = vmatprep.mubr.bf16.mxu0 0
      %663 = vmatmul.mubr.bf16.gmra.mrb[0].mxu0 %v515
      %v664 = vpop.f32.mrb[0].mxu0
      %v665 = vadd.f32 0.0, %v664
      %v666 = vpop.f32.mrb[0].mxu0
      %v667 = vpop.f32.mrb[0].mxu0
      %v668 = vadd.f32 0.0, %v667
      %v669 = vpop.f32.mrb[0].mxu0
      %670 = vmatprep.mubr.bf16.mxu0 0
      %671 = vmatmul.mubr.bf16.gmra.mrb[0].mxu0 %v518
      %v672 = vpop.f32.mrb[0].mxu0
      %v673 = vadd.f32 0.0, %v672
      %v674 = vpop.f32.mrb[0].mxu0
      %v675 = vpop.f32.mrb[0].mxu0
      %v676 = vadd.f32 0.0, %v675
      %v677 = vpop.f32.mrb[0].mxu0
      %678 = vmatprep.mubr.bf16.mxu0 0
      %679 = vmatmul.mubr.bf16.gmra.mrb[0].mxu0 %v521
      %v680 = vpop.f32.mrb[0].mxu0
      %v681 = vadd.f32 0.0, %v680
      %v682 = vpop.f32.mrb[0].mxu0
      %v683 = vpop.f32.mrb[0].mxu0
      %v684 = vadd.f32 0.0, %v683
      %v685 = vpop.f32.mrb[0].mxu0
      %686 = vmatprep.mubr.bf16.mxu0 0
      %687 = vmatmul.mubr.bf16.gmra.mrb[0].mxu0 %v524
      %v688 = vpop.f32.mrb[0].mxu0
      %v689 = vadd.f32 0.0, %v688
      %v690 = vpop.f32.mrb[0].mxu0
      %v691 = vpop.f32.mrb[0].mxu0
      %v692 = vadd.f32 0.0, %v691
      %v693 = vpop.f32.mrb[0].mxu0
      %694 = vmatprep.mubr.bf16.mxu0 0
      %695 = vmatmul.mubr.bf16.gmra.mrb[0].mxu0 %v527
      %v696 = vpop.f32.mrb[0].mxu0
      %v697 = vadd.f32 0.0, %v696
      %v698 = vpop.f32.mrb[0].mxu0
      %v699 = vpop.f32.mrb[0].mxu0
      %v700 = vadd.f32 0.0, %v699
      %v701 = vpop.f32.mrb[0].mxu0
      %702 = vmatprep.mubr.bf16.mxu0 0
      %703 = vmatmul.mubr.bf16.gmra.mrb[0].mxu0 %v530
      %v704 = vpop.f32.mrb[0].mxu0
      %v705 = vadd.f32 0.0, %v704
      %v706 = vpop.f32.mrb[0].mxu0
      %v707 = vpop.f32.mrb[0].mxu0
      %v708 = vadd.f32 0.0, %v707
      %v709 = vpop.f32.mrb[0].mxu0
      %710 = vmatprep.mubr.bf16.mxu0 0
      %711 = vmatmul.mubr.bf16.gmra.mrb[0].mxu0 %v533
      %v712 = vpop.f32.mrb[0].mxu0
      %v713 = vadd.f32 0.0, %v712
      %v714 = vpop.f32.mrb[0].mxu0
      %v715 = vpop.f32.mrb[0].mxu0
      %v716 = vadd.f32 0.0, %v715
      %v717 = vpop.f32.mrb[0].mxu0
      %718 = vmatprep.mubr.bf16.mxu0 0
      %719 = vmatmul.mubr.bf16.gmra.mrb[0].mxu0 %v536
      %v720 = vpop.f32.mrb[0].mxu0
      %v721 = vadd.f32 0.0, %v720
      %v722 = vpop.f32.mrb[0].mxu0
      %v723 = vpop.f32.mrb[0].mxu0
      %v724 = vadd.f32 0.0, %v723
      %v725 = vpop.f32.mrb[0].mxu0
      %726 = vmatprep.mubr.bf16.mxu0 0
      %727 = vmatmul.mubr.bf16.gmra.mrb[0].mxu0 %v539
      %v728 = vpop.f32.mrb[0].mxu0
      %v729 = vadd.f32 0.0, %v728
      %v730 = vpop.f32.mrb[0].mxu0
      %v731 = vpop.f32.mrb[0].mxu0
      %v732 = vadd.f32 0.0, %v731
      %v733 = vpop.f32.mrb[0].mxu0
      %734 = vmatprep.mubr.bf16.mxu0 0
      %735 = vmatmul.mubr.bf16.gmra.mrb[0].mxu0 %v542
      %v736 = vpop.f32.mrb[0].mxu0
      %v737 = vadd.f32 0.0, %v736
      %v738 = vpop.f32.mrb[0].mxu0
      %v739 = vpop.f32.mrb[0].mxu0
      %v740 = vadd.f32 0.0, %v739
      %v741 = vpop.f32.mrb[0].mxu0
      %742 = vmatprep.mubr.bf16.mxu0 0
      %743 = vmatmul.mubr.bf16.gmra.mrb[0].mxu0 %v545
      %v744 = vpop.f32.mrb[0].mxu0
      %v745 = vadd.f32 0.0, %v744
      %v746 = vpop.f32.mrb[0].mxu0
      %v747 = vpop.f32.mrb[0].mxu0
      %v748 = vadd.f32 0.0, %v747
      %v749 = vpop.f32.mrb[0].mxu0
      %750 = vmatprep.mubr.bf16.mxu0 0
      %751 = vmatmul.mubr.bf16.gmra.mrb[0].mxu0 %v548
      %v752 = vpop.f32.mrb[0].mxu0
      %v753 = vadd.f32 0.0, %v752
      %v754 = vpop.f32.mrb[0].mxu0
      %v755 = vpop.f32.mrb[0].mxu0
      %v756 = vadd.f32 0.0, %v755
      %v757 = vpop.f32.mrb[0].mxu0
      %758 = vmatprep.mubr.bf16.mxu0 0
      %759 = vmatmul.mubr.bf16.gmra.mrb[0].mxu0 %v551
      %v760 = vpop.f32.mrb[0].mxu0
      %v761 = vadd.f32 0.0, %v760
      %v762 = vpop.f32.mrb[0].mxu0
      %v763 = vpop.f32.mrb[0].mxu0
      %v764 = vadd.f32 0.0, %v763
      %v765 = vpop.f32.mrb[0].mxu0
      %766 = vmatprep.mubr.bf16.mxu0 0
      %767 = vmatmul.mubr.bf16.gmra.mrb[0].mxu0 %v554
      %v768 = vpop.f32.mrb[0].mxu0
      %v769 = vadd.f32 0.0, %v768
      %v770 = vpop.f32.mrb[0].mxu0
      %v771 = vpop.f32.mrb[0].mxu0
      %v772 = vadd.f32 0.0, %v771
      %v773 = vpop.f32.mrb[0].mxu0
      %774 = vmatprep.mubr.bf16.mxu0 0
      %775 = vmatmul.mubr.bf16.gmra.mrb[0].mxu0 %v557
      %v776 = vpop.f32.mrb[0].mxu0
      %v777 = vadd.f32 0.0, %v776
      %v778 = vpop.f32.mrb[0].mxu0
      %v779 = vpop.f32.mrb[0].mxu0
      %v780 = vadd.f32 0.0, %v779
      %v781 = vpop.f32.mrb[0].mxu0
      %782 = vmatprep.mubr.bf16.mxu0 0
      %783 = vmatmul.mubr.bf16.gmra.mrb[0].mxu0 %v560
      %v784 = vpop.f32.mrb[0].mxu0
      %v785 = vadd.f32 0.0, %v784
      %v786 = vpop.f32.mrb[0].mxu0
      %v787 = vpop.f32.mrb[0].mxu0
      %v788 = vadd.f32 0.0, %v787
      %v789 = vpop.f32.mrb[0].mxu0
      %790 = vmatprep.mubr.bf16.mxu0 0
      %791 = vmatmul.mubr.bf16.gmra.mrb[0].mxu0 %v563
      %v792 = vpop.f32.mrb[0].mxu0
      %v793 = vadd.f32 0.0, %v792
      %v794 = vpop.f32.mrb[0].mxu0
      %v795 = vpop.f32.mrb[0].mxu0
      %v796 = vadd.f32 0.0, %v795
      %v797 = vpop.f32.mrb[0].mxu0
      %798 = vmatprep.mubr.bf16.mxu0 0
      %799 = vmatmul.mubr.bf16.gmra.mrb[0].mxu0 %v566
      %v800 = vpop.f32.mrb[0].mxu0
      %v801 = vadd.f32 0.0, %v800
      %v802 = vpop.f32.mrb[0].mxu0
      %v803 = vpop.f32.mrb[0].mxu0
      %v804 = vadd.f32 0.0, %v803
      %v805 = vpop.f32.mrb[0].mxu0
      %806 = vmatprep.mubr.bf16.mxu0 0
      %807 = vmatmul.mubr.bf16.gmra.mrb[0].mxu0 %v569
      %v808 = vpop.f32.mrb[0].mxu0
      %v809 = vadd.f32 0.0, %v808
      %v810 = vpop.f32.mrb[0].mxu0
      %v811 = vpop.f32.mrb[0].mxu0
      %v812 = vadd.f32 0.0, %v811
      %v813 = vpop.f32.mrb[0].mxu0
      %814 = vmatprep.mubr.bf16.mxu0 0
      %815 = vmatmul.mubr.bf16.gmra.mrb[0].mxu0 %v572
      %v816 = vpop.f32.mrb[0].mxu0
      %v817 = vadd.f32 0.0, %v816
      %v818 = vpop.f32.mrb[0].mxu0
      %v819 = vpop.f32.mrb[0].mxu0
      %v820 = vadd.f32 0.0, %v819
      %v821 = vpop.f32.mrb[0].mxu0
      %822 = vmatprep.mubr.bf16.mxu0 0
      %823 = vmatmul.mubr.bf16.gmra.mrb[0].mxu0 %v575
      %v824 = vpop.f32.mrb[0].mxu0
      %v825 = vadd.f32 0.0, %v824
      %v826 = vpop.f32.mrb[0].mxu0
      %v827 = vpop.f32.mrb[0].mxu0
      %v828 = vadd.f32 0.0, %v827
      %v829 = vpop.f32.mrb[0].mxu0
      %830 = vmatprep.mubr.bf16.mxu0 0
      %831 = vmatmul.mubr.bf16.gmra.mrb[0].mxu0 %v578
      %v832 = vpop.f32.mrb[0].mxu0
      %v833 = vadd.f32 0.0, %v832
      %v834 = vpop.f32.mrb[0].mxu0
      %v835 = vpop.f32.mrb[0].mxu0
      %v836 = vadd.f32 0.0, %v835
      %v837 = vpop.f32.mrb[0].mxu0
      %838 = vmatprep.mubr.bf16.mxu0 0
      %839 = vmatmul.mubr.bf16.gmra.mrb[0].mxu0 %v581
      %v840 = vpop.f32.mrb[0].mxu0
      %v841 = vadd.f32 0.0, %v840
      %v842 = vpop.f32.mrb[0].mxu0
      %v843 = vpop.f32.mrb[0].mxu0
      %v844 = vadd.f32 0.0, %v843
      %v845 = vpop.f32.mrb[0].mxu0
      %846 = vmatprep.mubr.bf16.mxu0 0
      %847 = vmatmul.mubr.bf16.gmra.mrb[0].mxu0 %v584
      %v848 = vpop.f32.mrb[0].mxu0
      %v849 = vadd.f32 0.0, %v848
      %v850 = vpop.f32.mrb[0].mxu0
      %v851 = vpop.f32.mrb[0].mxu0
      %v852 = vadd.f32 0.0, %v851
      %v853 = vpop.f32.mrb[0].mxu0
      %854 = vmatprep.mubr.bf16.mxu0 0
      %855 = vmatmul.mubr.bf16.gmra.mrb[0].mxu0 %v587
      %v856 = vpop.f32.mrb[0].mxu0
      %v857 = vadd.f32 0.0, %v856
      %v858 = vpop.f32.mrb[0].mxu0
      %v859 = vpop.f32.mrb[0].mxu0
      %v860 = vadd.f32 0.0, %v859
      %v861 = vpop.f32.mrb[0].mxu0
      %862 = vmatprep.mubr.bf16.mxu0 0
      %863 = vmatmul.mubr.bf16.gmra.mrb[0].mxu0 %v590
      %v864 = vpop.f32.mrb[0].mxu0
      %v865 = vadd.f32 0.0, %v864
      %v866 = vpop.f32.mrb[0].mxu0
      %v867 = vpop.f32.mrb[0].mxu0
      %v868 = vadd.f32 0.0, %v867
      %v869 = vpop.f32.mrb[0].mxu0
      %870 = vmatprep.mubr.bf16.mxu0 0
      %871 = vmatmul.mubr.bf16.gmra.mrb[0].mxu0 %v593
      %v872 = vpop.f32.mrb[0].mxu0
      %v873 = vadd.f32 0.0, %v872
      %v874 = vpop.f32.mrb[0].mxu0
      %v875 = vpop.f32.mrb[0].mxu0
      %v876 = vadd.f32 0.0, %v875
      %v877 = vpop.f32.mrb[0].mxu0
      %878 = vmatprep.mubr.bf16.mxu0 0
      %879 = vmatmul.mubr.bf16.gmra.mrb[0].mxu0 %v596
      %v880 = vpop.f32.mrb[0].mxu0
      %v881 = vadd.f32 0.0, %v880
      %v882 = vpop.f32.mrb[0].mxu0
      %v883 = vpop.f32.mrb[0].mxu0
      %v884 = vadd.f32 0.0, %v883
      %v885 = vpop.f32.mrb[0].mxu0
      %886 = vdwg.mxu0
      %887 = vst [vmem:[%s250] sm:$0xff] %v633
      %888 = vst [vmem:[%s250 + $0x8] sm:$0xff] %v636
      %889 = vst [vmem:[%s250 + $0x10] sm:$0xff] %v641
      %890 = vst [vmem:[%s250 + $0x18] sm:$0xff] %v644
      %891 = vst [vmem:[%s250 + $0x20] sm:$0xff] %v649
      %892 = vst [vmem:[%s250 + $0x28] sm:$0xff] %v652
      %893 = vst [vmem:[%s250 + $0x30] sm:$0xff] %v657
      %894 = vst [vmem:[%s250 + $0x38] sm:$0xff] %v660
      %895 = vst [vmem:[%s250 + $0x40] sm:$0xff] %v665
      %896 = vst [vmem:[%s250 + $0x48] sm:$0xff] %v668
      %897 = vst [vmem:[%s250 + $0x50] sm:$0xff] %v673
      %898 = vst [vmem:[%s250 + $0x58] sm:$0xff] %v676
      %899 = vst [vmem:[%s250 + $0x60] sm:$0xff] %v681
      %900 = vst [vmem:[%s250 + $0x68] sm:$0xff] %v684
      %901 = vst [vmem:[%s250 + $0x70] sm:$0xff] %v689
      %902 = vst [vmem:[%s250 + $0x78] sm:$0xff] %v692
      %903 = vst [vmem:[%s250 + $0x80] sm:$0xff] %v697
      %904 = vst [vmem:[%s250 + $0x88] sm:$0xff] %v700
      %905 = vst [vmem:[%s250 + $0x90] sm:$0xff] %v705
      %906 = vst [vmem:[%s250 + $0x98] sm:$0xff] %v708
      %907 = vst [vmem:[%s250 + $0xa0] sm:$0xff] %v713
      %908 = vst [vmem:[%s250 + $0xa8] sm:$0xff] %v716
      %909 = vst [vmem:[%s250 + $0xb0] sm:$0xff] %v721
      %910 = vst [vmem:[%s250 + $0xb8] sm:$0xff] %v724
      %911 = vst [vmem:[%s250 + $0xc0] sm:$0xff] %v729
      %912 = vst [vmem:[%s250 + $0xc8] sm:$0xff] %v732
      %913 = vst [vmem:[%s250 + $0xd0] sm:$0xff] %v737
      %914 = vst [vmem:[%s250 + $0xd8] sm:$0xff] %v740
      %915 = vst [vmem:[%s250 + $0xe0] sm:$0xff] %v745
      %916 = vst [vmem:[%s250 + $0xe8] sm:$0xff] %v748
      %917 = vst [vmem:[%s250 + $0xf0] sm:$0xff] %v753
      %918 = vst [vmem:[%s250 + $0xf8] sm:$0xff] %v756
      %919 = vst [vmem:[%s250 + $0x100] sm:$0xff] %v761
      %920 = vst [vmem:[%s250 + $0x108] sm:$0xff] %v764
      %921 = vst [vmem:[%s250 + $0x110] sm:$0xff] %v769
      %922 = vst [vmem:[%s250 + $0x118] sm:$0xff] %v772
      %923 = vst [vmem:[%s250 + $0x120] sm:$0xff] %v777
      %924 = vst [vmem:[%s250 + $0x128] sm:$0xff] %v780
      %925 = vst [vmem:[%s250 + $0x130] sm:$0xff] %v785
      %926 = vst [vmem:[%s250 + $0x138] sm:$0xff] %v788
      %927 = vst [vmem:[%s250 + $0x140] sm:$0xff] %v793
      %928 = vst [vmem:[%s250 + $0x148] sm:$0xff] %v796
      %929 = vst [vmem:[%s250 + $0x150] sm:$0xff] %v801
      %930 = vst [vmem:[%s250 + $0x158] sm:$0xff] %v804
      %931 = vst [vmem:[%s250 + $0x160] sm:$0xff] %v809
      %932 = vst [vmem:[%s250 + $0x168] sm:$0xff] %v812
      %933 = vst [vmem:[%s250 + $0x170] sm:$0xff] %v817
      %934 = vst [vmem:[%s250 + $0x178] sm:$0xff] %v820
      %935 = vst [vmem:[%s250 + $0x180] sm:$0xff] %v825
      %936 = vst [vmem:[%s250 + $0x188] sm:$0xff] %v828
      %937 = vst [vmem:[%s250 + $0x190] sm:$0xff] %v833
      %938 = vst [vmem:[%s250 + $0x198] sm:$0xff] %v836
      %939 = vst [vmem:[%s250 + $0x1a0] sm:$0xff] %v841
      %940 = vst [vmem:[%s250 + $0x1a8] sm:$0xff] %v844
      %941 = vst [vmem:[%s250 + $0x1b0] sm:$0xff] %v849
      %942 = vst [vmem:[%s250 + $0x1b8] sm:$0xff] %v852
      %943 = vst [vmem:[%s250 + $0x1c0] sm:$0xff] %v857
      %944 = vst [vmem:[%s250 + $0x1c8] sm:$0xff] %v860
      %945 = vst [vmem:[%s250 + $0x1d0] sm:$0xff] %v865
      %946 = vst [vmem:[%s250 + $0x1d8] sm:$0xff] %v868
      %947 = vst [vmem:[%s250 + $0x1e0] sm:$0xff] %v873
      %948 = vst [vmem:[%s250 + $0x1e8] sm:$0xff] %v876
      %949 = vst [vmem:[%s250 + $0x1f0] sm:$0xff] %v881
      %950 = vst [vmem:[%s250 + $0x1f8] sm:$0xff] %v884
      %v951 = vld [vmem:[%s3] sm:$0x1]
      %v952 = vadd.f32 %v633, %v636
      %v953 = vadd.f32 %v952, %v641
      %v954 = vadd.f32 %v953, %v644
      %v955 = vadd.f32 %v954, %v649
      %v956 = vadd.f32 %v955, %v652
      %v957 = vadd.f32 %v956, %v657
      %v958 = vadd.f32 %v957, %v660
      %v959 = vadd.f32 %v958, %v665
      %v960 = vadd.f32 %v959, %v668
      %v961 = vadd.f32 %v960, %v673
      %v962 = vadd.f32 %v961, %v676
      %v963 = vadd.f32 %v962, %v681
      %v964 = vadd.f32 %v963, %v684
      %v965 = vadd.f32 %v964, %v689
      %v966 = vadd.f32 %v965, %v692
      %v967 = vadd.f32 %v966, %v697
      %v968 = vadd.f32 %v967, %v700
      %v969 = vadd.f32 %v968, %v705
      %v970 = vadd.f32 %v969, %v708
      %v971 = vadd.f32 %v970, %v713
      %v972 = vadd.f32 %v971, %v716
      %v973 = vadd.f32 %v972, %v721
      %v974 = vadd.f32 %v973, %v724
      %v975 = vadd.f32 %v974, %v729
      %v976 = vadd.f32 %v975, %v732
      %v977 = vadd.f32 %v976, %v737
      %v978 = vadd.f32 %v977, %v740
      %v979 = vadd.f32 %v978, %v745
      %v980 = vadd.f32 %v979, %v748
      %v981 = vadd.f32 %v980, %v753
      %v982 = vadd.f32 %v981, %v756
      %v983 = vadd.f32 %v982, %v761
      %v984 = vadd.f32 %v983, %v764
      %v985 = vadd.f32 %v984, %v769
      %v986 = vadd.f32 %v985, %v772
      %v987 = vadd.f32 %v986, %v777
      %v988 = vadd.f32 %v987, %v780
      %v989 = vadd.f32 %v988, %v785
      %v990 = vadd.f32 %v989, %v788
      %v991 = vadd.f32 %v990, %v793
      %v992 = vadd.f32 %v991, %v796
      %v993 = vadd.f32 %v992, %v801
      %v994 = vadd.f32 %v993, %v804
      %v995 = vadd.f32 %v994, %v809
      %v996 = vadd.f32 %v995, %v812
      %v997 = vadd.f32 %v996, %v817
      %v998 = vadd.f32 %v997, %v820
      %v999 = vadd.f32 %v998, %v825
      %v1000 = vadd.f32 %v999, %v828
      %v1001 = vadd.f32 %v1000, %v833
      %v1002 = vadd.f32 %v1001, %v836
      %v1003 = vadd.f32 %v1002, %v841
      %v1004 = vadd.f32 %v1003, %v844
      %v1005 = vadd.f32 %v1004, %v849
      %v1006 = vadd.f32 %v1005, %v852
      %v1007 = vadd.f32 %v1006, %v857
      %v1008 = vadd.f32 %v1007, %v860
      %v1009 = vadd.f32 %v1008, %v865
      %v1010 = vadd.f32 %v1009, %v868
      %v1011 = vadd.f32 %v1010, %v873
      %v1012 = vadd.f32 %v1011, %v876
      %v1013 = vadd.f32 %v1012, %v881
      %v1014 = vadd.f32 %v1013, %v884
      %v1015 = vrot.slane %v1014, 4
      %v1016 = vadd.f32 %v1014, %v1015
      %v1017 = vrot.slane %v1016, 2
      %v1018 = vadd.f32 %v1016, %v1017
      %v1019 = vrot.slane %v1018, 1
      %v1020 = vadd.f32 %v1018, %v1019
      %v1021 = vadd.f32 %v951, %v1020
      %1022 = vst [vmem:[%s3] sm:$0x1] %v1021
      %v1023 = vld [vmem:[%s4] sm:$0x1]
      %v1024 = vmul.f32 %v633, %v633
      %v1025 = vmul.f32 %v636, %v636
      %v1026 = vmul.f32 %v641, %v641
      %v1027 = vmul.f32 %v644, %v644
      %v1028 = vmul.f32 %v649, %v649
      %v1029 = vmul.f32 %v652, %v652
      %v1030 = vmul.f32 %v657, %v657
      %v1031 = vmul.f32 %v660, %v660
      %v1032 = vmul.f32 %v665, %v665
      %v1033 = vmul.f32 %v668, %v668
      %v1034 = vmul.f32 %v673, %v673
      %v1035 = vmul.f32 %v676, %v676
      %v1036 = vmul.f32 %v681, %v681
      %v1037 = vmul.f32 %v684, %v684
      %v1038 = vmul.f32 %v689, %v689
      %v1039 = vmul.f32 %v692, %v692
      %v1040 = vmul.f32 %v697, %v697
      %v1041 = vmul.f32 %v700, %v700
      %v1042 = vmul.f32 %v705, %v705
      %v1043 = vmul.f32 %v708, %v708
      %v1044 = vmul.f32 %v713, %v713
      %v1045 = vmul.f32 %v716, %v716
      %v1046 = vmul.f32 %v721, %v721
      %v1047 = vmul.f32 %v724, %v724
      %v1048 = vmul.f32 %v729, %v729
      %v1049 = vmul.f32 %v732, %v732
      %v1050 = vmul.f32 %v737, %v737
      %v1051 = vmul.f32 %v740, %v740
      %v1052 = vmul.f32 %v745, %v745
      %v1053 = vmul.f32 %v748, %v748
      %v1054 = vmul.f32 %v753, %v753
      %v1055 = vmul.f32 %v756, %v756
      %v1056 = vmul.f32 %v761, %v761
      %v1057 = vmul.f32 %v764, %v764
      %v1058 = vmul.f32 %v769, %v769
      %v1059 = vmul.f32 %v772, %v772
      %v1060 = vmul.f32 %v777, %v777
      %v1061 = vmul.f32 %v780, %v780
      %v1062 = vmul.f32 %v785, %v785
      %v1063 = vmul.f32 %v788, %v788
      %v1064 = vmul.f32 %v793, %v793
      %v1065 = vmul.f32 %v796, %v796
      %v1066 = vmul.f32 %v801, %v801
      %v1067 = vmul.f32 %v804, %v804
      %v1068 = vmul.f32 %v809, %v809
      %v1069 = vmul.f32 %v812, %v812
      %v1070 = vmul.f32 %v817, %v817
      %v1071 = vmul.f32 %v820, %v820
      %v1072 = vmul.f32 %v825, %v825
      %v1073 = vmul.f32 %v828, %v828
      %v1074 = vmul.f32 %v833, %v833
      %v1075 = vmul.f32 %v836, %v836
      %v1076 = vmul.f32 %v841, %v841
      %v1077 = vmul.f32 %v844, %v844
      %v1078 = vmul.f32 %v849, %v849
      %v1079 = vmul.f32 %v852, %v852
      %v1080 = vmul.f32 %v857, %v857
      %v1081 = vmul.f32 %v860, %v860
      %v1082 = vmul.f32 %v865, %v865
      %v1083 = vmul.f32 %v868, %v868
      %v1084 = vmul.f32 %v873, %v873
      %v1085 = vmul.f32 %v876, %v876
      %v1086 = vmul.f32 %v881, %v881
      %v1087 = vmul.f32 %v884, %v884
      %v1088 = vadd.f32 %v1024, %v1025
      %v1089 = vadd.f32 %v1088, %v1026
      %v1090 = vadd.f32 %v1089, %v1027
      %v1091 = vadd.f32 %v1090, %v1028
      %v1092 = vadd.f32 %v1091, %v1029
      %v1093 = vadd.f32 %v1092, %v1030
      %v1094 = vadd.f32 %v1093, %v1031
      %v1095 = vadd.f32 %v1094, %v1032
      %v1096 = vadd.f32 %v1095, %v1033
      %v1097 = vadd.f32 %v1096, %v1034
      %v1098 = vadd.f32 %v1097, %v1035
      %v1099 = vadd.f32 %v1098, %v1036
      %v1100 = vadd.f32 %v1099, %v1037
      %v1101 = vadd.f32 %v1100, %v1038
      %v1102 = vadd.f32 %v1101, %v1039
      %v1103 = vadd.f32 %v1102, %v1040
      %v1104 = vadd.f32 %v1103, %v1041
      %v1105 = vadd.f32 %v1104, %v1042
      %v1106 = vadd.f32 %v1105, %v1043
      %v1107 = vadd.f32 %v1106, %v1044
      %v1108 = vadd.f32 %v1107, %v1045
      %v1109 = vadd.f32 %v1108, %v1046
      %v1110 = vadd.f32 %v1109, %v1047
      %v1111 = vadd.f32 %v1110, %v1048
      %v1112 = vadd.f32 %v1111, %v1049
      %v1113 = vadd.f32 %v1112, %v1050
      %v1114 = vadd.f32 %v1113, %v1051
      %v1115 = vadd.f32 %v1114, %v1052
      %v1116 = vadd.f32 %v1115, %v1053
      %v1117 = vadd.f32 %v1116, %v1054
      %v1118 = vadd.f32 %v1117, %v1055
      %v1119 = vadd.f32 %v1118, %v1056
      %v1120 = vadd.f32 %v1119, %v1057
      %v1121 = vadd.f32 %v1120, %v1058
      %v1122 = vadd.f32 %v1121, %v1059
      %v1123 = vadd.f32 %v1122, %v1060
      %v1124 = vadd.f32 %v1123, %v1061
      %v1125 = vadd.f32 %v1124, %v1062
      %v1126 = vadd.f32 %v1125, %v1063
      %v1127 = vadd.f32 %v1126, %v1064
      %v1128 = vadd.f32 %v1127, %v1065
      %v1129 = vadd.f32 %v1128, %v1066
      %v1130 = vadd.f32 %v1129, %v1067
      %v1131 = vadd.f32 %v1130, %v1068
      %v1132 = vadd.f32 %v1131, %v1069
      %v1133 = vadd.f32 %v1132, %v1070
      %v1134 = vadd.f32 %v1133, %v1071
      %v1135 = vadd.f32 %v1134, %v1072
      %v1136 = vadd.f32 %v1135, %v1073
      %v1137 = vadd.f32 %v1136, %v1074
      %v1138 = vadd.f32 %v1137, %v1075
      %v1139 = vadd.f32 %v1138, %v1076
      %v1140 = vadd.f32 %v1139, %v1077
      %v1141 = vadd.f32 %v1140, %v1078
      %v1142 = vadd.f32 %v1141, %v1079
      %v1143 = vadd.f32 %v1142, %v1080
      %v1144 = vadd.f32 %v1143, %v1081
      %v1145 = vadd.f32 %v1144, %v1082
      %v1146 = vadd.f32 %v1145, %v1083
      %v1147 = vadd.f32 %v1146, %v1084
      %v1148 = vadd.f32 %v1147, %v1085
      %v1149 = vadd.f32 %v1148, %v1086
      %v1150 = vadd.f32 %v1149, %v1087
      %v1151 = vrot.slane %v1150, 4
      %v1152 = vadd.f32 %v1150, %v1151
      %v1153 = vrot.slane %v1152, 2
      %v1154 = vadd.f32 %v1152, %v1153
      %v1155 = vrot.slane %v1154, 1
      %v1156 = vadd.f32 %v1154, %v1155
      %v1157 = vadd.f32 %v1023, %v1156
      %1158 = vst [vmem:[%s4] sm:$0x1] %v1157
      %s1159 = smul.u32 64, %s21
      %p1160 = scmp.lt.s32.totalorder %s20, 3
      %s1161 = scalar_select %p1160, %s20, 3
      %p1162 = scmp.lt.s32.totalorder %s1159, 63
      %s1163 = scalar_select %p1162, %s1159, 63
      %s1164 = smul.addr %s1161, 64
      %s1165 = sadd.s32 %s1163, %s1164
      %s1166 = smul.addr %s1165, 8
      %s1167 = scalar_lea.vmem %s2, %s1166
      // Predicated region
      $region33: #{generator_forward.15} parent=27 // pred_check
        %p1168 = pneg %p102
      $region34: #{generator_forward.15} parent=27 // pred_check_branch
        %1170 = sbr.rel (%p1168) target = $region36
      $region35: #{generator_forward.15} parent=27 // pred_region
        %s1171 = smul.u32 64, %s21
      $region36: #{generator_forward.15} parent=27 // pred_fallthru
        _
      // Predicated region
      $region37: #{generator_forward.15} parent=27 // pred_check
        %p1172 = pneg %p123
      $region38: #{generator_forward.15} parent=27 // pred_check_branch
        %1174 = sbr.rel (%p1172) target = $region40
      $region39: #{generator_forward.15} parent=27 // pred_region
        _
      $region40: #{generator_forward.15} parent=27 // pred_fallthru
        _
      // Predicated region
      $region41: #{generator_forward.15} parent=27 // pred_check
        %p1175 = pneg %p144
      $region42: #{generator_forward.15} parent=27 // pred_check_branch
        %1177 = sbr.rel (%p1175) target = $region44
      $region43: #{generator_forward.15} parent=27 // pred_region
        _
      $region44: #{generator_forward.15} parent=27 // pred_fallthru
        _
      // Predicated region
      $region45: #{generator_forward.15} parent=27 // pred_check
        %p1178 = pneg %p123
      $region46: #{generator_forward.15} parent=27 // pred_check_branch
        %1180 = sbr.rel (%p1178) target = $region48
      $region47: #{generator_forward.15} parent=27 // pred_region
        _
      $region48: #{generator_forward.15} parent=27 // pred_fallthru
        _
      // Predicated region
      $region49: #{generator_forward.15} parent=27 // pred_check
        %p1181 = pneg %p144
      $region50: #{generator_forward.15} parent=27 // pred_check_branch
        %1183 = sbr.rel (%p1181) target = $region52
      $region51: #{generator_forward.15} parent=27 // pred_region
        _
      $region52: #{generator_forward.15} parent=27 // pred_fallthru
        _
    $region28: #{generator_forward.15} parent=5 // pred_fallthru
      _
    %p1184 = scmp.le.s32.totalorder 2, %s11
    // Predicated region
    $region53: #{generator_forward.15} parent=5 // pred_check
      %p1185 = pneg %p1184
    $region54: #{generator_forward.15} parent=5 // pred_check_branch
      %1187 = sbr.rel (%p1185) target = $region56
    $region55: #{generator_forward.15} parent=5 // pred_region
      %s1188 = ssub.s32 %s11, 2
      // Predicated region
      $region57: #{generator_forward.15} parent=55 // pred_check
        %p1189 = pneg %p108
      $region58: #{generator_forward.15} parent=55 // pred_check_branch
        %1191 = sbr.rel (%p1189) target = $region60
      $region59: #{generator_forward.15} parent=55 // pred_region
        %s1192 = smul.u32 64, %s23
        %p1193 = scmp.lt.s32.totalorder %s22, 3
        %s1194 = scalar_select %p1193, %s22, 3
        %p1195 = scmp.lt.s32.totalorder %s1192, 63
        %s1196 = scalar_select %p1195, %s1192, 63
        %s1197 = smul.addr %s1194, 64
        %s1198 = sadd.s32 %s1196, %s1197
        %s1199 = smul.addr %s1198, 8
        %s1200 = scalar_lea.vmem %s2, %s1199
      $region60: #{generator_forward.15} parent=55 // pred_fallthru
        _
    $region56: #{generator_forward.15} parent=5 // pred_fallthru
      _
  $region6: #{generator_forward.15} parent=0 // loop_footer
    %s15 = sadd.s32 1, %s11
  $region7: #{generator_forward.15} parent=0 // loop_footer_branch
    %10 = sbr.rel target = $region3
  $region8: #{generator_forward.15} parent=0 // loop_exit
    _

// kernel: generator_forward.17
$region0: #{generator_forward.17}
  #allocation0 [shape = 'u32[]', space=smem, size = 0x4, offset = 0x4, fixed_abs, tag = 'smem constant byte address 0x4 - core index']
  #allocation1 [shape = 'u32[144,128]{1,0:T(1,128)}', space=vmem, size = 0x12000, scoped, tag = 'internal scratch']
  %s0 = inlined_call_operand.vmem [shape: bf16[4,2048,16], index: 0, kind: input, shape index: {}]
  %s1 = inlined_call_operand.vmem [shape: bf16[4,16,128], index: 1, kind: input, shape index: {}]
  %s2 = inlined_call_operand.vmem [shape: f32[4,2048,128], index: 2, kind: output, shape index: {}]
  %s3 = sld [smem:[#allocation0]]
  $region41: #{generator_forward.17} parent=0
    _
  %s5 = ssub.s32 1, %s3
  %s6 = scalar_select 0, %s5, %s3
  loop: start=0, step=1, limit=18
  $region2: #{generator_forward.17} parent=0 // loop_pre_header
    _
  $region3: #{generator_forward.17} parent=0 // loop_header
    %s8 = sphi 0, %s12
    %p9 = scmp.ge.s32.totalorder %s8, 18
    %s15 = sphi 0, %s27
    %s16 = sphi 0, %s23
    %s17 = sphi 0, %s15
    %s18 = sphi 0, %s16
    %s19 = sphi 0, %s17
    %s20 = sphi 0, %s18
    %s32 = sphi 0, %s34
    %s35 = sphi 0, %s32
    %s36 = sphi 0, %s35
    %s52 = sphi 0, %s36
    %s58 = sphi 0, %s60
    %s61 = sphi 0, %s58
    %s62 = sphi 0, %s61
    %s78 = sphi 0, %s62
    %s86 = sphi 0, %s88
    %s89 = sphi 0, %s86
    %s90 = sphi 0, %s89
    %s106 = sphi 0, %s90
  $region4: #{generator_forward.17} parent=0 // loop_header_branch
    %11 = sbr.rel (%p9) target = $region8
  $region5: #{generator_forward.17} parent=0 // loop_body
    %s13 = ssub.s32 %s8, 1
    %s14 = ssub.s32 %s8, 2
    %s21 = sadd.s32 1, %s16
    %p22 = scmp.ge.s32.totalorder %s21, 4
    %s23 = scalar_select %p22, 0, %s21
    %s24 = sadd.s32 1, %s15
    %s25 = scalar_select %p22, %s24, %s15
    %p26 = scmp.ge.s32.totalorder %s25, 4
    %s27 = scalar_select %p26, 0, %s25
    %s28 = ssub.s32 %s15, %s27
    %s29 = ssub.s32 %s16, %s23
    %s30 = sor.u32 %s28, %s29
    %p31 = scmp.eq.s32.totalorder %s30, 0
    %s33 = sadd.s32 %s32, 1
    %s34 = scalar_select %p31, %s32, %s33
    %p37 = pneg %p31
    %p38 = scmp.eq.s32.totalorder %s8, 15
    %p39 = por %p37, %p38
    %p40 = scmp.ne.s32.totalorder %s32, %s35
    %p41 = scmp.eq.s32.totalorder %s8, 0
    %p42 = por %p40, %p41
    %p43 = scmp.ne.s32.totalorder %s32, %s35
    %p44 = scmp.eq.s32.totalorder %s13, 15
    %p45 = por %p43, %p44
    %p46 = scmp.ne.s32.totalorder %s35, %s36
    %p47 = scmp.eq.s32.totalorder %s13, 0
    %p48 = por %p46, %p47
    %p49 = scmp.ne.s32.totalorder %s35, %s36
    %p50 = scmp.eq.s32.totalorder %s14, 15
    %p51 = por %p49, %p50
    %p53 = scmp.ne.s32.totalorder %s36, %s52
    %p54 = scmp.eq.s32.totalorder %s14, 0
    %p55 = por %p53, %p54
    %s56 = ssub.s32 %s15, %s27
    %p57 = scmp.eq.s32.totalorder %s56, 0
    %s59 = sadd.s32 %s58, 1
    %s60 = scalar_select %p57, %s58, %s59
    %p63 = pneg %p57
    %p64 = scmp.eq.s32.totalorder %s8, 15
    %p65 = por %p63, %p64
    %p66 = scmp.ne.s32.totalorder %s58, %s61
    %p67 = scmp.eq.s32.totalorder %s8, 0
    %p68 = por %p66, %p67
    %p69 = scmp.ne.s32.totalorder %s58, %s61
    %p70 = scmp.eq.s32.totalorder %s13, 15
    %p71 = por %p69, %p70
    %p72 = scmp.ne.s32.totalorder %s61, %s62
    %p73 = scmp.eq.s32.totalorder %s13, 0
    %p74 = por %p72, %p73
    %p75 = scmp.ne.s32.totalorder %s61, %s62
    %p76 = scmp.eq.s32.totalorder %s14, 15
    %p77 = por %p75, %p76
    %p79 = scmp.ne.s32.totalorder %s62, %s78
    %p80 = scmp.eq.s32.totalorder %s14, 0
    %p81 = por %p79, %p80
    %s82 = ssub.s32 %s15, %s27
    %s83 = ssub.s32 %s16, %s23
    %s84 = sor.u32 %s82, %s83
    %p85 = scmp.eq.s32.totalorder %s84, 0
    %s87 = sadd.s32 %s86, 1
    %s88 = scalar_select %p85, %s86, %s87
    %p91 = pneg %p85
    %p92 = scmp.eq.s32.totalorder %s8, 15
    %p93 = por %p91, %p92
    %p94 = scmp.ne.s32.totalorder %s86, %s89
    %p95 = scmp.eq.s32.totalorder %s8, 0
    %p96 = por %p94, %p95
    %p97 = scmp.ne.s32.totalorder %s86, %s89
    %p98 = scmp.eq.s32.totalorder %s13, 15
    %p99 = por %p97, %p98
    %p100 = scmp.ne.s32.totalorder %s89, %s90
    %p101 = scmp.eq.s32.totalorder %s13, 0
    %p102 = por %p100, %p101
    %p103 = scmp.ne.s32.totalorder %s89, %s90
    %p104 = scmp.eq.s32.totalorder %s14, 15
    %p105 = por %p103, %p104
    %p107 = scmp.ne.s32.totalorder %s90, %s106
    %p108 = scmp.eq.s32.totalorder %s14, 0
    %p109 = por %p107, %p108
    %p110 = scmp.le.s32.totalorder 1, %s8
    %p111 = scmp.lt.s32.totalorder %s8, 17
    %p112 = pnand %p110, %p111
    %p113 = pneg %p112
    // Predicated region
    $region9: #{generator_forward.17} parent=5 // pred_check
      _
    $region10: #{generator_forward.17} parent=5 // pred_check_branch
      %115 = sbr.rel (%p112) target = $region12
    $region11: #{generator_forward.17} parent=5 // pred_region
      %s116 = ssub.s32 %s8, 1
    $region12: #{generator_forward.17} parent=5 // pred_fallthru
      _
    %p117 = scmp.lt.s32.totalorder %s8, 16
    // Predicated region
    $region13: #{generator_forward.17} parent=5 // pred_check
      %p118 = pneg %p117
    $region14: #{generator_forward.17} parent=5 // pred_check_branch
      %120 = sbr.rel (%p118) target = $region16
    $region15: #{generator_forward.17} parent=5 // pred_region
      // Predicated region
      $region17: #{generator_forward.17} parent=15 // pred_check
        %p121 = pneg %p42
      $region18: #{generator_forward.17} parent=15 // pred_check_branch
        %123 = sbr.rel (%p121) target = $region20
      $region19: #{generator_forward.17} parent=15 // pred_region
        %s124 = smul.u32 64, %s16
        %p125 = scmp.lt.s32.totalorder %s15, 3
        %s126 = scalar_select %p125, %s15, 3
        %p127 = scmp.lt.s32.totalorder %s124, 255
        %s128 = scalar_select %p127, %s124, 255
        %s129 = smul.addr %s126, 256
        %s130 = sadd.s32 %s128, %s129
        %s131 = smul.addr %s130, 4
        %s132 = scalar_lea.vmem %s0, %s131
        %s133 = smul.u32 64, %s16
      $region20: #{generator_forward.17} parent=15 // pred_fallthru
        _
      // Predicated region
      $region21: #{generator_forward.17} parent=15 // pred_check
        %p134 = pneg %p68
      $region22: #{generator_forward.17} parent=15 // pred_check_branch
        %136 = sbr.rel (%p134) target = $region24
      $region23: #{generator_forward.17} parent=15 // pred_region
        %p137 = scmp.lt.s32.totalorder %s15, 3
        %s138 = scalar_select %p137, %s15, 3
        %s139 = smul.addr %s138, 2
        %s140 = smul.addr %s139, 4
        %s141 = scalar_lea.vmem %s1, %s140
      $region24: #{generator_forward.17} parent=15 // pred_fallthru
        _
    $region16: #{generator_forward.17} parent=5 // pred_fallthru
      _
    %p142 = scmp.le.s32.totalorder 1, %s8
    %p143 = scmp.lt.s32.totalorder %s8, 17
    %p144 = pnand %p142, %p143
    %p145 = pneg %p144
    // Predicated region
    $region25: #{generator_forward.17} parent=5 // pred_check
      _
    $region26: #{generator_forward.17} parent=5 // pred_check_branch
      %147 = sbr.rel (%p144) target = $region28
    $region27: #{generator_forward.17} parent=5 // pred_region
      %s148 = ssub.s32 %s8, 1
      %s149 = smul.u32 64, %s18
      %p150 = scmp.lt.s32.totalorder %s17, 3
      %s151 = scalar_select %p150, %s17, 3
      %p152 = scmp.lt.s32.totalorder %s149, 255
      %s153 = scalar_select %p152, %s149, 255
      %s154 = smul.addr %s151, 256
      %s155 = sadd.s32 %s153, %s154
      %s156 = smul.addr %s155, 4
      %s157 = scalar_lea.vmem %s0, %s156
      %p158 = pneg %p48
      %p159 = pneg %p45
      %p160 = scmp.lt.s32.totalorder %s17, 3
      %s161 = scalar_select %p160, %s17, 3
      %s162 = smul.addr %s161, 2
      %s163 = smul.addr %s162, 4
      %s164 = scalar_lea.vmem %s1, %s163
      %p165 = pneg %p74
      %p166 = pneg %p71
      %p167 = pneg %p102
      %p168 = pneg %p99
      %s169 = smul.u32 64, %s18
      %p170 = scmp.lt.s32.totalorder %s17, 3
      %s171 = scalar_select %p170, %s17, 3
      %p172 = scmp.lt.s32.totalorder %s169, 255
      %s173 = scalar_select %p172, %s169, 255
      %s174 = smul.addr %s171, 256
      %s175 = sadd.s32 %s173, %s174
      %s176 = smul.addr %s175, 8
      %s177 = scalar_lea.vmem %s2, %s176
      %s178 = smul.u32 64, %s18
      %p179 = scmp.lt.s32.totalorder %s17, 3
      %s180 = scalar_select %p179, %s17, 3
      %p181 = scmp.lt.s32.totalorder %s178, 255
      %s182 = scalar_select %p181, %s178, 255
      %s183 = smul.addr %s180, 256
      %s184 = sadd.s32 %s182, %s183
      %s185 = smul.addr %s184, 4
      %s186 = scalar_lea.vmem %s0, %s185
      %s187 = smul.u32 64, %s18
      %p188 = scmp.lt.s32.totalorder %s17, 3
      %s189 = scalar_select %p188, %s17, 3
      %s190 = smul.addr %s189, 2
      %s191 = smul.addr %s190, 4
      %s192 = scalar_lea.vmem %s1, %s191
      %s193 = smul.u32 64, %s18
      %p194 = scmp.lt.s32.totalorder %s17, 3
      %s195 = scalar_select %p194, %s17, 3
      %p196 = scmp.lt.s32.totalorder %s193, 255
      %s197 = scalar_select %p196, %s193, 255
      %s198 = smul.addr %s195, 256
      %s199 = sadd.s32 %s197, %s198
      %s200 = smul.addr %s199, 8
      %s201 = scalar_lea.vmem %s2, %s200
      %s202 = smul.u32 64, %s18
      %v204 = vld [vmem:[%s186] sm:$0xf]
      %v205 = vld [vmem:[%s186 + $0x4] sm:$0xf]
      %v206 = vld [vmem:[%s186 + $0x8] sm:$0xf]
      %v207 = vld [vmem:[%s186 + $0xc] sm:$0xf]
      %v208 = vld [vmem:[%s186 + $0x10] sm:$0xf]
      %v209 = vld [vmem:[%s186 + $0x14] sm:$0xf]
      %v210 = vld [vmem:[%s186 + $0x18] sm:$0xf]
      %v211 = vld [vmem:[%s186 + $0x1c] sm:$0xf]
      %v212 = vld [vmem:[%s186 + $0x20] sm:$0xf]
      %v213 = vld [vmem:[%s186 + $0x24] sm:$0xf]
      %v214 = vld [vmem:[%s186 + $0x28] sm:$0xf]
      %v215 = vld [vmem:[%s186 + $0x2c] sm:$0xf]
      %v216 = vld [vmem:[%s186 + $0x30] sm:$0xf]
      %v217 = vld [vmem:[%s186 + $0x34] sm:$0xf]
      %v218 = vld [vmem:[%s186 + $0x38] sm:$0xf]
      %v219 = vld [vmem:[%s186 + $0x3c] sm:$0xf]
      %v220 = vld [vmem:[%s186 + $0x40] sm:$0xf]
      %v221 = vld [vmem:[%s186 + $0x44] sm:$0xf]
      %v222 = vld [vmem:[%s186 + $0x48] sm:$0xf]
      %v223 = vld [vmem:[%s186 + $0x4c] sm:$0xf]
      %v224 = vld [vmem:[%s186 + $0x50] sm:$0xf]
      %v225 = vld [vmem:[%s186 + $0x54] sm:$0xf]
      %v226 = vld [vmem:[%s186 + $0x58] sm:$0xf]
      %v227 = vld [vmem:[%s186 + $0x5c] sm:$0xf]
      %v228 = vld [vmem:[%s186 + $0x60] sm:$0xf]
      %v229 = vld [vmem:[%s186 + $0x64] sm:$0xf]
      %v230 = vld [vmem:[%s186 + $0x68] sm:$0xf]
      %v231 = vld [vmem:[%s186 + $0x6c] sm:$0xf]
      %v232 = vld [vmem:[%s186 + $0x70] sm:$0xf]
      %v233 = vld [vmem:[%s186 + $0x74] sm:$0xf]
      %v234 = vld [vmem:[%s186 + $0x78] sm:$0xf]
      %v235 = vld [vmem:[%s186 + $0x7c] sm:$0xf]
      %v236 = vld [vmem:[%s186 + $0x80] sm:$0xf]
      %v237 = vld [vmem:[%s186 + $0x84] sm:$0xf]
      %v238 = vld [vmem:[%s186 + $0x88] sm:$0xf]
      %v239 = vld [vmem:[%s186 + $0x8c] sm:$0xf]
      %v240 = vld [vmem:[%s186 + $0x90] sm:$0xf]
      %v241 = vld [vmem:[%s186 + $0x94] sm:$0xf]
      %v242 = vld [vmem:[%s186 + $0x98] sm:$0xf]
      %v243 = vld [vmem:[%s186 + $0x9c] sm:$0xf]
      %v244 = vld [vmem:[%s186 + $0xa0] sm:$0xf]
      %v245 = vld [vmem:[%s186 + $0xa4] sm:$0xf]
      %v246 = vld [vmem:[%s186 + $0xa8] sm:$0xf]
      %v247 = vld [vmem:[%s186 + $0xac] sm:$0xf]
      %v248 = vld [vmem:[%s186 + $0xb0] sm:$0xf]
      %v249 = vld [vmem:[%s186 + $0xb4] sm:$0xf]
      %v250 = vld [vmem:[%s186 + $0xb8] sm:$0xf]
      %v251 = vld [vmem:[%s186 + $0xbc] sm:$0xf]
      %v252 = vld [vmem:[%s186 + $0xc0] sm:$0xf]
      %v253 = vld [vmem:[%s186 + $0xc4] sm:$0xf]
      %v254 = vld [vmem:[%s186 + $0xc8] sm:$0xf]
      %v255 = vld [vmem:[%s186 + $0xcc] sm:$0xf]
      %v256 = vld [vmem:[%s186 + $0xd0] sm:$0xf]
      %v257 = vld [vmem:[%s186 + $0xd4] sm:$0xf]
      %v258 = vld [vmem:[%s186 + $0xd8] sm:$0xf]
      %v259 = vld [vmem:[%s186 + $0xdc] sm:$0xf]
      %v260 = vld [vmem:[%s186 + $0xe0] sm:$0xf]
      %v261 = vld [vmem:[%s186 + $0xe4] sm:$0xf]
      %v262 = vld [vmem:[%s186 + $0xe8] sm:$0xf]
      %v263 = vld [vmem:[%s186 + $0xec] sm:$0xf]
      %v264 = vld [vmem:[%s186 + $0xf0] sm:$0xf]
      %v265 = vld [vmem:[%s186 + $0xf4] sm:$0xf]
      %v266 = vld [vmem:[%s186 + $0xf8] sm:$0xf]
      %v267 = vld [vmem:[%s186 + $0xfc] sm:$0xf]
      %v268 = vld [vmem:[%s192] sm:$0xf]
      %v269 = vld [vmem:[%s192 + $0x4] sm:$0xf]
      %v334 = vunpack.c.l.b16 %v204
      %v335 = vunpack.c.l.b16 %v205
      %v336 = vunpack.c.l.b16 %v206
      %v337 = vunpack.c.l.b16 %v207
      %v338 = vunpack.c.l.b16 %v208
      %v339 = vunpack.c.l.b16 %v209
      %v340 = vunpack.c.l.b16 %v210
      %v341 = vunpack.c.l.b16 %v211
      %v342 = vunpack.c.l.b16 %v212
      %v343 = vunpack.c.l.b16 %v213
      %v344 = vunpack.c.l.b16 %v214
      %v345 = vunpack.c.l.b16 %v215
      %v346 = vunpack.c.l.b16 %v216
      %v347 = vunpack.c.l.b16 %v217
      %v348 = vunpack.c.l.b16 %v218
      %v349 = vunpack.c.l.b16 %v219
      %v350 = vunpack.c.l.b16 %v220
      %v351 = vunpack.c.l.b16 %v221
      %v352 = vunpack.c.l.b16 %v222
      %v353 = vunpack.c.l.b16 %v223
      %v354 = vunpack.c.l.b16 %v224
      %v355 = vunpack.c.l.b16 %v225
      %v356 = vunpack.c.l.b16 %v226
      %v357 = vunpack.c.l.b16 %v227
      %v358 = vunpack.c.l.b16 %v228
      %v359 = vunpack.c.l.b16 %v229
      %v360 = vunpack.c.l.b16 %v230
      %v361 = vunpack.c.l.b16 %v231
      %v362 = vunpack.c.l.b16 %v232
      %v363 = vunpack.c.l.b16 %v233
      %v364 = vunpack.c.l.b16 %v234
      %v365 = vunpack.c.l.b16 %v235
      %v366 = vunpack.c.l.b16 %v236
      %v367 = vunpack.c.l.b16 %v237
      %v368 = vunpack.c.l.b16 %v238
      %v369 = vunpack.c.l.b16 %v239
      %v370 = vunpack.c.l.b16 %v240
      %v371 = vunpack.c.l.b16 %v241
      %v372 = vunpack.c.l.b16 %v242
      %v373 = vunpack.c.l.b16 %v243
      %v374 = vunpack.c.l.b16 %v244
      %v375 = vunpack.c.l.b16 %v245
      %v376 = vunpack.c.l.b16 %v246
      %v377 = vunpack.c.l.b16 %v247
      %v378 = vunpack.c.l.b16 %v248
      %v379 = vunpack.c.l.b16 %v249
      %v380 = vunpack.c.l.b16 %v250
      %v381 = vunpack.c.l.b16 %v251
      %v382 = vunpack.c.l.b16 %v252
      %v383 = vunpack.c.l.b16 %v253
      %v384 = vunpack.c.l.b16 %v254
      %v385 = vunpack.c.l.b16 %v255
      %v386 = vunpack.c.l.b16 %v256
      %v387 = vunpack.c.l.b16 %v257
      %v388 = vunpack.c.l.b16 %v258
      %v389 = vunpack.c.l.b16 %v259
      %v390 = vunpack.c.l.b16 %v260
      %v391 = vunpack.c.l.b16 %v261
      %v392 = vunpack.c.l.b16 %v262
      %v393 = vunpack.c.l.b16 %v263
      %v394 = vunpack.c.l.b16 %v264
      %v395 = vunpack.c.l.b16 %v265
      %v396 = vunpack.c.l.b16 %v266
      %v397 = vunpack.c.l.b16 %v267
      %v398 = vpack.c.b16 %v335, %v334
      %v399 = vpack.c.b16 %v337, %v336
      %v400 = vpack.c.b16 %v339, %v338
      %v401 = vpack.c.b16 %v341, %v340
      %v402 = vpack.c.b16 %v343, %v342
      %v403 = vpack.c.b16 %v345, %v344
      %v404 = vpack.c.b16 %v347, %v346
      %v405 = vpack.c.b16 %v349, %v348
      %v406 = vpack.c.b16 %v351, %v350
      %v407 = vpack.c.b16 %v353, %v352
      %v408 = vpack.c.b16 %v355, %v354
      %v409 = vpack.c.b16 %v357, %v356
      %v410 = vpack.c.b16 %v359, %v358
      %v411 = vpack.c.b16 %v361, %v360
      %v412 = vpack.c.b16 %v363, %v362
      %v413 = vpack.c.b16 %v365, %v364
      %v414 = vpack.c.b16 %v367, %v366
      %v415 = vpack.c.b16 %v369, %v368
      %v416 = vpack.c.b16 %v371, %v370
      %v417 = vpack.c.b16 %v373, %v372
      %v418 = vpack.c.b16 %v375, %v374
      %v419 = vpack.c.b16 %v377, %v376
      %v420 = vpack.c.b16 %v379, %v378
      %v421 = vpack.c.b16 %v381, %v380
      %v422 = vpack.c.b16 %v383, %v382
      %v423 = vpack.c.b16 %v385, %v384
      %v424 = vpack.c.b16 %v387, %v386
      %v425 = vpack.c.b16 %v389, %v388
      %v426 = vpack.c.b16 %v391, %v390
      %v427 = vpack.c.b16 %v393, %v392
      %v428 = vpack.c.b16 %v395, %v394
      %v429 = vpack.c.b16 %v397, %v396
      %v432 = vunpack.c.l.b16 %v268
      %v433 = vunpack.c.l.b16 %v269
      %v434 = vpack.c.b16 %v433, %v432
      %vm436 = vcmask 130048
      %v438 = vsel %vm436, %v398, 0
      %v441 = vsel %vm436, %v399, 0
      %v444 = vsel %vm436, %v400, 0
      %v447 = vsel %vm436, %v401, 0
      %v450 = vsel %vm436, %v402, 0
      %v453 = vsel %vm436, %v403, 0
      %v456 = vsel %vm436, %v404, 0
      %v459 = vsel %vm436, %v405, 0
      %v462 = vsel %vm436, %v406, 0
      %v465 = vsel %vm436, %v407, 0
      %v468 = vsel %vm436, %v408, 0
      %v471 = vsel %vm436, %v409, 0
      %v474 = vsel %vm436, %v410, 0
      %v477 = vsel %vm436, %v411, 0
      %v480 = vsel %vm436, %v412, 0
      %v483 = vsel %vm436, %v413, 0
      %v486 = vsel %vm436, %v414, 0
      %v489 = vsel %vm436, %v415, 0
      %v492 = vsel %vm436, %v416, 0
      %v495 = vsel %vm436, %v417, 0
      %v498 = vsel %vm436, %v418, 0
      %v501 = vsel %vm436, %v419, 0
      %v504 = vsel %vm436, %v420, 0
      %v507 = vsel %vm436, %v421, 0
      %v510 = vsel %vm436, %v422, 0
      %v513 = vsel %vm436, %v423, 0
      %v516 = vsel %vm436, %v424, 0
      %v519 = vsel %vm436, %v425, 0
      %v522 = vsel %vm436, %v426, 0
      %v525 = vsel %vm436, %v427, 0
      %v528 = vsel %vm436, %v428, 0
      %v531 = vsel %vm436, %v429, 0
      %533 = vmatprep.subr.bf16.mxu0 0
      %534 = vmatpush1.bf16.msra.mxu0 %v434
      %535 = vmatprep.subr.bf16.mxu0 0
      %536 = vmatpush1.bf16.msra.mxu0 0
      %537 = vmatprep.subr.bf16.mxu0 0
      %538 = vmatpush1.bf16.msra.mxu0 0
      %539 = vmatprep.subr.bf16.mxu0 0
      %540 = vmatpush1.bf16.msra.mxu0 0
      %541 = vmatprep.subr.bf16.mxu0 0
      %542 = vmatpush1.bf16.msra.mxu0 0
      %543 = vmatprep.subr.bf16.mxu0 0
      %544 = vmatpush1.bf16.msra.mxu0 0
      %545 = vmatprep.subr.bf16.mxu0 0
      %546 = vmatpush1.bf16.msra.mxu0 0
      %547 = vmatprep.subr.bf16.mxu0 0
      %548 = vmatpush1.bf16.msra.mxu0 0
      %549 = vmatprep.subr.bf16.mxu0 0
      %550 = vmatpush1.bf16.msra.mxu0 0
      %551 = vmatprep.subr.bf16.mxu0 0
      %552 = vmatpush1.bf16.msra.mxu0 0
      %553 = vmatprep.subr.bf16.mxu0 0
      %554 = vmatpush1.bf16.msra.mxu0 0
      %555 = vmatprep.subr.bf16.mxu0 0
      %556 = vmatpush1.bf16.msra.mxu0 0
      %557 = vmatprep.subr.bf16.mxu0 0
      %558 = vmatpush1.bf16.msra.mxu0 0
      %559 = vmatprep.subr.bf16.mxu0 0
      %560 = vmatpush1.bf16.msra.mxu0 0
      %561 = vmatprep.subr.bf16.mxu0 0
      %562 = vmatpush1.bf16.msra.mxu0 0
      %563 = vmatprep.subr.bf16.mxu0 0
      %564 = vmatpush1.bf16.msra.mxu0 0
      %565 = vmatprep.mubr.bf16.mxu0 0
      %566 = vmatmul.mubr.bf16.gmra.mrb[0].mxu0 %v438
      %v567 = vpop.f32.mrb[0].mxu0
      %v568 = vadd.f32 0.0, %v567
      %v569 = vpop.f32.mrb[0].mxu0
      %v570 = vpop.f32.mrb[0].mxu0
      %v571 = vadd.f32 0.0, %v570
      %v572 = vpop.f32.mrb[0].mxu0
      %573 = vmatprep.mubr.bf16.mxu0 0
      %574 = vmatmul.mubr.bf16.gmra.mrb[0].mxu0 %v441
      %v575 = vpop.f32.mrb[0].mxu0
      %v576 = vadd.f32 0.0, %v575
      %v577 = vpop.f32.mrb[0].mxu0
      %v578 = vpop.f32.mrb[0].mxu0
      %v579 = vadd.f32 0.0, %v578
      %v580 = vpop.f32.mrb[0].mxu0
      %581 = vmatprep.mubr.bf16.mxu0 0
      %582 = vmatmul.mubr.bf16.gmra.mrb[0].mxu0 %v444
      %v583 = vpop.f32.mrb[0].mxu0
      %v584 = vadd.f32 0.0, %v583
      %v585 = vpop.f32.mrb[0].mxu0
      %v586 = vpop.f32.mrb[0].mxu0
      %v587 = vadd.f32 0.0, %v586
      %v588 = vpop.f32.mrb[0].mxu0
      %589 = vmatprep.mubr.bf16.mxu0 0
      %590 = vmatmul.mubr.bf16.gmra.mrb[0].mxu0 %v447
      %v591 = vpop.f32.mrb[0].mxu0
      %v592 = vadd.f32 0.0, %v591
      %v593 = vpop.f32.mrb[0].mxu0
      %v594 = vpop.f32.mrb[0].mxu0
      %v595 = vadd.f32 0.0, %v594
      %v596 = vpop.f32.mrb[0].mxu0
      %597 = vmatprep.mubr.bf16.mxu0 0
      %598 = vmatmul.mubr.bf16.gmra.mrb[0].mxu0 %v450
      %v599 = vpop.f32.mrb[0].mxu0
      %v600 = vadd.f32 0.0, %v599
      %v601 = vpop.f32.mrb[0].mxu0
      %v602 = vpop.f32.mrb[0].mxu0
      %v603 = vadd.f32 0.0, %v602
      %v604 = vpop.f32.mrb[0].mxu0
      %605 = vmatprep.mubr.bf16.mxu0 0
      %606 = vmatmul.mubr.bf16.gmra.mrb[0].mxu0 %v453
      %v607 = vpop.f32.mrb[0].mxu0
      %v608 = vadd.f32 0.0, %v607
      %v609 = vpop.f32.mrb[0].mxu0
      %v610 = vpop.f32.mrb[0].mxu0
      %v611 = vadd.f32 0.0, %v610
      %v612 = vpop.f32.mrb[0].mxu0
      %613 = vmatprep.mubr.bf16.mxu0 0
      %614 = vmatmul.mubr.bf16.gmra.mrb[0].mxu0 %v456
      %v615 = vpop.f32.mrb[0].mxu0
      %v616 = vadd.f32 0.0, %v615
      %v617 = vpop.f32.mrb[0].mxu0
      %v618 = vpop.f32.mrb[0].mxu0
      %v619 = vadd.f32 0.0, %v618
      %v620 = vpop.f32.mrb[0].mxu0
      %621 = vmatprep.mubr.bf16.mxu0 0
      %622 = vmatmul.mubr.bf16.gmra.mrb[0].mxu0 %v459
      %v623 = vpop.f32.mrb[0].mxu0
      %v624 = vadd.f32 0.0, %v623
      %v625 = vpop.f32.mrb[0].mxu0
      %v626 = vpop.f32.mrb[0].mxu0
      %v627 = vadd.f32 0.0, %v626
      %v628 = vpop.f32.mrb[0].mxu0
      %629 = vmatprep.mubr.bf16.mxu0 0
      %630 = vmatmul.mubr.bf16.gmra.mrb[0].mxu0 %v462
      %v631 = vpop.f32.mrb[0].mxu0
      %v632 = vadd.f32 0.0, %v631
      %v633 = vpop.f32.mrb[0].mxu0
      %v634 = vpop.f32.mrb[0].mxu0
      %v635 = vadd.f32 0.0, %v634
      %v636 = vpop.f32.mrb[0].mxu0
      %637 = vmatprep.mubr.bf16.mxu0 0
      %638 = vmatmul.mubr.bf16.gmra.mrb[0].mxu0 %v465
      %v639 = vpop.f32.mrb[0].mxu0
      %v640 = vadd.f32 0.0, %v639
      %v641 = vpop.f32.mrb[0].mxu0
      %v642 = vpop.f32.mrb[0].mxu0
      %v643 = vadd.f32 0.0, %v642
      %v644 = vpop.f32.mrb[0].mxu0
      %645 = vmatprep.mubr.bf16.mxu0 0
      %646 = vmatmul.mubr.bf16.gmra.mrb[0].mxu0 %v468
      %v647 = vpop.f32.mrb[0].mxu0
      %v648 = vadd.f32 0.0, %v647
      %v649 = vpop.f32.mrb[0].mxu0
      %v650 = vpop.f32.mrb[0].mxu0
      %v651 = vadd.f32 0.0, %v650
      %v652 = vpop.f32.mrb[0].mxu0
      %653 = vmatprep.mubr.bf16.mxu0 0
      %654 = vmatmul.mubr.bf16.gmra.mrb[0].mxu0 %v471
      %v655 = vpop.f32.mrb[0].mxu0
      %v656 = vadd.f32 0.0, %v655
      %v657 = vpop.f32.mrb[0].mxu0
      %v658 = vpop.f32.mrb[0].mxu0
      %v659 = vadd.f32 0.0, %v658
      %v660 = vpop.f32.mrb[0].mxu0
      %661 = vmatprep.mubr.bf16.mxu0 0
      %662 = vmatmul.mubr.bf16.gmra.mrb[0].mxu0 %v474
      %v663 = vpop.f32.mrb[0].mxu0
      %v664 = vadd.f32 0.0, %v663
      %v665 = vpop.f32.mrb[0].mxu0
      %v666 = vpop.f32.mrb[0].mxu0
      %v667 = vadd.f32 0.0, %v666
      %v668 = vpop.f32.mrb[0].mxu0
      %669 = vmatprep.mubr.bf16.mxu0 0
      %670 = vmatmul.mubr.bf16.gmra.mrb[0].mxu0 %v477
      %v671 = vpop.f32.mrb[0].mxu0
      %v672 = vadd.f32 0.0, %v671
      %v673 = vpop.f32.mrb[0].mxu0
      %v674 = vpop.f32.mrb[0].mxu0
      %v675 = vadd.f32 0.0, %v674
      %v676 = vpop.f32.mrb[0].mxu0
      %677 = vmatprep.mubr.bf16.mxu0 0
      %678 = vmatmul.mubr.bf16.gmra.mrb[0].mxu0 %v480
      %v679 = vpop.f32.mrb[0].mxu0
      %v680 = vadd.f32 0.0, %v679
      %v681 = vpop.f32.mrb[0].mxu0
      %v682 = vpop.f32.mrb[0].mxu0
      %v683 = vadd.f32 0.0, %v682
      %v684 = vpop.f32.mrb[0].mxu0
      %685 = vmatprep.mubr.bf16.mxu0 0
      %686 = vmatmul.mubr.bf16.gmra.mrb[0].mxu0 %v483
      %v687 = vpop.f32.mrb[0].mxu0
      %v688 = vadd.f32 0.0, %v687
      %v689 = vpop.f32.mrb[0].mxu0
      %v690 = vpop.f32.mrb[0].mxu0
      %v691 = vadd.f32 0.0, %v690
      %v692 = vpop.f32.mrb[0].mxu0
      %693 = vmatprep.mubr.bf16.mxu0 0
      %694 = vmatmul.mubr.bf16.gmra.mrb[0].mxu0 %v486
      %v695 = vpop.f32.mrb[0].mxu0
      %v696 = vadd.f32 0.0, %v695
      %v697 = vpop.f32.mrb[0].mxu0
      %v698 = vpop.f32.mrb[0].mxu0
      %v699 = vadd.f32 0.0, %v698
      %v700 = vpop.f32.mrb[0].mxu0
      %701 = vmatprep.mubr.bf16.mxu0 0
      %702 = vmatmul.mubr.bf16.gmra.mrb[0].mxu0 %v489
      %v703 = vpop.f32.mrb[0].mxu0
      %v704 = vadd.f32 0.0, %v703
      %v705 = vpop.f32.mrb[0].mxu0
      %v706 = vpop.f32.mrb[0].mxu0
      %v707 = vadd.f32 0.0, %v706
      %v708 = vpop.f32.mrb[0].mxu0
      %709 = vmatprep.mubr.bf16.mxu0 0
      %710 = vmatmul.mubr.bf16.gmra.mrb[0].mxu0 %v492
      %v711 = vpop.f32.mrb[0].mxu0
      %v712 = vadd.f32 0.0, %v711
      %v713 = vpop.f32.mrb[0].mxu0
      %v714 = vpop.f32.mrb[0].mxu0
      %v715 = vadd.f32 0.0, %v714
      %v716 = vpop.f32.mrb[0].mxu0
      %717 = vmatprep.mubr.bf16.mxu0 0
      %718 = vmatmul.mubr.bf16.gmra.mrb[0].mxu0 %v495
      %v719 = vpop.f32.mrb[0].mxu0
      %v720 = vadd.f32 0.0, %v719
      %v721 = vpop.f32.mrb[0].mxu0
      %v722 = vpop.f32.mrb[0].mxu0
      %v723 = vadd.f32 0.0, %v722
      %v724 = vpop.f32.mrb[0].mxu0
      %725 = vmatprep.mubr.bf16.mxu0 0
      %726 = vmatmul.mubr.bf16.gmra.mrb[0].mxu0 %v498
      %v727 = vpop.f32.mrb[0].mxu0
      %v728 = vadd.f32 0.0, %v727
      %v729 = vpop.f32.mrb[0].mxu0
      %v730 = vpop.f32.mrb[0].mxu0
      %v731 = vadd.f32 0.0, %v730
      %v732 = vpop.f32.mrb[0].mxu0
      %733 = vmatprep.mubr.bf16.mxu0 0
      %734 = vmatmul.mubr.bf16.gmra.mrb[0].mxu0 %v501
      %v735 = vpop.f32.mrb[0].mxu0
      %v736 = vadd.f32 0.0, %v735
      %v737 = vpop.f32.mrb[0].mxu0
      %v738 = vpop.f32.mrb[0].mxu0
      %v739 = vadd.f32 0.0, %v738
      %v740 = vpop.f32.mrb[0].mxu0
      %741 = vmatprep.mubr.bf16.mxu0 0
      %742 = vmatmul.mubr.bf16.gmra.mrb[0].mxu0 %v504
      %v743 = vpop.f32.mrb[0].mxu0
      %v744 = vadd.f32 0.0, %v743
      %v745 = vpop.f32.mrb[0].mxu0
      %v746 = vpop.f32.mrb[0].mxu0
      %v747 = vadd.f32 0.0, %v746
      %v748 = vpop.f32.mrb[0].mxu0
      %749 = vmatprep.mubr.bf16.mxu0 0
      %750 = vmatmul.mubr.bf16.gmra.mrb[0].mxu0 %v507
      %v751 = vpop.f32.mrb[0].mxu0
      %v752 = vadd.f32 0.0, %v751
      %v753 = vpop.f32.mrb[0].mxu0
      %v754 = vpop.f32.mrb[0].mxu0
      %v755 = vadd.f32 0.0, %v754
      %v756 = vpop.f32.mrb[0].mxu0
      %757 = vmatprep.mubr.bf16.mxu0 0
      %758 = vmatmul.mubr.bf16.gmra.mrb[0].mxu0 %v510
      %v759 = vpop.f32.mrb[0].mxu0
      %v760 = vadd.f32 0.0, %v759
      %v761 = vpop.f32.mrb[0].mxu0
      %v762 = vpop.f32.mrb[0].mxu0
      %v763 = vadd.f32 0.0, %v762
      %v764 = vpop.f32.mrb[0].mxu0
      %765 = vmatprep.mubr.bf16.mxu0 0
      %766 = vmatmul.mubr.bf16.gmra.mrb[0].mxu0 %v513
      %v767 = vpop.f32.mrb[0].mxu0
      %v768 = vadd.f32 0.0, %v767
      %v769 = vpop.f32.mrb[0].mxu0
      %v770 = vpop.f32.mrb[0].mxu0
      %v771 = vadd.f32 0.0, %v770
      %v772 = vpop.f32.mrb[0].mxu0
      %773 = vmatprep.mubr.bf16.mxu0 0
      %774 = vmatmul.mubr.bf16.gmra.mrb[0].mxu0 %v516
      %v775 = vpop.f32.mrb[0].mxu0
      %v776 = vadd.f32 0.0, %v775
      %v777 = vpop.f32.mrb[0].mxu0
      %v778 = vpop.f32.mrb[0].mxu0
      %v779 = vadd.f32 0.0, %v778
      %v780 = vpop.f32.mrb[0].mxu0
      %781 = vmatprep.mubr.bf16.mxu0 0
      %782 = vmatmul.mubr.bf16.gmra.mrb[0].mxu0 %v519
      %v783 = vpop.f32.mrb[0].mxu0
      %v784 = vadd.f32 0.0, %v783
      %v785 = vpop.f32.mrb[0].mxu0
      %v786 = vpop.f32.mrb[0].mxu0
      %v787 = vadd.f32 0.0, %v786
      %v788 = vpop.f32.mrb[0].mxu0
      %789 = vmatprep.mubr.bf16.mxu0 0
      %790 = vmatmul.mubr.bf16.gmra.mrb[0].mxu0 %v522
      %v791 = vpop.f32.mrb[0].mxu0
      %v792 = vadd.f32 0.0, %v791
      %v793 = vpop.f32.mrb[0].mxu0
      %v794 = vpop.f32.mrb[0].mxu0
      %v795 = vadd.f32 0.0, %v794
      %v796 = vpop.f32.mrb[0].mxu0
      %797 = vmatprep.mubr.bf16.mxu0 0
      %798 = vmatmul.mubr.bf16.gmra.mrb[0].mxu0 %v525
      %v799 = vpop.f32.mrb[0].mxu0
      %v800 = vadd.f32 0.0, %v799
      %v801 = vpop.f32.mrb[0].mxu0
      %v802 = vpop.f32.mrb[0].mxu0
      %v803 = vadd.f32 0.0, %v802
      %v804 = vpop.f32.mrb[0].mxu0
      %805 = vmatprep.mubr.bf16.mxu0 0
      %806 = vmatmul.mubr.bf16.gmra.mrb[0].mxu0 %v528
      %v807 = vpop.f32.mrb[0].mxu0
      %v808 = vadd.f32 0.0, %v807
      %v809 = vpop.f32.mrb[0].mxu0
      %v810 = vpop.f32.mrb[0].mxu0
      %v811 = vadd.f32 0.0, %v810
      %v812 = vpop.f32.mrb[0].mxu0
      %813 = vmatprep.mubr.bf16.mxu0 0
      %814 = vmatmul.mubr.bf16.gmra.mrb[0].mxu0 %v531
      %v815 = vpop.f32.mrb[0].mxu0
      %v816 = vadd.f32 0.0, %v815
      %v817 = vpop.f32.mrb[0].mxu0
      %v818 = vpop.f32.mrb[0].mxu0
      %v819 = vadd.f32 0.0, %v818
      %v820 = vpop.f32.mrb[0].mxu0
      %821 = vdwg.mxu0
      %v822 = vtanh.pop %v568
      %v823 = vtanh.pop %v571
      %v824 = vtanh.pop %v576
      %v825 = vtanh.pop %v579
      %v826 = vtanh.pop %v584
      %v827 = vtanh.pop %v587
      %v828 = vtanh.pop %v592
      %v829 = vtanh.pop %v595
      %v830 = vtanh.pop %v600
      %v831 = vtanh.pop %v603
      %v832 = vtanh.pop %v608
      %v833 = vtanh.pop %v611
      %v834 = vtanh.pop %v616
      %v835 = vtanh.pop %v619
      %v836 = vtanh.pop %v624
      %v837 = vtanh.pop %v627
      %v838 = vtanh.pop %v632
      %v839 = vtanh.pop %v635
      %v840 = vtanh.pop %v640
      %v841 = vtanh.pop %v643
      %v842 = vtanh.pop %v648
      %v843 = vtanh.pop %v651
      %v844 = vtanh.pop %v656
      %v845 = vtanh.pop %v659
      %v846 = vtanh.pop %v664
      %v847 = vtanh.pop %v667
      %v848 = vtanh.pop %v672
      %v849 = vtanh.pop %v675
      %v850 = vtanh.pop %v680
      %v851 = vtanh.pop %v683
      %v852 = vtanh.pop %v688
      %v853 = vtanh.pop %v691
      %v854 = vtanh.pop %v696
      %v855 = vtanh.pop %v699
      %v856 = vtanh.pop %v704
      %v857 = vtanh.pop %v707
      %v858 = vtanh.pop %v712
      %v859 = vtanh.pop %v715
      %v860 = vtanh.pop %v720
      %v861 = vtanh.pop %v723
      %v862 = vtanh.pop %v728
      %v863 = vtanh.pop %v731
      %v864 = vtanh.pop %v736
      %v865 = vtanh.pop %v739
      %v866 = vtanh.pop %v744
      %v867 = vtanh.pop %v747
      %v868 = vtanh.pop %v752
      %v869 = vtanh.pop %v755
      %v870 = vtanh.pop %v760
      %v871 = vtanh.pop %v763
      %v872 = vtanh.pop %v768
      %v873 = vtanh.pop %v771
      %v874 = vtanh.pop %v776
      %v875 = vtanh.pop %v779
      %v876 = vtanh.pop %v784
      %v877 = vtanh.pop %v787
      %v878 = vtanh.pop %v792
      %v879 = vtanh.pop %v795
      %v880 = vtanh.pop %v800
      %v881 = vtanh.pop %v803
      %v882 = vtanh.pop %v808
      %v883 = vtanh.pop %v811
      %v884 = vtanh.pop %v816
      %v885 = vtanh.pop %v819
      %886 = vst [vmem:[%s201] sm:$0xff] %v822
      %887 = vst [vmem:[%s201 + $0x8] sm:$0xff] %v823
      %888 = vst [vmem:[%s201 + $0x10] sm:$0xff] %v824
      %889 = vst [vmem:[%s201 + $0x18] sm:$0xff] %v825
      %890 = vst [vmem:[%s201 + $0x20] sm:$0xff] %v826
      %891 = vst [vmem:[%s201 + $0x28] sm:$0xff] %v827
      %892 = vst [vmem:[%s201 + $0x30] sm:$0xff] %v828
      %893 = vst [vmem:[%s201 + $0x38] sm:$0xff] %v829
      %894 = vst [vmem:[%s201 + $0x40] sm:$0xff] %v830
      %895 = vst [vmem:[%s201 + $0x48] sm:$0xff] %v831
      %896 = vst [vmem:[%s201 + $0x50] sm:$0xff] %v832
      %897 = vst [vmem:[%s201 + $0x58] sm:$0xff] %v833
      %898 = vst [vmem:[%s201 + $0x60] sm:$0xff] %v834
      %899 = vst [vmem:[%s201 + $0x68] sm:$0xff] %v835
      %900 = vst [vmem:[%s201 + $0x70] sm:$0xff] %v836
      %901 = vst [vmem:[%s201 + $0x78] sm:$0xff] %v837
      %902 = vst [vmem:[%s201 + $0x80] sm:$0xff] %v838
      %903 = vst [vmem:[%s201 + $0x88] sm:$0xff] %v839
      %904 = vst [vmem:[%s201 + $0x90] sm:$0xff] %v840
      %905 = vst [vmem:[%s201 + $0x98] sm:$0xff] %v841
      %906 = vst [vmem:[%s201 + $0xa0] sm:$0xff] %v842
      %907 = vst [vmem:[%s201 + $0xa8] sm:$0xff] %v843
      %908 = vst [vmem:[%s201 + $0xb0] sm:$0xff] %v844
      %909 = vst [vmem:[%s201 + $0xb8] sm:$0xff] %v845
      %910 = vst [vmem:[%s201 + $0xc0] sm:$0xff] %v846
      %911 = vst [vmem:[%s201 + $0xc8] sm:$0xff] %v847
      %912 = vst [vmem:[%s201 + $0xd0] sm:$0xff] %v848
      %913 = vst [vmem:[%s201 + $0xd8] sm:$0xff] %v849
      %914 = vst [vmem:[%s201 + $0xe0] sm:$0xff] %v850
      %915 = vst [vmem:[%s201 + $0xe8] sm:$0xff] %v851
      %916 = vst [vmem:[%s201 + $0xf0] sm:$0xff] %v852
      %917 = vst [vmem:[%s201 + $0xf8] sm:$0xff] %v853
      %918 = vst [vmem:[%s201 + $0x100] sm:$0xff] %v854
      %919 = vst [vmem:[%s201 + $0x108] sm:$0xff] %v855
      %920 = vst [vmem:[%s201 + $0x110] sm:$0xff] %v856
      %921 = vst [vmem:[%s201 + $0x118] sm:$0xff] %v857
      %922 = vst [vmem:[%s201 + $0x120] sm:$0xff] %v858
      %923 = vst [vmem:[%s201 + $0x128] sm:$0xff] %v859
      %924 = vst [vmem:[%s201 + $0x130] sm:$0xff] %v860
      %925 = vst [vmem:[%s201 + $0x138] sm:$0xff] %v861
      %926 = vst [vmem:[%s201 + $0x140] sm:$0xff] %v862
      %927 = vst [vmem:[%s201 + $0x148] sm:$0xff] %v863
      %928 = vst [vmem:[%s201 + $0x150] sm:$0xff] %v864
      %929 = vst [vmem:[%s201 + $0x158] sm:$0xff] %v865
      %930 = vst [vmem:[%s201 + $0x160] sm:$0xff] %v866
      %931 = vst [vmem:[%s201 + $0x168] sm:$0xff] %v867
      %932 = vst [vmem:[%s201 + $0x170] sm:$0xff] %v868
      %933 = vst [vmem:[%s201 + $0x178] sm:$0xff] %v869
      %934 = vst [vmem:[%s201 + $0x180] sm:$0xff] %v870
      %935 = vst [vmem:[%s201 + $0x188] sm:$0xff] %v871
      %936 = vst [vmem:[%s201 + $0x190] sm:$0xff] %v872
      %937 = vst [vmem:[%s201 + $0x198] sm:$0xff] %v873
      %938 = vst [vmem:[%s201 + $0x1a0] sm:$0xff] %v874
      %939 = vst [vmem:[%s201 + $0x1a8] sm:$0xff] %v875
      %940 = vst [vmem:[%s201 + $0x1b0] sm:$0xff] %v876
      %941 = vst [vmem:[%s201 + $0x1b8] sm:$0xff] %v877
      %942 = vst [vmem:[%s201 + $0x1c0] sm:$0xff] %v878
      %943 = vst [vmem:[%s201 + $0x1c8] sm:$0xff] %v879
      %944 = vst [vmem:[%s201 + $0x1d0] sm:$0xff] %v880
      %945 = vst [vmem:[%s201 + $0x1d8] sm:$0xff] %v881
      %946 = vst [vmem:[%s201 + $0x1e0] sm:$0xff] %v882
      %947 = vst [vmem:[%s201 + $0x1e8] sm:$0xff] %v883
      %948 = vst [vmem:[%s201 + $0x1f0] sm:$0xff] %v884
      %949 = vst [vmem:[%s201 + $0x1f8] sm:$0xff] %v885
      %s950 = smul.u32 64, %s18
      %p951 = scmp.lt.s32.totalorder %s17, 3
      %s952 = scalar_select %p951, %s17, 3
      %p953 = scmp.lt.s32.totalorder %s950, 255
      %s954 = scalar_select %p953, %s950, 255
      %s955 = smul.addr %s952, 256
      %s956 = sadd.s32 %s954, %s955
      %s957 = smul.addr %s956, 8
      %s958 = scalar_lea.vmem %s2, %s957
      // Predicated region
      $region29: #{generator_forward.17} parent=27 // pred_check
        %p959 = pneg %p99
      $region30: #{generator_forward.17} parent=27 // pred_check_branch
        %961 = sbr.rel (%p959) target = $region32
      $region31: #{generator_forward.17} parent=27 // pred_region
        %s962 = smul.u32 64, %s18
      $region32: #{generator_forward.17} parent=27 // pred_fallthru
        _
    $region28: #{generator_forward.17} parent=5 // pred_fallthru
      _
    %p963 = scmp.le.s32.totalorder 2, %s8
    // Predicated region
    $region33: #{generator_forward.17} parent=5 // pred_check
      %p964 = pneg %p963
    $region34: #{generator_forward.17} parent=5 // pred_check_branch
      %966 = sbr.rel (%p964) target = $region36
    $region35: #{generator_forward.17} parent=5 // pred_region
      %s967 = ssub.s32 %s8, 2
      // Predicated region
      $region37: #{generator_forward.17} parent=35 // pred_check
        %p968 = pneg %p105
      $region38: #{generator_forward.17} parent=35 // pred_check_branch
        %970 = sbr.rel (%p968) target = $region40
      $region39: #{generator_forward.17} parent=35 // pred_region
        %s971 = smul.u32 64, %s20
        %p972 = scmp.lt.s32.totalorder %s19, 3
        %s973 = scalar_select %p972, %s19, 3
        %p974 = scmp.lt.s32.totalorder %s971, 255
        %s975 = scalar_select %p974, %s971, 255
        %s976 = smul.addr %s973, 256
        %s977 = sadd.s32 %s975, %s976
        %s978 = smul.addr %s977, 8
        %s979 = scalar_lea.vmem %s2, %s978
      $region40: #{generator_forward.17} parent=35 // pred_fallthru
        _
    $region36: #{generator_forward.17} parent=5 // pred_fallthru
      _
  $region6: #{generator_forward.17} parent=0 // loop_footer
    %s12 = sadd.s32 1, %s8
  $region7: #{generator_forward.17} parent=0 // loop_footer_branch
    %7 = sbr.rel target = $region3
  $region8: #{generator_forward.17} parent=0 // loop_exit
    _

</llo_original>
